<compile_context>
chip_gen: v5e
topology: v5e:2x2
jax: 0.10.0
libtpu: 0.0.40
codegen_flags: <defaults>
</compile_context>

<pallas_src>
import jax
import jax.numpy as jnp
from jax.experimental import pallas as pl
from jax.experimental.pallas import tpu as pltpu

EPS = 1e-5  # nn.LayerNorm default eps


# ---------------------------------------------------------------------------
# In-kernel helpers (traced inside the Pallas kernel; static shapes only)
# ---------------------------------------------------------------------------
def _shift(v, s):
    """w[l] = v[l + s] along axis 0, zero-filled out of range (s = +-1, static)."""
    L = v.shape[0]
    r = pltpu.roll(v, (-s) % L, 0)
    idx = jax.lax.broadcasted_iota(jnp.int32, v.shape, 0)
    if s > 0:
        return jnp.where(idx < L - s, r, 0.0)
    return jnp.where(idx >= -s, r, 0.0)


def _bdot(a, w_ref):
    """bf16 MXU matmul with f32 accumulation; w_ref already stored as bf16."""
    return jnp.dot(a.astype(jnp.bfloat16), w_ref[...],
                   preferred_element_type=jnp.float32)


def _conv(pieces, b_ref):
    """Conv1d(k=3, stride=1, padding=1) on channels-last slabs, im2col form.

    pieces: list of (v, w_ref); v (L, Cin_p) f32; w_ref (3*Cin_p, Cout) bf16 with
    rows ordered (tap k major, input channel minor).  Summing pieces == conv on the
    channel-concatenated input (split-weight skip connections)."""
    acc = None
    for v, w_ref in pieces:
        taps = jnp.concatenate([_shift(v, -1), v, _shift(v, 1)], axis=-1)
        o = _bdot(taps, w_ref)
        acc = o if acc is None else acc + o
    return acc + b_ref[...]


def _pool(v, s_ref):
    """MaxPool1d(2): pair-max via roll, then one (L/2, L) even-row selection matmul."""
    m = jnp.maximum(v, _shift(v, 1))
    return jnp.dot(s_ref[...], m.astype(jnp.bfloat16),
                   preferred_element_type=jnp.float32)


def _tconv(pieces, b_ref, p_ref):
    """ConvTranspose1d(k=3, stride=2, padding=1, output_padding=1):
         out[2j]   = v[j]   @ W1
         out[2j+1] = v[j]   @ W2 + v[j+1] @ W0
    pieces: list of (v, we_ref, wo_ref); we (Cin_p, Cout) = W1; wo (2*Cin_p, Cout) = [W2; W0].
    p_ref: (2L, 2L) bf16 permutation interleaving [even; odd] into true sample order."""
    even = None
    odd = None
    for v, we_ref, wo_ref in pieces:
        e = _bdot(v, we_ref)
        t = jnp.concatenate([v, _shift(v, 1)], axis=-1)
        o = _bdot(t, wo_ref)
        even = e if even is None else even + e
        odd = o if odd is None else odd + o
    stack = jnp.concatenate([even, odd], axis=0)              # (2L, Cout)
    out = jnp.dot(p_ref[...], stack.astype(jnp.bfloat16),
                  preferred_element_type=jnp.float32)
    return out + b_ref[...]


def _full_mean(v):
    s = jnp.sum(v, axis=1, keepdims=True)
    return jnp.sum(s, axis=0, keepdims=True) / float(v.shape[0] * v.shape[1])


def _ln_elu(v, g_ref, be_ref):
    """LayerNorm over the whole (C, L) slab per batch element (torch LayerNorm([C, L])),
    elementwise affine with (L, C)-transposed gamma/beta, followed by ELU(alpha=1)."""
    mean = _full_mean(v)
    c = v - mean
    var = _full_mean(c * c)
    y = c * jax.lax.rsqrt(var + EPS) * g_ref[...] + be_ref[...]
    return jnp.where(y > 0, y, jnp.exp(jnp.minimum(y, 0.0)) - 1.0)


# ---------------------------------------------------------------------------
# Pallas kernel: whole RayUnet forward for one batch element
# ---------------------------------------------------------------------------
def ray_unet_kernel(x_ref,
                    w1, b1, g1, be1,                                   # conv1
                    w2, b2, g2, be2,                                   # conv2
                    w3, b3, g3, be3,                                   # conv3
                    t3e, t3o, tb3, tg3, tbe3,                          # trans_conv3
                    t2e_s, t2o_s, t2e_u, t2o_u, tb2, tg2, tbe2,        # trans_conv2 (split)
                    t1e_s, t1o_s, t1e_u, t1o_u, tb1, tg1, tbe1,        # trans_conv1 (split)
                    wo_s, wo_u, bo, go, beo,                           # conv_out (split)
                    s1, s2, s3,                                        # pool selection mats
                    p3, p2, p1,                                        # interleave perms
                    out_ref):
    x = x_ref[...].T                                                   # (N, C_in)

    c1_0 = _ln_elu(_conv([(x, w1)], b1), g1, be1)                      # (N, 64)
    c1 = _pool(c1_0, s1)                                               # (N/2, 64)
    c2_0 = _ln_elu(_conv([(c1, w2)], b2), g2, be2)                     # (N/2, 128)
    c2 = _pool(c2_0, s2)                                               # (N/4, 128)
    c3_0 = _ln_elu(_conv([(c2, w3)], b3), g3, be3)                     # (N/4, 128)
    c3 = _pool(c3_0, s3)                                               # (N/8, 128)

    x0 = _ln_elu(_tconv([(c3, t3e, t3o)], tb3, p3), tg3, tbe3)                       # (N/4, 128)
    x1 = _ln_elu(_tconv([(c2, t2e_s, t2o_s), (x0, t2e_u, t2o_u)], tb2, p2),
                 tg2, tbe2)                                                          # (N/2, 64)
    x2 = _ln_elu(_tconv([(c1, t1e_s, t1o_s), (x1, t1e_u, t1o_u)], tb1, p1),
                 tg1, tbe1)                                                          # (N, 32)
    x_out = _ln_elu(_conv([(x, wo_s), (x2, wo_u)], bo), go, beo)                     # (N, C_in)

    out_ref[...] = x_out.T                                             # (C_in, N)


# ---------------------------------------------------------------------------
# Wrapper
# ---------------------------------------------------------------------------
def ray_unet_pallas(x_bcn, flat_params):
    """x_bcn: (B, C, N) float32, PyTorch layout. Returns (B, C, N) float32."""
    B, C, N = x_bcn.shape
    in_specs = [pl.BlockSpec((None, C, N), lambda i: (i, 0, 0))]
    in_specs += [pl.BlockSpec(a.shape, lambda i: (0, 0)) for a in flat_params]
    return pl.pallas_call(
        ray_unet_kernel,
        out_shape=jax.ShapeDtypeStruct((B, C, N), jnp.float32),
        grid=(B,),
        in_specs=in_specs,
        out_specs=pl.BlockSpec((None, C, N), lambda i: (i, 0, 0)),
        compiler_params=pltpu.CompilerParams(
            dimension_semantics=("parallel",)),       # batch elements are independent (v7x: 2 TCs)
    )(x_bcn, *flat_params)


# ---------------------------------------------------------------------------
# Deterministic parameter init (PyTorch layout) + conversion to kernel layout
# ---------------------------------------------------------------------------
def init_torch_params(key, in_channels, n_samples):
    layers = [
        ('conv', in_channels, 64, n_samples),                 # conv1
        ('conv', 64, 128, n_samples // 2),                    # conv2
        ('conv', 128, 128, n_samples // 4),                   # conv3
        ('tconv', 128, 128, n_samples // 4),                  # trans_conv3
        ('tconv', 256, 64, n_samples // 2),                   # trans_conv2
        ('tconv', 128, 32, n_samples),                        # trans_conv1
        ('conv', in_channels + 32, in_channels, n_samples),   # conv_out
    ]
    params = []
    for kind, cin, cout, L in layers:
        key, k1, k2, k3, k4 = jax.random.split(key, 5)
        if kind == 'conv':
            w = 0.1 * jax.random.normal(k1, (cout, cin, 3), jnp.float32)
        else:  # ConvTranspose1d weight layout: (Cin, Cout, K)
            w = 0.1 * jax.random.normal(k1, (cin, cout, 3), jnp.float32)
        b = 0.1 * jax.random.normal(k2, (cout,), jnp.float32)
        g = 1.0 + 0.1 * jax.random.normal(k3, (cout, L), jnp.float32)
        be = 0.1 * jax.random.normal(k4, (cout, L), jnp.float32)
        params.append((kind, w, b, g, be))
    return params


def build_kernel_params(torch_params, in_channels, n_samples):
    """Flatten PyTorch-layout params into the exact kernel argument order."""
    f32, bf16 = jnp.float32, jnp.bfloat16

    def conv_w(w):                    # torch (Cout, Cin, 3) -> (3*Cin, Cout) bf16, tap-major rows
        cout, cin, k = w.shape
        return jnp.transpose(w, (2, 1, 0)).reshape(k * cin, cout).astype(bf16)

    def tconv_w(w):                   # torch (Cin, Cout, 3) -> We=(Cin,Cout)=W1, Wo=(2Cin,Cout)=[W2;W0]
        we = w[:, :, 1].astype(bf16)
        wo = jnp.concatenate([w[:, :, 2], w[:, :, 0]], axis=0).astype(bf16)
        return we, wo

    def aux(b, g, be):                # bias (Cout,) -> (1, Cout); gamma/beta (Cout, L) -> (L, Cout)
        return [b[None, :].astype(f32), g.T.astype(f32), be.T.astype(f32)]

    def pool_mat(L):                  # (L/2, L): pick even rows (the pair-max rows)
        r = jnp.arange(L // 2)[:, None]
        c = jnp.arange(L)[None, :]
        return (c == 2 * r).astype(bf16)

    def interleave_mat(L):            # (2L, 2L): out[2m]=stack[m], out[2m+1]=stack[L+m]
        r = jnp.arange(2 * L)[:, None]
        c = jnp.arange(2 * L)[None, :]
        m = ((r % 2 == 0) & (c == r // 2)) | ((r % 2 == 1) & (c == L + r // 2))
        return m.astype(bf16)

    p = torch_params
    flat = []
    # encoder convs
    for idx in (0, 1, 2):
        _, w, b, g, be = p[idx]
        flat += [conv_w(w)] + aux(b, g, be)
    # trans_conv3 (single piece, Cin=128)
    _, w, b, g, be = p[3]
    we, wo = tconv_w(w)
    flat += [we, wo] + aux(b, g, be)
    # trans_conv2: split Cin=256 into skip(conv2, 128) + up(x0, 128)
    _, w, b, g, be = p[4]
    we_s, wo_s = tconv_w(w[:128])
    we_u, wo_u = tconv_w(w[128:])
    flat += [we_s, wo_s, we_u, wo_u] + aux(b, g, be)
    # trans_conv1: split Cin=128 into skip(conv1, 64) + up(x1, 64)
    _, w, b, g, be = p[5]
    we_s, wo_s = tconv_w(w[:64])
    we_u, wo_u = tconv_w(w[64:])
    flat += [we_s, wo_s, we_u, wo_u] + aux(b, g, be)
    # conv_out: split Cin = in_channels(x) + 32(x2)
    _, w, b, g, be = p[6]
    flat += [conv_w(w[:, :in_channels, :]), conv_w(w[:, in_channels:, :])] + aux(b, g, be)
    # pool selection matrices (after conv1 / conv2 / conv3)
    flat += [pool_mat(n_samples), pool_mat(n_samples // 2), pool_mat(n_samples // 4)]
    # interleave permutations (trans_conv3 / trans_conv2 / trans_conv1 outputs)
    flat += [interleave_mat(n_samples // 8), interleave_mat(n_samples // 4),
             interleave_mat(n_samples // 2)]
    return flat


# ---------------------------------------------------------------------------
# Independent pure-JAX reference (channels-first, like the PyTorch module)
# ---------------------------------------------------------------------------
def ref_forward(x, torch_params):
    def conv(x, w, b):
        B, Cin, L = x.shape
        xp = jnp.pad(x, ((0, 0), (0, 0), (1, 1)))
        out = sum(jnp.einsum('bcl,oc->bol', xp[:, :, k:k + L], w[:, :, k])
                  for k in range(3))
        return out + b[None, :, None]

    def tconv(x, w, b):
        B, Cin, L = x.shape
        xd = jnp.zeros((B, Cin, 2 * L - 1), x.dtype).at[:, :, 0::2].set(x)
        xp = jnp.pad(xd, ((0, 0), (0, 0), (1, 2)))
        Lout = 2 * L
        out = sum(jnp.einsum('bcl,co->bol', xp[:, :, k:k + Lout], w[:, :, 2 - k])
                  for k in range(3))
        return out + b[None, :, None]

    def ln_elu(x, g, be):
        mean = jnp.mean(x, axis=(1, 2), keepdims=True)
        var = jnp.mean((x - mean) ** 2, axis=(1, 2), keepdims=True)
        y = (x - mean) / jnp.sqrt(var + EPS) * g[None] + be[None]
        return jnp.where(y > 0, y, jnp.exp(jnp.minimum(y, 0.0)) - 1.0)

    def pool(x):
        return jnp.maximum(x[:, :, 0::2], x[:, :, 1::2])

    def block(x, i):
        kind, w, b, g, be = torch_params[i]
        y = conv(x, w, b) if kind == 'conv' else tconv(x, w, b)
        return ln_elu(y, g, be)

    c1_0 = block(x, 0); c1 = pool(c1_0)
    c2_0 = block(c1, 1); c2 = pool(c2_0)
    c3_0 = block(c2, 2); c3 = pool(c3_0)
    x0 = block(c3, 3)
    x1 = block(jnp.concatenate([c2, x0], axis=1), 4)
    x2 = block(jnp.concatenate([c1, x1], axis=1), 5)
    return block(jnp.concatenate([x, x2], axis=1), 6)


# ---------------------------------------------------------------------------
if __name__ == "__main__":
    B, C_IN, N_SAMPLES = 2, 16, 32   # n_samples must be divisible by 8

    key = jax.random.PRNGKey(0)
    kx, kp = jax.random.split(key)
    x = jax.random.normal(kx, (B, C_IN, N_SAMPLES), jnp.float32)

    torch_params = init_torch_params(kp, C_IN, N_SAMPLES)
    kernel_params = build_kernel_params(torch_params, C_IN, N_SAMPLES)

    out = ray_unet_pallas(x, kernel_params)
    out = jax.block_until_ready(out)

    assert out.shape == (B, C_IN, N_SAMPLES), out.shape

    ref = ref_forward(x, torch_params)
    max_err = float(jnp.max(jnp.abs(out - ref)))
    if not bool(jnp.allclose(out, ref, atol=4e-2, rtol=4e-2)):
        raise AssertionError(f"Pallas kernel mismatch vs reference, max abs err = {max_err}")

    print("KERNEL_OK")
</pallas_src>

<mosaic_0001>
module attributes {stable_mosaic.version = 11 : i64} {
  func.func @ray_unet_kernel(%arg0: i32, %arg1: memref<1x16x32xf32, #tpu.memory_space<vmem>>, %arg2: memref<48x64xbf16, #tpu.memory_space<vmem>>, %arg3: memref<1x64xf32, #tpu.memory_space<vmem>>, %arg4: memref<32x64xf32, #tpu.memory_space<vmem>>, %arg5: memref<32x64xf32, #tpu.memory_space<vmem>>, %arg6: memref<192x128xbf16, #tpu.memory_space<vmem>>, %arg7: memref<1x128xf32, #tpu.memory_space<vmem>>, %arg8: memref<16x128xf32, #tpu.memory_space<vmem>>, %arg9: memref<16x128xf32, #tpu.memory_space<vmem>>, %arg10: memref<384x128xbf16, #tpu.memory_space<vmem>>, %arg11: memref<1x128xf32, #tpu.memory_space<vmem>>, %arg12: memref<8x128xf32, #tpu.memory_space<vmem>>, %arg13: memref<8x128xf32, #tpu.memory_space<vmem>>, %arg14: memref<128x128xbf16, #tpu.memory_space<vmem>>, %arg15: memref<256x128xbf16, #tpu.memory_space<vmem>>, %arg16: memref<1x128xf32, #tpu.memory_space<vmem>>, %arg17: memref<8x128xf32, #tpu.memory_space<vmem>>, %arg18: memref<8x128xf32, #tpu.memory_space<vmem>>, %arg19: memref<128x64xbf16, #tpu.memory_space<vmem>>, %arg20: memref<256x64xbf16, #tpu.memory_space<vmem>>, %arg21: memref<128x64xbf16, #tpu.memory_space<vmem>>, %arg22: memref<256x64xbf16, #tpu.memory_space<vmem>>, %arg23: memref<1x64xf32, #tpu.memory_space<vmem>>, %arg24: memref<16x64xf32, #tpu.memory_space<vmem>>, %arg25: memref<16x64xf32, #tpu.memory_space<vmem>>, %arg26: memref<64x32xbf16, #tpu.memory_space<vmem>>, %arg27: memref<128x32xbf16, #tpu.memory_space<vmem>>, %arg28: memref<64x32xbf16, #tpu.memory_space<vmem>>, %arg29: memref<128x32xbf16, #tpu.memory_space<vmem>>, %arg30: memref<1x32xf32, #tpu.memory_space<vmem>>, %arg31: memref<32x32xf32, #tpu.memory_space<vmem>>, %arg32: memref<32x32xf32, #tpu.memory_space<vmem>>, %arg33: memref<48x16xbf16, #tpu.memory_space<vmem>>, %arg34: memref<96x16xbf16, #tpu.memory_space<vmem>>, %arg35: memref<1x16xf32, #tpu.memory_space<vmem>>, %arg36: memref<32x16xf32, #tpu.memory_space<vmem>>, %arg37: memref<32x16xf32, #tpu.memory_space<vmem>>, %arg38: memref<16x32xbf16, #tpu.memory_space<vmem>>, %arg39: memref<8x16xbf16, #tpu.memory_space<vmem>>, %arg40: memref<4x8xbf16, #tpu.memory_space<vmem>>, %arg41: memref<8x8xbf16, #tpu.memory_space<vmem>>, %arg42: memref<16x16xbf16, #tpu.memory_space<vmem>>, %arg43: memref<32x32xbf16, #tpu.memory_space<vmem>>, %arg44: memref<1x16x32xf32, #tpu.memory_space<vmem>>) attributes {dimension_semantics = [#tpu.dimension_semantics<parallel>], iteration_bounds = array<i64: 2>, scalar_prefetch = 0 : i64, scratch_operands = 0 : i64, tpu.core_type = #tpu.core_type<tc>, window_params = [{transform_indices = @transform_0, window_bounds = array<i64: 1, 16, 32>}, {pipeline_mode = #tpu.pipeline_mode<synchronous>, transform_indices = @transform_1, window_bounds = array<i64: 48, 64>}, {pipeline_mode = #tpu.pipeline_mode<synchronous>, transform_indices = @transform_2, window_bounds = array<i64: 1, 64>}, {pipeline_mode = #tpu.pipeline_mode<synchronous>, transform_indices = @transform_3, window_bounds = array<i64: 32, 64>}, {pipeline_mode = #tpu.pipeline_mode<synchronous>, transform_indices = @transform_4, window_bounds = array<i64: 32, 64>}, {pipeline_mode = #tpu.pipeline_mode<synchronous>, transform_indices = @transform_5, window_bounds = array<i64: 192, 128>}, {pipeline_mode = #tpu.pipeline_mode<synchronous>, transform_indices = @transform_6, window_bounds = array<i64: 1, 128>}, {pipeline_mode = #tpu.pipeline_mode<synchronous>, transform_indices = @transform_7, window_bounds = array<i64: 16, 128>}, {pipeline_mode = #tpu.pipeline_mode<synchronous>, transform_indices = @transform_8, window_bounds = array<i64: 16, 128>}, {pipeline_mode = #tpu.pipeline_mode<synchronous>, transform_indices = @transform_9, window_bounds = array<i64: 384, 128>}, {pipeline_mode = #tpu.pipeline_mode<synchronous>, transform_indices = @transform_10, window_bounds = array<i64: 1, 128>}, {pipeline_mode = #tpu.pipeline_mode<synchronous>, transform_indices = @transform_11, window_bounds = array<i64: 8, 128>}, {pipeline_mode = #tpu.pipeline_mode<synchronous>, transform_indices = @transform_12, window_bounds = array<i64: 8, 128>}, {pipeline_mode = #tpu.pipeline_mode<synchronous>, transform_indices = @transform_13, window_bounds = array<i64: 128, 128>}, {pipeline_mode = #tpu.pipeline_mode<synchronous>, transform_indices = @transform_14, window_bounds = array<i64: 256, 128>}, {pipeline_mode = #tpu.pipeline_mode<synchronous>, transform_indices = @transform_15, window_bounds = array<i64: 1, 128>}, {pipeline_mode = #tpu.pipeline_mode<synchronous>, transform_indices = @transform_16, window_bounds = array<i64: 8, 128>}, {pipeline_mode = #tpu.pipeline_mode<synchronous>, transform_indices = @transform_17, window_bounds = array<i64: 8, 128>}, {pipeline_mode = #tpu.pipeline_mode<synchronous>, transform_indices = @transform_18, window_bounds = array<i64: 128, 64>}, {pipeline_mode = #tpu.pipeline_mode<synchronous>, transform_indices = @transform_19, window_bounds = array<i64: 256, 64>}, {pipeline_mode = #tpu.pipeline_mode<synchronous>, transform_indices = @transform_20, window_bounds = array<i64: 128, 64>}, {pipeline_mode = #tpu.pipeline_mode<synchronous>, transform_indices = @transform_21, window_bounds = array<i64: 256, 64>}, {pipeline_mode = #tpu.pipeline_mode<synchronous>, transform_indices = @transform_22, window_bounds = array<i64: 1, 64>}, {pipeline_mode = #tpu.pipeline_mode<synchronous>, transform_indices = @transform_23, window_bounds = array<i64: 16, 64>}, {pipeline_mode = #tpu.pipeline_mode<synchronous>, transform_indices = @transform_24, window_bounds = array<i64: 16, 64>}, {pipeline_mode = #tpu.pipeline_mode<synchronous>, transform_indices = @transform_25, window_bounds = array<i64: 64, 32>}, {pipeline_mode = #tpu.pipeline_mode<synchronous>, transform_indices = @transform_26, window_bounds = array<i64: 128, 32>}, {pipeline_mode = #tpu.pipeline_mode<synchronous>, transform_indices = @transform_27, window_bounds = array<i64: 64, 32>}, {pipeline_mode = #tpu.pipeline_mode<synchronous>, transform_indices = @transform_28, window_bounds = array<i64: 128, 32>}, {pipeline_mode = #tpu.pipeline_mode<synchronous>, transform_indices = @transform_29, window_bounds = array<i64: 1, 32>}, {pipeline_mode = #tpu.pipeline_mode<synchronous>, transform_indices = @transform_30, window_bounds = array<i64: 32, 32>}, {pipeline_mode = #tpu.pipeline_mode<synchronous>, transform_indices = @transform_31, window_bounds = array<i64: 32, 32>}, {pipeline_mode = #tpu.pipeline_mode<synchronous>, transform_indices = @transform_32, window_bounds = array<i64: 48, 16>}, {pipeline_mode = #tpu.pipeline_mode<synchronous>, transform_indices = @transform_33, window_bounds = array<i64: 96, 16>}, {pipeline_mode = #tpu.pipeline_mode<synchronous>, transform_indices = @transform_34, window_bounds = array<i64: 1, 16>}, {pipeline_mode = #tpu.pipeline_mode<synchronous>, transform_indices = @transform_35, window_bounds = array<i64: 32, 16>}, {pipeline_mode = #tpu.pipeline_mode<synchronous>, transform_indices = @transform_36, window_bounds = array<i64: 32, 16>}, {pipeline_mode = #tpu.pipeline_mode<synchronous>, transform_indices = @transform_37, window_bounds = array<i64: 16, 32>}, {pipeline_mode = #tpu.pipeline_mode<synchronous>, transform_indices = @transform_38, window_bounds = array<i64: 8, 16>}, {pipeline_mode = #tpu.pipeline_mode<synchronous>, transform_indices = @transform_39, window_bounds = array<i64: 4, 8>}, {pipeline_mode = #tpu.pipeline_mode<synchronous>, transform_indices = @transform_40, window_bounds = array<i64: 8, 8>}, {pipeline_mode = #tpu.pipeline_mode<synchronous>, transform_indices = @transform_41, window_bounds = array<i64: 16, 16>}, {pipeline_mode = #tpu.pipeline_mode<synchronous>, transform_indices = @transform_42, window_bounds = array<i64: 32, 32>}, {transform_indices = @transform_43, window_bounds = array<i64: 1, 16, 32>}]} {
    %c0 = arith.constant 0 : index
    %c0_0 = arith.constant 0 : index
    %c0_1 = arith.constant 0 : index
    %0 = vector.load %arg1[%c0, %c0_0, %c0_1] : memref<1x16x32xf32, #tpu.memory_space<vmem>>, vector<1x16x32xf32>
    %1 = vector.shape_cast %0 : vector<1x16x32xf32> to vector<16x32xf32>
    %2 = tpu.transpose %1, [1, 0] : vector<16x32xf32> -> vector<32x16xf32>
    %c1_i32 = arith.constant 1 : i32
    %3 = tpu.dynamic_rotate %2 by %c1_i32 dim 0 : vector<32x16xf32>, i32 -> vector<32x16xf32>
    %4 = tpu.iota {dimensions = array<i32: 0>} : vector<32x16xi32>
    %c1_i32_2 = arith.constant 1 : i32
    %5 = vector.broadcast %c1_i32_2 : i32 to vector<32x16xi32>
    %6 = arith.cmpi sge, %4, %5 : vector<32x16xi32>
    %cst = arith.constant 0.000000e+00 : f32
    %7 = vector.broadcast %cst : f32 to vector<32x16xf32>
    %8 = arith.select %6, %3, %7 : vector<32x16xi1>, vector<32x16xf32>
    %c31_i32 = arith.constant 31 : i32
    %9 = tpu.dynamic_rotate %2 by %c31_i32 dim 0 : vector<32x16xf32>, i32 -> vector<32x16xf32>
    %10 = tpu.iota {dimensions = array<i32: 0>} : vector<32x16xi32>
    %c31_i32_3 = arith.constant 31 : i32
    %11 = vector.broadcast %c31_i32_3 : i32 to vector<32x16xi32>
    %12 = arith.cmpi slt, %10, %11 : vector<32x16xi32>
    %cst_4 = arith.constant 0.000000e+00 : f32
    %13 = vector.broadcast %cst_4 : f32 to vector<32x16xf32>
    %14 = arith.select %12, %9, %13 : vector<32x16xi1>, vector<32x16xf32>
    %15 = tpu.concatenate %8, %2, %14 in 1 : vector<32x16xf32>, vector<32x16xf32>, vector<32x16xf32> -> vector<32x48xf32>
    %16 = arith.truncf %15 : vector<32x48xf32> to vector<32x48xbf16>
    %c0_5 = arith.constant 0 : index
    %c0_6 = arith.constant 0 : index
    %17 = vector.load %arg2[%c0_5, %c0_6] : memref<48x64xbf16, #tpu.memory_space<vmem>>, vector<48x64xbf16>
    %cst_7 = arith.constant dense<0.000000e+00> : vector<32x64xf32>
    %18 = tpu.matmul %16, %17, %cst_7 {dimension_numbers = #tpu.dot_dimension_numbers<[1], [0], [0], [1], [0, 0, 1, 1], [], []>} : vector<32x48xbf16>, vector<48x64xbf16>, vector<32x64xf32> -> vector<32x64xf32>
    %c0_8 = arith.constant 0 : index
    %c0_9 = arith.constant 0 : index
    %19 = vector.load %arg3[%c0_8, %c0_9] : memref<1x64xf32, #tpu.memory_space<vmem>>, vector<1x64xf32>
    %20 = vector.broadcast %19 : vector<1x64xf32> to vector<32x64xf32>
    %21 = arith.addf %18, %20 : vector<32x64xf32>
    %cst_10 = arith.constant dense<0.000000e+00> : vector<32xf32>
    %22 = vector.multi_reduction <add>, %21, %cst_10 [1] : vector<32x64xf32> to vector<32xf32>
    %23 = vector.shape_cast %22 : vector<32xf32> to vector<32x1xf32>
    %cst_11 = arith.constant dense<0.000000e+00> : vector<1xf32>
    %24 = vector.multi_reduction <add>, %23, %cst_11 [0] : vector<32x1xf32> to vector<1xf32>
    %25 = vector.shape_cast %24 : vector<1xf32> to vector<1x1xf32>
    %cst_12 = arith.constant 2.048000e+03 : f32
    %26 = vector.broadcast %cst_12 : f32 to vector<1x1xf32>
    %27 = arith.divf %25, %26 : vector<1x1xf32>
    %28 = vector.broadcast %27 : vector<1x1xf32> to vector<32x64xf32>
    %29 = arith.subf %21, %28 : vector<32x64xf32>
    %30 = arith.mulf %29, %29 : vector<32x64xf32>
    %cst_13 = arith.constant dense<0.000000e+00> : vector<32xf32>
    %31 = vector.multi_reduction <add>, %30, %cst_13 [1] : vector<32x64xf32> to vector<32xf32>
    %32 = vector.shape_cast %31 : vector<32xf32> to vector<32x1xf32>
    %cst_14 = arith.constant dense<0.000000e+00> : vector<1xf32>
    %33 = vector.multi_reduction <add>, %32, %cst_14 [0] : vector<32x1xf32> to vector<1xf32>
    %34 = vector.shape_cast %33 : vector<1xf32> to vector<1x1xf32>
    %cst_15 = arith.constant 2.048000e+03 : f32
    %35 = vector.broadcast %cst_15 : f32 to vector<1x1xf32>
    %36 = arith.divf %34, %35 : vector<1x1xf32>
    %cst_16 = arith.constant 9.99999974E-6 : f32
    %37 = vector.broadcast %cst_16 : f32 to vector<1x1xf32>
    %38 = arith.addf %36, %37 : vector<1x1xf32>
    %39 = math.rsqrt %38 : vector<1x1xf32>
    %40 = vector.broadcast %39 : vector<1x1xf32> to vector<32x64xf32>
    %41 = arith.mulf %29, %40 : vector<32x64xf32>
    %c0_17 = arith.constant 0 : index
    %c0_18 = arith.constant 0 : index
    %42 = vector.load %arg4[%c0_17, %c0_18] : memref<32x64xf32, #tpu.memory_space<vmem>>, vector<32x64xf32>
    %43 = arith.mulf %41, %42 : vector<32x64xf32>
    %c0_19 = arith.constant 0 : index
    %c0_20 = arith.constant 0 : index
    %44 = vector.load %arg5[%c0_19, %c0_20] : memref<32x64xf32, #tpu.memory_space<vmem>>, vector<32x64xf32>
    %45 = arith.addf %43, %44 : vector<32x64xf32>
    %cst_21 = arith.constant 0.000000e+00 : f32
    %46 = vector.broadcast %cst_21 : f32 to vector<32x64xf32>
    %47 = arith.cmpf ogt, %45, %46 : vector<32x64xf32>
    %cst_22 = arith.constant 0.000000e+00 : f32
    %48 = vector.broadcast %cst_22 : f32 to vector<32x64xf32>
    %49 = arith.minimumf %45, %48 : vector<32x64xf32>
    %50 = math.exp %49 : vector<32x64xf32>
    %cst_23 = arith.constant 1.000000e+00 : f32
    %51 = vector.broadcast %cst_23 : f32 to vector<32x64xf32>
    %52 = arith.subf %50, %51 : vector<32x64xf32>
    %53 = arith.select %47, %45, %52 : vector<32x64xi1>, vector<32x64xf32>
    %c31_i32_24 = arith.constant 31 : i32
    %54 = tpu.dynamic_rotate %53 by %c31_i32_24 dim 0 : vector<32x64xf32>, i32 -> vector<32x64xf32>
    %55 = tpu.iota {dimensions = array<i32: 0>} : vector<32x64xi32>
    %c31_i32_25 = arith.constant 31 : i32
    %56 = vector.broadcast %c31_i32_25 : i32 to vector<32x64xi32>
    %57 = arith.cmpi slt, %55, %56 : vector<32x64xi32>
    %cst_26 = arith.constant 0.000000e+00 : f32
    %58 = vector.broadcast %cst_26 : f32 to vector<32x64xf32>
    %59 = arith.select %57, %54, %58 : vector<32x64xi1>, vector<32x64xf32>
    %60 = arith.maximumf %53, %59 : vector<32x64xf32>
    %c0_27 = arith.constant 0 : index
    %c0_28 = arith.constant 0 : index
    %61 = vector.load %arg38[%c0_27, %c0_28] : memref<16x32xbf16, #tpu.memory_space<vmem>>, vector<16x32xbf16>
    %62 = arith.truncf %60 : vector<32x64xf32> to vector<32x64xbf16>
    %cst_29 = arith.constant dense<0.000000e+00> : vector<16x64xf32>
    %63 = tpu.matmul %61, %62, %cst_29 {dimension_numbers = #tpu.dot_dimension_numbers<[1], [0], [0], [1], [0, 0, 1, 1], [], []>} : vector<16x32xbf16>, vector<32x64xbf16>, vector<16x64xf32> -> vector<16x64xf32>
    %c1_i32_30 = arith.constant 1 : i32
    %64 = tpu.dynamic_rotate %63 by %c1_i32_30 dim 0 : vector<16x64xf32>, i32 -> vector<16x64xf32>
    %65 = tpu.iota {dimensions = array<i32: 0>} : vector<16x64xi32>
    %c1_i32_31 = arith.constant 1 : i32
    %66 = vector.broadcast %c1_i32_31 : i32 to vector<16x64xi32>
    %67 = arith.cmpi sge, %65, %66 : vector<16x64xi32>
    %cst_32 = arith.constant 0.000000e+00 : f32
    %68 = vector.broadcast %cst_32 : f32 to vector<16x64xf32>
    %69 = arith.select %67, %64, %68 : vector<16x64xi1>, vector<16x64xf32>
    %c15_i32 = arith.constant 15 : i32
    %70 = tpu.dynamic_rotate %63 by %c15_i32 dim 0 : vector<16x64xf32>, i32 -> vector<16x64xf32>
    %71 = tpu.iota {dimensions = array<i32: 0>} : vector<16x64xi32>
    %c15_i32_33 = arith.constant 15 : i32
    %72 = vector.broadcast %c15_i32_33 : i32 to vector<16x64xi32>
    %73 = arith.cmpi slt, %71, %72 : vector<16x64xi32>
    %cst_34 = arith.constant 0.000000e+00 : f32
    %74 = vector.broadcast %cst_34 : f32 to vector<16x64xf32>
    %75 = arith.select %73, %70, %74 : vector<16x64xi1>, vector<16x64xf32>
    %76 = tpu.concatenate %69, %63, %75 in 1 : vector<16x64xf32>, vector<16x64xf32>, vector<16x64xf32> -> vector<16x192xf32>
    %77 = arith.truncf %76 : vector<16x192xf32> to vector<16x192xbf16>
    %c0_35 = arith.constant 0 : index
    %c0_36 = arith.constant 0 : index
    %78 = vector.load %arg6[%c0_35, %c0_36] : memref<192x128xbf16, #tpu.memory_space<vmem>>, vector<192x128xbf16>
    %cst_37 = arith.constant dense<0.000000e+00> : vector<16x128xf32>
    %79 = tpu.matmul %77, %78, %cst_37 {dimension_numbers = #tpu.dot_dimension_numbers<[1], [0], [0], [1], [0, 0, 1, 1], [], []>} : vector<16x192xbf16>, vector<192x128xbf16>, vector<16x128xf32> -> vector<16x128xf32>
    %c0_38 = arith.constant 0 : index
    %c0_39 = arith.constant 0 : index
    %80 = vector.load %arg7[%c0_38, %c0_39] : memref<1x128xf32, #tpu.memory_space<vmem>>, vector<1x128xf32>
    %81 = vector.broadcast %80 : vector<1x128xf32> to vector<16x128xf32>
    %82 = arith.addf %79, %81 : vector<16x128xf32>
    %cst_40 = arith.constant dense<0.000000e+00> : vector<16xf32>
    %83 = vector.multi_reduction <add>, %82, %cst_40 [1] : vector<16x128xf32> to vector<16xf32>
    %84 = vector.shape_cast %83 : vector<16xf32> to vector<16x1xf32>
    %cst_41 = arith.constant dense<0.000000e+00> : vector<1xf32>
    %85 = vector.multi_reduction <add>, %84, %cst_41 [0] : vector<16x1xf32> to vector<1xf32>
    %86 = vector.shape_cast %85 : vector<1xf32> to vector<1x1xf32>
    %cst_42 = arith.constant 2.048000e+03 : f32
    %87 = vector.broadcast %cst_42 : f32 to vector<1x1xf32>
    %88 = arith.divf %86, %87 : vector<1x1xf32>
    %89 = vector.broadcast %88 : vector<1x1xf32> to vector<16x128xf32>
    %90 = arith.subf %82, %89 : vector<16x128xf32>
    %91 = arith.mulf %90, %90 : vector<16x128xf32>
    %cst_43 = arith.constant dense<0.000000e+00> : vector<16xf32>
    %92 = vector.multi_reduction <add>, %91, %cst_43 [1] : vector<16x128xf32> to vector<16xf32>
    %93 = vector.shape_cast %92 : vector<16xf32> to vector<16x1xf32>
    %cst_44 = arith.constant dense<0.000000e+00> : vector<1xf32>
    %94 = vector.multi_reduction <add>, %93, %cst_44 [0] : vector<16x1xf32> to vector<1xf32>
    %95 = vector.shape_cast %94 : vector<1xf32> to vector<1x1xf32>
    %cst_45 = arith.constant 2.048000e+03 : f32
    %96 = vector.broadcast %cst_45 : f32 to vector<1x1xf32>
    %97 = arith.divf %95, %96 : vector<1x1xf32>
    %cst_46 = arith.constant 9.99999974E-6 : f32
    %98 = vector.broadcast %cst_46 : f32 to vector<1x1xf32>
    %99 = arith.addf %97, %98 : vector<1x1xf32>
    %100 = math.rsqrt %99 : vector<1x1xf32>
    %101 = vector.broadcast %100 : vector<1x1xf32> to vector<16x128xf32>
    %102 = arith.mulf %90, %101 : vector<16x128xf32>
    %c0_47 = arith.constant 0 : index
    %c0_48 = arith.constant 0 : index
    %103 = vector.load %arg8[%c0_47, %c0_48] : memref<16x128xf32, #tpu.memory_space<vmem>>, vector<16x128xf32>
    %104 = arith.mulf %102, %103 : vector<16x128xf32>
    %c0_49 = arith.constant 0 : index
    %c0_50 = arith.constant 0 : index
    %105 = vector.load %arg9[%c0_49, %c0_50] : memref<16x128xf32, #tpu.memory_space<vmem>>, vector<16x128xf32>
    %106 = arith.addf %104, %105 : vector<16x128xf32>
    %cst_51 = arith.constant 0.000000e+00 : f32
    %107 = vector.broadcast %cst_51 : f32 to vector<16x128xf32>
    %108 = arith.cmpf ogt, %106, %107 : vector<16x128xf32>
    %cst_52 = arith.constant 0.000000e+00 : f32
    %109 = vector.broadcast %cst_52 : f32 to vector<16x128xf32>
    %110 = arith.minimumf %106, %109 : vector<16x128xf32>
    %111 = math.exp %110 : vector<16x128xf32>
    %cst_53 = arith.constant 1.000000e+00 : f32
    %112 = vector.broadcast %cst_53 : f32 to vector<16x128xf32>
    %113 = arith.subf %111, %112 : vector<16x128xf32>
    %114 = arith.select %108, %106, %113 : vector<16x128xi1>, vector<16x128xf32>
    %c15_i32_54 = arith.constant 15 : i32
    %115 = tpu.dynamic_rotate %114 by %c15_i32_54 dim 0 : vector<16x128xf32>, i32 -> vector<16x128xf32>
    %116 = tpu.iota {dimensions = array<i32: 0>} : vector<16x128xi32>
    %c15_i32_55 = arith.constant 15 : i32
    %117 = vector.broadcast %c15_i32_55 : i32 to vector<16x128xi32>
    %118 = arith.cmpi slt, %116, %117 : vector<16x128xi32>
    %cst_56 = arith.constant 0.000000e+00 : f32
    %119 = vector.broadcast %cst_56 : f32 to vector<16x128xf32>
    %120 = arith.select %118, %115, %119 : vector<16x128xi1>, vector<16x128xf32>
    %121 = arith.maximumf %114, %120 : vector<16x128xf32>
    %c0_57 = arith.constant 0 : index
    %c0_58 = arith.constant 0 : index
    %122 = vector.load %arg39[%c0_57, %c0_58] : memref<8x16xbf16, #tpu.memory_space<vmem>>, vector<8x16xbf16>
    %123 = arith.truncf %121 : vector<16x128xf32> to vector<16x128xbf16>
    %cst_59 = arith.constant dense<0.000000e+00> : vector<8x128xf32>
    %124 = tpu.matmul %122, %123, %cst_59 {dimension_numbers = #tpu.dot_dimension_numbers<[1], [0], [0], [1], [0, 0, 1, 1], [], []>} : vector<8x16xbf16>, vector<16x128xbf16>, vector<8x128xf32> -> vector<8x128xf32>
    %c1_i32_60 = arith.constant 1 : i32
    %125 = tpu.dynamic_rotate %124 by %c1_i32_60 dim 0 : vector<8x128xf32>, i32 -> vector<8x128xf32>
    %126 = tpu.iota {dimensions = array<i32: 0>} : vector<8x128xi32>
    %c1_i32_61 = arith.constant 1 : i32
    %127 = vector.broadcast %c1_i32_61 : i32 to vector<8x128xi32>
    %128 = arith.cmpi sge, %126, %127 : vector<8x128xi32>
    %cst_62 = arith.constant 0.000000e+00 : f32
    %129 = vector.broadcast %cst_62 : f32 to vector<8x128xf32>
    %130 = arith.select %128, %125, %129 : vector<8x128xi1>, vector<8x128xf32>
    %c7_i32 = arith.constant 7 : i32
    %131 = tpu.dynamic_rotate %124 by %c7_i32 dim 0 : vector<8x128xf32>, i32 -> vector<8x128xf32>
    %132 = tpu.iota {dimensions = array<i32: 0>} : vector<8x128xi32>
    %c7_i32_63 = arith.constant 7 : i32
    %133 = vector.broadcast %c7_i32_63 : i32 to vector<8x128xi32>
    %134 = arith.cmpi slt, %132, %133 : vector<8x128xi32>
    %cst_64 = arith.constant 0.000000e+00 : f32
    %135 = vector.broadcast %cst_64 : f32 to vector<8x128xf32>
    %136 = arith.select %134, %131, %135 : vector<8x128xi1>, vector<8x128xf32>
    %137 = tpu.concatenate %130, %124, %136 in 1 : vector<8x128xf32>, vector<8x128xf32>, vector<8x128xf32> -> vector<8x384xf32>
    %138 = arith.truncf %137 : vector<8x384xf32> to vector<8x384xbf16>
    %c0_65 = arith.constant 0 : index
    %c0_66 = arith.constant 0 : index
    %139 = vector.load %arg10[%c0_65, %c0_66] : memref<384x128xbf16, #tpu.memory_space<vmem>>, vector<384x128xbf16>
    %cst_67 = arith.constant dense<0.000000e+00> : vector<8x128xf32>
    %140 = tpu.matmul %138, %139, %cst_67 {dimension_numbers = #tpu.dot_dimension_numbers<[1], [0], [0], [1], [0, 0, 1, 1], [], []>} : vector<8x384xbf16>, vector<384x128xbf16>, vector<8x128xf32> -> vector<8x128xf32>
    %c0_68 = arith.constant 0 : index
    %c0_69 = arith.constant 0 : index
    %141 = vector.load %arg11[%c0_68, %c0_69] : memref<1x128xf32, #tpu.memory_space<vmem>>, vector<1x128xf32>
    %142 = vector.broadcast %141 : vector<1x128xf32> to vector<8x128xf32>
    %143 = arith.addf %140, %142 : vector<8x128xf32>
    %cst_70 = arith.constant dense<0.000000e+00> : vector<8xf32>
    %144 = vector.multi_reduction <add>, %143, %cst_70 [1] : vector<8x128xf32> to vector<8xf32>
    %145 = vector.shape_cast %144 : vector<8xf32> to vector<8x1xf32>
    %cst_71 = arith.constant dense<0.000000e+00> : vector<1xf32>
    %146 = vector.multi_reduction <add>, %145, %cst_71 [0] : vector<8x1xf32> to vector<1xf32>
    %147 = vector.shape_cast %146 : vector<1xf32> to vector<1x1xf32>
    %cst_72 = arith.constant 1.024000e+03 : f32
    %148 = vector.broadcast %cst_72 : f32 to vector<1x1xf32>
    %149 = arith.divf %147, %148 : vector<1x1xf32>
    %150 = vector.broadcast %149 : vector<1x1xf32> to vector<8x128xf32>
    %151 = arith.subf %143, %150 : vector<8x128xf32>
    %152 = arith.mulf %151, %151 : vector<8x128xf32>
    %cst_73 = arith.constant dense<0.000000e+00> : vector<8xf32>
    %153 = vector.multi_reduction <add>, %152, %cst_73 [1] : vector<8x128xf32> to vector<8xf32>
    %154 = vector.shape_cast %153 : vector<8xf32> to vector<8x1xf32>
    %cst_74 = arith.constant dense<0.000000e+00> : vector<1xf32>
    %155 = vector.multi_reduction <add>, %154, %cst_74 [0] : vector<8x1xf32> to vector<1xf32>
    %156 = vector.shape_cast %155 : vector<1xf32> to vector<1x1xf32>
    %cst_75 = arith.constant 1.024000e+03 : f32
    %157 = vector.broadcast %cst_75 : f32 to vector<1x1xf32>
    %158 = arith.divf %156, %157 : vector<1x1xf32>
    %cst_76 = arith.constant 9.99999974E-6 : f32
    %159 = vector.broadcast %cst_76 : f32 to vector<1x1xf32>
    %160 = arith.addf %158, %159 : vector<1x1xf32>
    %161 = math.rsqrt %160 : vector<1x1xf32>
    %162 = vector.broadcast %161 : vector<1x1xf32> to vector<8x128xf32>
    %163 = arith.mulf %151, %162 : vector<8x128xf32>
    %c0_77 = arith.constant 0 : index
    %c0_78 = arith.constant 0 : index
    %164 = vector.load %arg12[%c0_77, %c0_78] : memref<8x128xf32, #tpu.memory_space<vmem>>, vector<8x128xf32>
    %165 = arith.mulf %163, %164 : vector<8x128xf32>
    %c0_79 = arith.constant 0 : index
    %c0_80 = arith.constant 0 : index
    %166 = vector.load %arg13[%c0_79, %c0_80] : memref<8x128xf32, #tpu.memory_space<vmem>>, vector<8x128xf32>
    %167 = arith.addf %165, %166 : vector<8x128xf32>
    %cst_81 = arith.constant 0.000000e+00 : f32
    %168 = vector.broadcast %cst_81 : f32 to vector<8x128xf32>
    %169 = arith.cmpf ogt, %167, %168 : vector<8x128xf32>
    %cst_82 = arith.constant 0.000000e+00 : f32
    %170 = vector.broadcast %cst_82 : f32 to vector<8x128xf32>
    %171 = arith.minimumf %167, %170 : vector<8x128xf32>
    %172 = math.exp %171 : vector<8x128xf32>
    %cst_83 = arith.constant 1.000000e+00 : f32
    %173 = vector.broadcast %cst_83 : f32 to vector<8x128xf32>
    %174 = arith.subf %172, %173 : vector<8x128xf32>
    %175 = arith.select %169, %167, %174 : vector<8x128xi1>, vector<8x128xf32>
    %c7_i32_84 = arith.constant 7 : i32
    %176 = tpu.dynamic_rotate %175 by %c7_i32_84 dim 0 : vector<8x128xf32>, i32 -> vector<8x128xf32>
    %177 = tpu.iota {dimensions = array<i32: 0>} : vector<8x128xi32>
    %c7_i32_85 = arith.constant 7 : i32
    %178 = vector.broadcast %c7_i32_85 : i32 to vector<8x128xi32>
    %179 = arith.cmpi slt, %177, %178 : vector<8x128xi32>
    %cst_86 = arith.constant 0.000000e+00 : f32
    %180 = vector.broadcast %cst_86 : f32 to vector<8x128xf32>
    %181 = arith.select %179, %176, %180 : vector<8x128xi1>, vector<8x128xf32>
    %182 = arith.maximumf %175, %181 : vector<8x128xf32>
    %c0_87 = arith.constant 0 : index
    %c0_88 = arith.constant 0 : index
    %183 = vector.load %arg40[%c0_87, %c0_88] : memref<4x8xbf16, #tpu.memory_space<vmem>>, vector<4x8xbf16>
    %184 = arith.truncf %182 : vector<8x128xf32> to vector<8x128xbf16>
    %cst_89 = arith.constant dense<0.000000e+00> : vector<4x128xf32>
    %185 = tpu.matmul %183, %184, %cst_89 {dimension_numbers = #tpu.dot_dimension_numbers<[1], [0], [0], [1], [0, 0, 1, 1], [], []>} : vector<4x8xbf16>, vector<8x128xbf16>, vector<4x128xf32> -> vector<4x128xf32>
    %186 = arith.truncf %185 : vector<4x128xf32> to vector<4x128xbf16>
    %c0_90 = arith.constant 0 : index
    %c0_91 = arith.constant 0 : index
    %187 = vector.load %arg14[%c0_90, %c0_91] : memref<128x128xbf16, #tpu.memory_space<vmem>>, vector<128x128xbf16>
    %cst_92 = arith.constant dense<0.000000e+00> : vector<4x128xf32>
    %188 = tpu.matmul %186, %187, %cst_92 {dimension_numbers = #tpu.dot_dimension_numbers<[1], [0], [0], [1], [0, 0, 1, 1], [], []>} : vector<4x128xbf16>, vector<128x128xbf16>, vector<4x128xf32> -> vector<4x128xf32>
    %c3_i32 = arith.constant 3 : i32
    %189 = tpu.dynamic_rotate %185 by %c3_i32 dim 0 : vector<4x128xf32>, i32 -> vector<4x128xf32>
    %190 = tpu.iota {dimensions = array<i32: 0>} : vector<4x128xi32>
    %c3_i32_93 = arith.constant 3 : i32
    %191 = vector.broadcast %c3_i32_93 : i32 to vector<4x128xi32>
    %192 = arith.cmpi slt, %190, %191 : vector<4x128xi32>
    %cst_94 = arith.constant 0.000000e+00 : f32
    %193 = vector.broadcast %cst_94 : f32 to vector<4x128xf32>
    %194 = arith.select %192, %189, %193 : vector<4x128xi1>, vector<4x128xf32>
    %195 = tpu.concatenate %185, %194 in 1 : vector<4x128xf32>, vector<4x128xf32> -> vector<4x256xf32>
    %196 = arith.truncf %195 : vector<4x256xf32> to vector<4x256xbf16>
    %c0_95 = arith.constant 0 : index
    %c0_96 = arith.constant 0 : index
    %197 = vector.load %arg15[%c0_95, %c0_96] : memref<256x128xbf16, #tpu.memory_space<vmem>>, vector<256x128xbf16>
    %cst_97 = arith.constant dense<0.000000e+00> : vector<4x128xf32>
    %198 = tpu.matmul %196, %197, %cst_97 {dimension_numbers = #tpu.dot_dimension_numbers<[1], [0], [0], [1], [0, 0, 1, 1], [], []>} : vector<4x256xbf16>, vector<256x128xbf16>, vector<4x128xf32> -> vector<4x128xf32>
    %199 = tpu.concatenate %188, %198 in 0 : vector<4x128xf32>, vector<4x128xf32> -> vector<8x128xf32>
    %c0_98 = arith.constant 0 : index
    %c0_99 = arith.constant 0 : index
    %200 = vector.load %arg41[%c0_98, %c0_99] : memref<8x8xbf16, #tpu.memory_space<vmem>>, vector<8x8xbf16>
    %201 = arith.truncf %199 : vector<8x128xf32> to vector<8x128xbf16>
    %cst_100 = arith.constant dense<0.000000e+00> : vector<8x128xf32>
    %202 = tpu.matmul %200, %201, %cst_100 {dimension_numbers = #tpu.dot_dimension_numbers<[1], [0], [0], [1], [0, 0, 1, 1], [], []>} : vector<8x8xbf16>, vector<8x128xbf16>, vector<8x128xf32> -> vector<8x128xf32>
    %c0_101 = arith.constant 0 : index
    %c0_102 = arith.constant 0 : index
    %203 = vector.load %arg16[%c0_101, %c0_102] : memref<1x128xf32, #tpu.memory_space<vmem>>, vector<1x128xf32>
    %204 = vector.broadcast %203 : vector<1x128xf32> to vector<8x128xf32>
    %205 = arith.addf %202, %204 : vector<8x128xf32>
    %cst_103 = arith.constant dense<0.000000e+00> : vector<8xf32>
    %206 = vector.multi_reduction <add>, %205, %cst_103 [1] : vector<8x128xf32> to vector<8xf32>
    %207 = vector.shape_cast %206 : vector<8xf32> to vector<8x1xf32>
    %cst_104 = arith.constant dense<0.000000e+00> : vector<1xf32>
    %208 = vector.multi_reduction <add>, %207, %cst_104 [0] : vector<8x1xf32> to vector<1xf32>
    %209 = vector.shape_cast %208 : vector<1xf32> to vector<1x1xf32>
    %cst_105 = arith.constant 1.024000e+03 : f32
    %210 = vector.broadcast %cst_105 : f32 to vector<1x1xf32>
    %211 = arith.divf %209, %210 : vector<1x1xf32>
    %212 = vector.broadcast %211 : vector<1x1xf32> to vector<8x128xf32>
    %213 = arith.subf %205, %212 : vector<8x128xf32>
    %214 = arith.mulf %213, %213 : vector<8x128xf32>
    %cst_106 = arith.constant dense<0.000000e+00> : vector<8xf32>
    %215 = vector.multi_reduction <add>, %214, %cst_106 [1] : vector<8x128xf32> to vector<8xf32>
    %216 = vector.shape_cast %215 : vector<8xf32> to vector<8x1xf32>
    %cst_107 = arith.constant dense<0.000000e+00> : vector<1xf32>
    %217 = vector.multi_reduction <add>, %216, %cst_107 [0] : vector<8x1xf32> to vector<1xf32>
    %218 = vector.shape_cast %217 : vector<1xf32> to vector<1x1xf32>
    %cst_108 = arith.constant 1.024000e+03 : f32
    %219 = vector.broadcast %cst_108 : f32 to vector<1x1xf32>
    %220 = arith.divf %218, %219 : vector<1x1xf32>
    %cst_109 = arith.constant 9.99999974E-6 : f32
    %221 = vector.broadcast %cst_109 : f32 to vector<1x1xf32>
    %222 = arith.addf %220, %221 : vector<1x1xf32>
    %223 = math.rsqrt %222 : vector<1x1xf32>
    %224 = vector.broadcast %223 : vector<1x1xf32> to vector<8x128xf32>
    %225 = arith.mulf %213, %224 : vector<8x128xf32>
    %c0_110 = arith.constant 0 : index
    %c0_111 = arith.constant 0 : index
    %226 = vector.load %arg17[%c0_110, %c0_111] : memref<8x128xf32, #tpu.memory_space<vmem>>, vector<8x128xf32>
    %227 = arith.mulf %225, %226 : vector<8x128xf32>
    %c0_112 = arith.constant 0 : index
    %c0_113 = arith.constant 0 : index
    %228 = vector.load %arg18[%c0_112, %c0_113] : memref<8x128xf32, #tpu.memory_space<vmem>>, vector<8x128xf32>
    %229 = arith.addf %227, %228 : vector<8x128xf32>
    %cst_114 = arith.constant 0.000000e+00 : f32
    %230 = vector.broadcast %cst_114 : f32 to vector<8x128xf32>
    %231 = arith.cmpf ogt, %229, %230 : vector<8x128xf32>
    %cst_115 = arith.constant 0.000000e+00 : f32
    %232 = vector.broadcast %cst_115 : f32 to vector<8x128xf32>
    %233 = arith.minimumf %229, %232 : vector<8x128xf32>
    %234 = math.exp %233 : vector<8x128xf32>
    %cst_116 = arith.constant 1.000000e+00 : f32
    %235 = vector.broadcast %cst_116 : f32 to vector<8x128xf32>
    %236 = arith.subf %234, %235 : vector<8x128xf32>
    %237 = arith.select %231, %229, %236 : vector<8x128xi1>, vector<8x128xf32>
    %238 = arith.truncf %124 : vector<8x128xf32> to vector<8x128xbf16>
    %c0_117 = arith.constant 0 : index
    %c0_118 = arith.constant 0 : index
    %239 = vector.load %arg19[%c0_117, %c0_118] : memref<128x64xbf16, #tpu.memory_space<vmem>>, vector<128x64xbf16>
    %cst_119 = arith.constant dense<0.000000e+00> : vector<8x64xf32>
    %240 = tpu.matmul %238, %239, %cst_119 {dimension_numbers = #tpu.dot_dimension_numbers<[1], [0], [0], [1], [0, 0, 1, 1], [], []>} : vector<8x128xbf16>, vector<128x64xbf16>, vector<8x64xf32> -> vector<8x64xf32>
    %c7_i32_120 = arith.constant 7 : i32
    %241 = tpu.dynamic_rotate %124 by %c7_i32_120 dim 0 : vector<8x128xf32>, i32 -> vector<8x128xf32>
    %242 = tpu.iota {dimensions = array<i32: 0>} : vector<8x128xi32>
    %c7_i32_121 = arith.constant 7 : i32
    %243 = vector.broadcast %c7_i32_121 : i32 to vector<8x128xi32>
    %244 = arith.cmpi slt, %242, %243 : vector<8x128xi32>
    %cst_122 = arith.constant 0.000000e+00 : f32
    %245 = vector.broadcast %cst_122 : f32 to vector<8x128xf32>
    %246 = arith.select %244, %241, %245 : vector<8x128xi1>, vector<8x128xf32>
    %247 = tpu.concatenate %124, %246 in 1 : vector<8x128xf32>, vector<8x128xf32> -> vector<8x256xf32>
    %248 = arith.truncf %247 : vector<8x256xf32> to vector<8x256xbf16>
    %c0_123 = arith.constant 0 : index
    %c0_124 = arith.constant 0 : index
    %249 = vector.load %arg20[%c0_123, %c0_124] : memref<256x64xbf16, #tpu.memory_space<vmem>>, vector<256x64xbf16>
    %cst_125 = arith.constant dense<0.000000e+00> : vector<8x64xf32>
    %250 = tpu.matmul %248, %249, %cst_125 {dimension_numbers = #tpu.dot_dimension_numbers<[1], [0], [0], [1], [0, 0, 1, 1], [], []>} : vector<8x256xbf16>, vector<256x64xbf16>, vector<8x64xf32> -> vector<8x64xf32>
    %251 = arith.truncf %237 : vector<8x128xf32> to vector<8x128xbf16>
    %c0_126 = arith.constant 0 : index
    %c0_127 = arith.constant 0 : index
    %252 = vector.load %arg21[%c0_126, %c0_127] : memref<128x64xbf16, #tpu.memory_space<vmem>>, vector<128x64xbf16>
    %cst_128 = arith.constant dense<0.000000e+00> : vector<8x64xf32>
    %253 = tpu.matmul %251, %252, %cst_128 {dimension_numbers = #tpu.dot_dimension_numbers<[1], [0], [0], [1], [0, 0, 1, 1], [], []>} : vector<8x128xbf16>, vector<128x64xbf16>, vector<8x64xf32> -> vector<8x64xf32>
    %c7_i32_129 = arith.constant 7 : i32
    %254 = tpu.dynamic_rotate %237 by %c7_i32_129 dim 0 : vector<8x128xf32>, i32 -> vector<8x128xf32>
    %255 = tpu.iota {dimensions = array<i32: 0>} : vector<8x128xi32>
    %c7_i32_130 = arith.constant 7 : i32
    %256 = vector.broadcast %c7_i32_130 : i32 to vector<8x128xi32>
    %257 = arith.cmpi slt, %255, %256 : vector<8x128xi32>
    %cst_131 = arith.constant 0.000000e+00 : f32
    %258 = vector.broadcast %cst_131 : f32 to vector<8x128xf32>
    %259 = arith.select %257, %254, %258 : vector<8x128xi1>, vector<8x128xf32>
    %260 = tpu.concatenate %237, %259 in 1 : vector<8x128xf32>, vector<8x128xf32> -> vector<8x256xf32>
    %261 = arith.truncf %260 : vector<8x256xf32> to vector<8x256xbf16>
    %c0_132 = arith.constant 0 : index
    %c0_133 = arith.constant 0 : index
    %262 = vector.load %arg22[%c0_132, %c0_133] : memref<256x64xbf16, #tpu.memory_space<vmem>>, vector<256x64xbf16>
    %cst_134 = arith.constant dense<0.000000e+00> : vector<8x64xf32>
    %263 = tpu.matmul %261, %262, %cst_134 {dimension_numbers = #tpu.dot_dimension_numbers<[1], [0], [0], [1], [0, 0, 1, 1], [], []>} : vector<8x256xbf16>, vector<256x64xbf16>, vector<8x64xf32> -> vector<8x64xf32>
    %264 = arith.addf %240, %253 : vector<8x64xf32>
    %265 = arith.addf %250, %263 : vector<8x64xf32>
    %266 = tpu.concatenate %264, %265 in 0 : vector<8x64xf32>, vector<8x64xf32> -> vector<16x64xf32>
    %c0_135 = arith.constant 0 : index
    %c0_136 = arith.constant 0 : index
    %267 = vector.load %arg42[%c0_135, %c0_136] : memref<16x16xbf16, #tpu.memory_space<vmem>>, vector<16x16xbf16>
    %268 = arith.truncf %266 : vector<16x64xf32> to vector<16x64xbf16>
    %cst_137 = arith.constant dense<0.000000e+00> : vector<16x64xf32>
    %269 = tpu.matmul %267, %268, %cst_137 {dimension_numbers = #tpu.dot_dimension_numbers<[1], [0], [0], [1], [0, 0, 1, 1], [], []>} : vector<16x16xbf16>, vector<16x64xbf16>, vector<16x64xf32> -> vector<16x64xf32>
    %c0_138 = arith.constant 0 : index
    %c0_139 = arith.constant 0 : index
    %270 = vector.load %arg23[%c0_138, %c0_139] : memref<1x64xf32, #tpu.memory_space<vmem>>, vector<1x64xf32>
    %271 = vector.broadcast %270 : vector<1x64xf32> to vector<16x64xf32>
    %272 = arith.addf %269, %271 : vector<16x64xf32>
    %cst_140 = arith.constant dense<0.000000e+00> : vector<16xf32>
    %273 = vector.multi_reduction <add>, %272, %cst_140 [1] : vector<16x64xf32> to vector<16xf32>
    %274 = vector.shape_cast %273 : vector<16xf32> to vector<16x1xf32>
    %cst_141 = arith.constant dense<0.000000e+00> : vector<1xf32>
    %275 = vector.multi_reduction <add>, %274, %cst_141 [0] : vector<16x1xf32> to vector<1xf32>
    %276 = vector.shape_cast %275 : vector<1xf32> to vector<1x1xf32>
    %cst_142 = arith.constant 1.024000e+03 : f32
    %277 = vector.broadcast %cst_142 : f32 to vector<1x1xf32>
    %278 = arith.divf %276, %277 : vector<1x1xf32>
    %279 = vector.broadcast %278 : vector<1x1xf32> to vector<16x64xf32>
    %280 = arith.subf %272, %279 : vector<16x64xf32>
    %281 = arith.mulf %280, %280 : vector<16x64xf32>
    %cst_143 = arith.constant dense<0.000000e+00> : vector<16xf32>
    %282 = vector.multi_reduction <add>, %281, %cst_143 [1] : vector<16x64xf32> to vector<16xf32>
    %283 = vector.shape_cast %282 : vector<16xf32> to vector<16x1xf32>
    %cst_144 = arith.constant dense<0.000000e+00> : vector<1xf32>
    %284 = vector.multi_reduction <add>, %283, %cst_144 [0] : vector<16x1xf32> to vector<1xf32>
    %285 = vector.shape_cast %284 : vector<1xf32> to vector<1x1xf32>
    %cst_145 = arith.constant 1.024000e+03 : f32
    %286 = vector.broadcast %cst_145 : f32 to vector<1x1xf32>
    %287 = arith.divf %285, %286 : vector<1x1xf32>
    %cst_146 = arith.constant 9.99999974E-6 : f32
    %288 = vector.broadcast %cst_146 : f32 to vector<1x1xf32>
    %289 = arith.addf %287, %288 : vector<1x1xf32>
    %290 = math.rsqrt %289 : vector<1x1xf32>
    %291 = vector.broadcast %290 : vector<1x1xf32> to vector<16x64xf32>
    %292 = arith.mulf %280, %291 : vector<16x64xf32>
    %c0_147 = arith.constant 0 : index
    %c0_148 = arith.constant 0 : index
    %293 = vector.load %arg24[%c0_147, %c0_148] : memref<16x64xf32, #tpu.memory_space<vmem>>, vector<16x64xf32>
    %294 = arith.mulf %292, %293 : vector<16x64xf32>
    %c0_149 = arith.constant 0 : index
    %c0_150 = arith.constant 0 : index
    %295 = vector.load %arg25[%c0_149, %c0_150] : memref<16x64xf32, #tpu.memory_space<vmem>>, vector<16x64xf32>
    %296 = arith.addf %294, %295 : vector<16x64xf32>
    %cst_151 = arith.constant 0.000000e+00 : f32
    %297 = vector.broadcast %cst_151 : f32 to vector<16x64xf32>
    %298 = arith.cmpf ogt, %296, %297 : vector<16x64xf32>
    %cst_152 = arith.constant 0.000000e+00 : f32
    %299 = vector.broadcast %cst_152 : f32 to vector<16x64xf32>
    %300 = arith.minimumf %296, %299 : vector<16x64xf32>
    %301 = math.exp %300 : vector<16x64xf32>
    %cst_153 = arith.constant 1.000000e+00 : f32
    %302 = vector.broadcast %cst_153 : f32 to vector<16x64xf32>
    %303 = arith.subf %301, %302 : vector<16x64xf32>
    %304 = arith.select %298, %296, %303 : vector<16x64xi1>, vector<16x64xf32>
    %305 = arith.truncf %63 : vector<16x64xf32> to vector<16x64xbf16>
    %c0_154 = arith.constant 0 : index
    %c0_155 = arith.constant 0 : index
    %306 = vector.load %arg26[%c0_154, %c0_155] : memref<64x32xbf16, #tpu.memory_space<vmem>>, vector<64x32xbf16>
    %cst_156 = arith.constant dense<0.000000e+00> : vector<16x32xf32>
    %307 = tpu.matmul %305, %306, %cst_156 {dimension_numbers = #tpu.dot_dimension_numbers<[1], [0], [0], [1], [0, 0, 1, 1], [], []>} : vector<16x64xbf16>, vector<64x32xbf16>, vector<16x32xf32> -> vector<16x32xf32>
    %c15_i32_157 = arith.constant 15 : i32
    %308 = tpu.dynamic_rotate %63 by %c15_i32_157 dim 0 : vector<16x64xf32>, i32 -> vector<16x64xf32>
    %309 = tpu.iota {dimensions = array<i32: 0>} : vector<16x64xi32>
    %c15_i32_158 = arith.constant 15 : i32
    %310 = vector.broadcast %c15_i32_158 : i32 to vector<16x64xi32>
    %311 = arith.cmpi slt, %309, %310 : vector<16x64xi32>
    %cst_159 = arith.constant 0.000000e+00 : f32
    %312 = vector.broadcast %cst_159 : f32 to vector<16x64xf32>
    %313 = arith.select %311, %308, %312 : vector<16x64xi1>, vector<16x64xf32>
    %314 = tpu.concatenate %63, %313 in 1 : vector<16x64xf32>, vector<16x64xf32> -> vector<16x128xf32>
    %315 = arith.truncf %314 : vector<16x128xf32> to vector<16x128xbf16>
    %c0_160 = arith.constant 0 : index
    %c0_161 = arith.constant 0 : index
    %316 = vector.load %arg27[%c0_160, %c0_161] : memref<128x32xbf16, #tpu.memory_space<vmem>>, vector<128x32xbf16>
    %cst_162 = arith.constant dense<0.000000e+00> : vector<16x32xf32>
    %317 = tpu.matmul %315, %316, %cst_162 {dimension_numbers = #tpu.dot_dimension_numbers<[1], [0], [0], [1], [0, 0, 1, 1], [], []>} : vector<16x128xbf16>, vector<128x32xbf16>, vector<16x32xf32> -> vector<16x32xf32>
    %318 = arith.truncf %304 : vector<16x64xf32> to vector<16x64xbf16>
    %c0_163 = arith.constant 0 : index
    %c0_164 = arith.constant 0 : index
    %319 = vector.load %arg28[%c0_163, %c0_164] : memref<64x32xbf16, #tpu.memory_space<vmem>>, vector<64x32xbf16>
    %cst_165 = arith.constant dense<0.000000e+00> : vector<16x32xf32>
    %320 = tpu.matmul %318, %319, %cst_165 {dimension_numbers = #tpu.dot_dimension_numbers<[1], [0], [0], [1], [0, 0, 1, 1], [], []>} : vector<16x64xbf16>, vector<64x32xbf16>, vector<16x32xf32> -> vector<16x32xf32>
    %c15_i32_166 = arith.constant 15 : i32
    %321 = tpu.dynamic_rotate %304 by %c15_i32_166 dim 0 : vector<16x64xf32>, i32 -> vector<16x64xf32>
    %322 = tpu.iota {dimensions = array<i32: 0>} : vector<16x64xi32>
    %c15_i32_167 = arith.constant 15 : i32
    %323 = vector.broadcast %c15_i32_167 : i32 to vector<16x64xi32>
    %324 = arith.cmpi slt, %322, %323 : vector<16x64xi32>
    %cst_168 = arith.constant 0.000000e+00 : f32
    %325 = vector.broadcast %cst_168 : f32 to vector<16x64xf32>
    %326 = arith.select %324, %321, %325 : vector<16x64xi1>, vector<16x64xf32>
    %327 = tpu.concatenate %304, %326 in 1 : vector<16x64xf32>, vector<16x64xf32> -> vector<16x128xf32>
    %328 = arith.truncf %327 : vector<16x128xf32> to vector<16x128xbf16>
    %c0_169 = arith.constant 0 : index
    %c0_170 = arith.constant 0 : index
    %329 = vector.load %arg29[%c0_169, %c0_170] : memref<128x32xbf16, #tpu.memory_space<vmem>>, vector<128x32xbf16>
    %cst_171 = arith.constant dense<0.000000e+00> : vector<16x32xf32>
    %330 = tpu.matmul %328, %329, %cst_171 {dimension_numbers = #tpu.dot_dimension_numbers<[1], [0], [0], [1], [0, 0, 1, 1], [], []>} : vector<16x128xbf16>, vector<128x32xbf16>, vector<16x32xf32> -> vector<16x32xf32>
    %331 = arith.addf %307, %320 : vector<16x32xf32>
    %332 = arith.addf %317, %330 : vector<16x32xf32>
    %333 = tpu.concatenate %331, %332 in 0 : vector<16x32xf32>, vector<16x32xf32> -> vector<32x32xf32>
    %c0_172 = arith.constant 0 : index
    %c0_173 = arith.constant 0 : index
    %334 = vector.load %arg43[%c0_172, %c0_173] : memref<32x32xbf16, #tpu.memory_space<vmem>>, vector<32x32xbf16>
    %335 = arith.truncf %333 : vector<32x32xf32> to vector<32x32xbf16>
    %cst_174 = arith.constant dense<0.000000e+00> : vector<32x32xf32>
    %336 = tpu.matmul %334, %335, %cst_174 {dimension_numbers = #tpu.dot_dimension_numbers<[1], [0], [0], [1], [0, 0, 1, 1], [], []>} : vector<32x32xbf16>, vector<32x32xbf16>, vector<32x32xf32> -> vector<32x32xf32>
    %c0_175 = arith.constant 0 : index
    %c0_176 = arith.constant 0 : index
    %337 = vector.load %arg30[%c0_175, %c0_176] : memref<1x32xf32, #tpu.memory_space<vmem>>, vector<1x32xf32>
    %338 = vector.broadcast %337 : vector<1x32xf32> to vector<32x32xf32>
    %339 = arith.addf %336, %338 : vector<32x32xf32>
    %cst_177 = arith.constant dense<0.000000e+00> : vector<32xf32>
    %340 = vector.multi_reduction <add>, %339, %cst_177 [1] : vector<32x32xf32> to vector<32xf32>
    %341 = vector.shape_cast %340 : vector<32xf32> to vector<32x1xf32>
    %cst_178 = arith.constant dense<0.000000e+00> : vector<1xf32>
    %342 = vector.multi_reduction <add>, %341, %cst_178 [0] : vector<32x1xf32> to vector<1xf32>
    %343 = vector.shape_cast %342 : vector<1xf32> to vector<1x1xf32>
    %cst_179 = arith.constant 1.024000e+03 : f32
    %344 = vector.broadcast %cst_179 : f32 to vector<1x1xf32>
    %345 = arith.divf %343, %344 : vector<1x1xf32>
    %346 = vector.broadcast %345 : vector<1x1xf32> to vector<32x32xf32>
    %347 = arith.subf %339, %346 : vector<32x32xf32>
    %348 = arith.mulf %347, %347 : vector<32x32xf32>
    %cst_180 = arith.constant dense<0.000000e+00> : vector<32xf32>
    %349 = vector.multi_reduction <add>, %348, %cst_180 [1] : vector<32x32xf32> to vector<32xf32>
    %350 = vector.shape_cast %349 : vector<32xf32> to vector<32x1xf32>
    %cst_181 = arith.constant dense<0.000000e+00> : vector<1xf32>
    %351 = vector.multi_reduction <add>, %350, %cst_181 [0] : vector<32x1xf32> to vector<1xf32>
    %352 = vector.shape_cast %351 : vector<1xf32> to vector<1x1xf32>
    %cst_182 = arith.constant 1.024000e+03 : f32
    %353 = vector.broadcast %cst_182 : f32 to vector<1x1xf32>
    %354 = arith.divf %352, %353 : vector<1x1xf32>
    %cst_183 = arith.constant 9.99999974E-6 : f32
    %355 = vector.broadcast %cst_183 : f32 to vector<1x1xf32>
    %356 = arith.addf %354, %355 : vector<1x1xf32>
    %357 = math.rsqrt %356 : vector<1x1xf32>
    %358 = vector.broadcast %357 : vector<1x1xf32> to vector<32x32xf32>
    %359 = arith.mulf %347, %358 : vector<32x32xf32>
    %c0_184 = arith.constant 0 : index
    %c0_185 = arith.constant 0 : index
    %360 = vector.load %arg31[%c0_184, %c0_185] : memref<32x32xf32, #tpu.memory_space<vmem>>, vector<32x32xf32>
    %361 = arith.mulf %359, %360 : vector<32x32xf32>
    %c0_186 = arith.constant 0 : index
    %c0_187 = arith.constant 0 : index
    %362 = vector.load %arg32[%c0_186, %c0_187] : memref<32x32xf32, #tpu.memory_space<vmem>>, vector<32x32xf32>
    %363 = arith.addf %361, %362 : vector<32x32xf32>
    %cst_188 = arith.constant 0.000000e+00 : f32
    %364 = vector.broadcast %cst_188 : f32 to vector<32x32xf32>
    %365 = arith.cmpf ogt, %363, %364 : vector<32x32xf32>
    %cst_189 = arith.constant 0.000000e+00 : f32
    %366 = vector.broadcast %cst_189 : f32 to vector<32x32xf32>
    %367 = arith.minimumf %363, %366 : vector<32x32xf32>
    %368 = math.exp %367 : vector<32x32xf32>
    %cst_190 = arith.constant 1.000000e+00 : f32
    %369 = vector.broadcast %cst_190 : f32 to vector<32x32xf32>
    %370 = arith.subf %368, %369 : vector<32x32xf32>
    %371 = arith.select %365, %363, %370 : vector<32x32xi1>, vector<32x32xf32>
    %c1_i32_191 = arith.constant 1 : i32
    %372 = tpu.dynamic_rotate %2 by %c1_i32_191 dim 0 : vector<32x16xf32>, i32 -> vector<32x16xf32>
    %373 = tpu.iota {dimensions = array<i32: 0>} : vector<32x16xi32>
    %c1_i32_192 = arith.constant 1 : i32
    %374 = vector.broadcast %c1_i32_192 : i32 to vector<32x16xi32>
    %375 = arith.cmpi sge, %373, %374 : vector<32x16xi32>
    %cst_193 = arith.constant 0.000000e+00 : f32
    %376 = vector.broadcast %cst_193 : f32 to vector<32x16xf32>
    %377 = arith.select %375, %372, %376 : vector<32x16xi1>, vector<32x16xf32>
    %c31_i32_194 = arith.constant 31 : i32
    %378 = tpu.dynamic_rotate %2 by %c31_i32_194 dim 0 : vector<32x16xf32>, i32 -> vector<32x16xf32>
    %379 = tpu.iota {dimensions = array<i32: 0>} : vector<32x16xi32>
    %c31_i32_195 = arith.constant 31 : i32
    %380 = vector.broadcast %c31_i32_195 : i32 to vector<32x16xi32>
    %381 = arith.cmpi slt, %379, %380 : vector<32x16xi32>
    %cst_196 = arith.constant 0.000000e+00 : f32
    %382 = vector.broadcast %cst_196 : f32 to vector<32x16xf32>
    %383 = arith.select %381, %378, %382 : vector<32x16xi1>, vector<32x16xf32>
    %384 = tpu.concatenate %377, %2, %383 in 1 : vector<32x16xf32>, vector<32x16xf32>, vector<32x16xf32> -> vector<32x48xf32>
    %385 = arith.truncf %384 : vector<32x48xf32> to vector<32x48xbf16>
    %c0_197 = arith.constant 0 : index
    %c0_198 = arith.constant 0 : index
    %386 = vector.load %arg33[%c0_197, %c0_198] : memref<48x16xbf16, #tpu.memory_space<vmem>>, vector<48x16xbf16>
    %cst_199 = arith.constant dense<0.000000e+00> : vector<32x16xf32>
    %387 = tpu.matmul %385, %386, %cst_199 {dimension_numbers = #tpu.dot_dimension_numbers<[1], [0], [0], [1], [0, 0, 1, 1], [], []>} : vector<32x48xbf16>, vector<48x16xbf16>, vector<32x16xf32> -> vector<32x16xf32>
    %c1_i32_200 = arith.constant 1 : i32
    %388 = tpu.dynamic_rotate %371 by %c1_i32_200 dim 0 : vector<32x32xf32>, i32 -> vector<32x32xf32>
    %389 = tpu.iota {dimensions = array<i32: 0>} : vector<32x32xi32>
    %c1_i32_201 = arith.constant 1 : i32
    %390 = vector.broadcast %c1_i32_201 : i32 to vector<32x32xi32>
    %391 = arith.cmpi sge, %389, %390 : vector<32x32xi32>
    %cst_202 = arith.constant 0.000000e+00 : f32
    %392 = vector.broadcast %cst_202 : f32 to vector<32x32xf32>
    %393 = arith.select %391, %388, %392 : vector<32x32xi1>, vector<32x32xf32>
    %c31_i32_203 = arith.constant 31 : i32
    %394 = tpu.dynamic_rotate %371 by %c31_i32_203 dim 0 : vector<32x32xf32>, i32 -> vector<32x32xf32>
    %395 = tpu.iota {dimensions = array<i32: 0>} : vector<32x32xi32>
    %c31_i32_204 = arith.constant 31 : i32
    %396 = vector.broadcast %c31_i32_204 : i32 to vector<32x32xi32>
    %397 = arith.cmpi slt, %395, %396 : vector<32x32xi32>
    %cst_205 = arith.constant 0.000000e+00 : f32
    %398 = vector.broadcast %cst_205 : f32 to vector<32x32xf32>
    %399 = arith.select %397, %394, %398 : vector<32x32xi1>, vector<32x32xf32>
    %400 = tpu.concatenate %393, %371, %399 in 1 : vector<32x32xf32>, vector<32x32xf32>, vector<32x32xf32> -> vector<32x96xf32>
    %401 = arith.truncf %400 : vector<32x96xf32> to vector<32x96xbf16>
    %c0_206 = arith.constant 0 : index
    %c0_207 = arith.constant 0 : index
    %402 = vector.load %arg34[%c0_206, %c0_207] : memref<96x16xbf16, #tpu.memory_space<vmem>>, vector<96x16xbf16>
    %cst_208 = arith.constant dense<0.000000e+00> : vector<32x16xf32>
    %403 = tpu.matmul %401, %402, %cst_208 {dimension_numbers = #tpu.dot_dimension_numbers<[1], [0], [0], [1], [0, 0, 1, 1], [], []>} : vector<32x96xbf16>, vector<96x16xbf16>, vector<32x16xf32> -> vector<32x16xf32>
    %404 = arith.addf %387, %403 : vector<32x16xf32>
    %c0_209 = arith.constant 0 : index
    %c0_210 = arith.constant 0 : index
    %405 = vector.load %arg35[%c0_209, %c0_210] : memref<1x16xf32, #tpu.memory_space<vmem>>, vector<1x16xf32>
    %406 = vector.broadcast %405 : vector<1x16xf32> to vector<32x16xf32>
    %407 = arith.addf %404, %406 : vector<32x16xf32>
    %cst_211 = arith.constant dense<0.000000e+00> : vector<32xf32>
    %408 = vector.multi_reduction <add>, %407, %cst_211 [1] : vector<32x16xf32> to vector<32xf32>
    %409 = vector.shape_cast %408 : vector<32xf32> to vector<32x1xf32>
    %cst_212 = arith.constant dense<0.000000e+00> : vector<1xf32>
    %410 = vector.multi_reduction <add>, %409, %cst_212 [0] : vector<32x1xf32> to vector<1xf32>
    %411 = vector.shape_cast %410 : vector<1xf32> to vector<1x1xf32>
    %cst_213 = arith.constant 5.120000e+02 : f32
    %412 = vector.broadcast %cst_213 : f32 to vector<1x1xf32>
    %413 = arith.divf %411, %412 : vector<1x1xf32>
    %414 = vector.broadcast %413 : vector<1x1xf32> to vector<32x16xf32>
    %415 = arith.subf %407, %414 : vector<32x16xf32>
    %416 = arith.mulf %415, %415 : vector<32x16xf32>
    %cst_214 = arith.constant dense<0.000000e+00> : vector<32xf32>
    %417 = vector.multi_reduction <add>, %416, %cst_214 [1] : vector<32x16xf32> to vector<32xf32>
    %418 = vector.shape_cast %417 : vector<32xf32> to vector<32x1xf32>
    %cst_215 = arith.constant dense<0.000000e+00> : vector<1xf32>
    %419 = vector.multi_reduction <add>, %418, %cst_215 [0] : vector<32x1xf32> to vector<1xf32>
    %420 = vector.shape_cast %419 : vector<1xf32> to vector<1x1xf32>
    %cst_216 = arith.constant 5.120000e+02 : f32
    %421 = vector.broadcast %cst_216 : f32 to vector<1x1xf32>
    %422 = arith.divf %420, %421 : vector<1x1xf32>
    %cst_217 = arith.constant 9.99999974E-6 : f32
    %423 = vector.broadcast %cst_217 : f32 to vector<1x1xf32>
    %424 = arith.addf %422, %423 : vector<1x1xf32>
    %425 = math.rsqrt %424 : vector<1x1xf32>
    %426 = vector.broadcast %425 : vector<1x1xf32> to vector<32x16xf32>
    %427 = arith.mulf %415, %426 : vector<32x16xf32>
    %c0_218 = arith.constant 0 : index
    %c0_219 = arith.constant 0 : index
    %428 = vector.load %arg36[%c0_218, %c0_219] : memref<32x16xf32, #tpu.memory_space<vmem>>, vector<32x16xf32>
    %429 = arith.mulf %427, %428 : vector<32x16xf32>
    %c0_220 = arith.constant 0 : index
    %c0_221 = arith.constant 0 : index
    %430 = vector.load %arg37[%c0_220, %c0_221] : memref<32x16xf32, #tpu.memory_space<vmem>>, vector<32x16xf32>
    %431 = arith.addf %429, %430 : vector<32x16xf32>
    %cst_222 = arith.constant 0.000000e+00 : f32
    %432 = vector.broadcast %cst_222 : f32 to vector<32x16xf32>
    %433 = arith.cmpf ogt, %431, %432 : vector<32x16xf32>
    %cst_223 = arith.constant 0.000000e+00 : f32
    %434 = vector.broadcast %cst_223 : f32 to vector<32x16xf32>
    %435 = arith.minimumf %431, %434 : vector<32x16xf32>
    %436 = math.exp %435 : vector<32x16xf32>
    %cst_224 = arith.constant 1.000000e+00 : f32
    %437 = vector.broadcast %cst_224 : f32 to vector<32x16xf32>
    %438 = arith.subf %436, %437 : vector<32x16xf32>
    %439 = arith.select %433, %431, %438 : vector<32x16xi1>, vector<32x16xf32>
    %440 = tpu.transpose %439, [1, 0] : vector<32x16xf32> -> vector<16x32xf32>
    %c0_225 = arith.constant 0 : index
    %c0_226 = arith.constant 0 : index
    %c0_227 = arith.constant 0 : index
    %441 = vector.load %arg44[%c0_225, %c0_226, %c0_227] : memref<1x16x32xf32, #tpu.memory_space<vmem>>, vector<1x16x32xf32>
    %442 = vector.shape_cast %441 : vector<1x16x32xf32> to vector<16x32xf32>
    %443 = vector.shape_cast %440 : vector<16x32xf32> to vector<1x16x32xf32>
    tpu.vector_store %arg44[%c0_225, %c0_226, %c0_227], %443 {strides = array<i32>} : memref<1x16x32xf32, #tpu.memory_space<vmem>>, vector<1x16x32xf32>,
    return
  }
  func.func @transform_0(%arg0: i32) -> (i32, i32, i32) {
    %c0_i32 = arith.constant 0 : i32
    %c0_i32_0 = arith.constant 0 : i32
    %c0_i32_1 = arith.constant 0 : i32
    return %arg0, %c0_i32, %c0_i32_0 : i32, i32, i32
  }
  func.func @transform_1(%arg0: i32) -> (i32, i32) {
    %c0_i32 = arith.constant 0 : i32
    %c0_i32_0 = arith.constant 0 : i32
    %c0_i32_1 = arith.constant 0 : i32
    return %c0_i32, %c0_i32_0 : i32, i32
  }
  func.func @transform_2(%arg0: i32) -> (i32, i32) {
    %c0_i32 = arith.constant 0 : i32
    %c0_i32_0 = arith.constant 0 : i32
    %c0_i32_1 = arith.constant 0 : i32
    return %c0_i32, %c0_i32_0 : i32, i32
  }
  func.func @transform_3(%arg0: i32) -> (i32, i32) {
    %c0_i32 = arith.constant 0 : i32
    %c0_i32_0 = arith.constant 0 : i32
    %c0_i32_1 = arith.constant 0 : i32
    return %c0_i32, %c0_i32_0 : i32, i32
  }
  func.func @transform_4(%arg0: i32) -> (i32, i32) {
    %c0_i32 = arith.constant 0 : i32
    %c0_i32_0 = arith.constant 0 : i32
    %c0_i32_1 = arith.constant 0 : i32
    return %c0_i32, %c0_i32_0 : i32, i32
  }
  func.func @transform_5(%arg0: i32) -> (i32, i32) {
    %c0_i32 = arith.constant 0 : i32
    %c0_i32_0 = arith.constant 0 : i32
    %c0_i32_1 = arith.constant 0 : i32
    return %c0_i32, %c0_i32_0 : i32, i32
  }
  func.func @transform_6(%arg0: i32) -> (i32, i32) {
    %c0_i32 = arith.constant 0 : i32
    %c0_i32_0 = arith.constant 0 : i32
    %c0_i32_1 = arith.constant 0 : i32
    return %c0_i32, %c0_i32_0 : i32, i32
  }
  func.func @transform_7(%arg0: i32) -> (i32, i32) {
    %c0_i32 = arith.constant 0 : i32
    %c0_i32_0 = arith.constant 0 : i32
    %c0_i32_1 = arith.constant 0 : i32
    return %c0_i32, %c0_i32_0 : i32, i32
  }
  func.func @transform_8(%arg0: i32) -> (i32, i32) {
    %c0_i32 = arith.constant 0 : i32
    %c0_i32_0 = arith.constant 0 : i32
    %c0_i32_1 = arith.constant 0 : i32
    return %c0_i32, %c0_i32_0 : i32, i32
  }
  func.func @transform_9(%arg0: i32) -> (i32, i32) {
    %c0_i32 = arith.constant 0 : i32
    %c0_i32_0 = arith.constant 0 : i32
    %c0_i32_1 = arith.constant 0 : i32
    return %c0_i32, %c0_i32_0 : i32, i32
  }
  func.func @transform_10(%arg0: i32) -> (i32, i32) {
    %c0_i32 = arith.constant 0 : i32
    %c0_i32_0 = arith.constant 0 : i32
    %c0_i32_1 = arith.constant 0 : i32
    return %c0_i32, %c0_i32_0 : i32, i32
  }
  func.func @transform_11(%arg0: i32) -> (i32, i32) {
    %c0_i32 = arith.constant 0 : i32
    %c0_i32_0 = arith.constant 0 : i32
    %c0_i32_1 = arith.constant 0 : i32
    return %c0_i32, %c0_i32_0 : i32, i32
  }
  func.func @transform_12(%arg0: i32) -> (i32, i32) {
    %c0_i32 = arith.constant 0 : i32
    %c0_i32_0 = arith.constant 0 : i32
    %c0_i32_1 = arith.constant 0 : i32
    return %c0_i32, %c0_i32_0 : i32, i32
  }
  func.func @transform_13(%arg0: i32) -> (i32, i32) {
    %c0_i32 = arith.constant 0 : i32
    %c0_i32_0 = arith.constant 0 : i32
    %c0_i32_1 = arith.constant 0 : i32
    return %c0_i32, %c0_i32_0 : i32, i32
  }
  func.func @transform_14(%arg0: i32) -> (i32, i32) {
    %c0_i32 = arith.constant 0 : i32
    %c0_i32_0 = arith.constant 0 : i32
    %c0_i32_1 = arith.constant 0 : i32
    return %c0_i32, %c0_i32_0 : i32, i32
  }
  func.func @transform_15(%arg0: i32) -> (i32, i32) {
    %c0_i32 = arith.constant 0 : i32
    %c0_i32_0 = arith.constant 0 : i32
    %c0_i32_1 = arith.constant 0 : i32
    return %c0_i32, %c0_i32_0 : i32, i32
  }
  func.func @transform_16(%arg0: i32) -> (i32, i32) {
    %c0_i32 = arith.constant 0 : i32
    %c0_i32_0 = arith.constant 0 : i32
    %c0_i32_1 = arith.constant 0 : i32
    return %c0_i32, %c0_i32_0 : i32, i32
  }
  func.func @transform_17(%arg0: i32) -> (i32, i32) {
    %c0_i32 = arith.constant 0 : i32
    %c0_i32_0 = arith.constant 0 : i32
    %c0_i32_1 = arith.constant 0 : i32
    return %c0_i32, %c0_i32_0 : i32, i32
  }
  func.func @transform_18(%arg0: i32) -> (i32, i32) {
    %c0_i32 = arith.constant 0 : i32
    %c0_i32_0 = arith.constant 0 : i32
    %c0_i32_1 = arith.constant 0 : i32
    return %c0_i32, %c0_i32_0 : i32, i32
  }
  func.func @transform_19(%arg0: i32) -> (i32, i32) {
    %c0_i32 = arith.constant 0 : i32
    %c0_i32_0 = arith.constant 0 : i32
    %c0_i32_1 = arith.constant 0 : i32
    return %c0_i32, %c0_i32_0 : i32, i32
  }
  func.func @transform_20(%arg0: i32) -> (i32, i32) {
    %c0_i32 = arith.constant 0 : i32
    %c0_i32_0 = arith.constant 0 : i32
    %c0_i32_1 = arith.constant 0 : i32
    return %c0_i32, %c0_i32_0 : i32, i32
  }
  func.func @transform_21(%arg0: i32) -> (i32, i32) {
    %c0_i32 = arith.constant 0 : i32
    %c0_i32_0 = arith.constant 0 : i32
    %c0_i32_1 = arith.constant 0 : i32
    return %c0_i32, %c0_i32_0 : i32, i32
  }
  func.func @transform_22(%arg0: i32) -> (i32, i32) {
    %c0_i32 = arith.constant 0 : i32
    %c0_i32_0 = arith.constant 0 : i32
    %c0_i32_1 = arith.constant 0 : i32
    return %c0_i32, %c0_i32_0 : i32, i32
  }
  func.func @transform_23(%arg0: i32) -> (i32, i32) {
    %c0_i32 = arith.constant 0 : i32
    %c0_i32_0 = arith.constant 0 : i32
    %c0_i32_1 = arith.constant 0 : i32
    return %c0_i32, %c0_i32_0 : i32, i32
  }
  func.func @transform_24(%arg0: i32) -> (i32, i32) {
    %c0_i32 = arith.constant 0 : i32
    %c0_i32_0 = arith.constant 0 : i32
    %c0_i32_1 = arith.constant 0 : i32
    return %c0_i32, %c0_i32_0 : i32, i32
  }
  func.func @transform_25(%arg0: i32) -> (i32, i32) {
    %c0_i32 = arith.constant 0 : i32
    %c0_i32_0 = arith.constant 0 : i32
    %c0_i32_1 = arith.constant 0 : i32
    return %c0_i32, %c0_i32_0 : i32, i32
  }
  func.func @transform_26(%arg0: i32) -> (i32, i32) {
    %c0_i32 = arith.constant 0 : i32
    %c0_i32_0 = arith.constant 0 : i32
    %c0_i32_1 = arith.constant 0 : i32
    return %c0_i32, %c0_i32_0 : i32, i32
  }
  func.func @transform_27(%arg0: i32) -> (i32, i32) {
    %c0_i32 = arith.constant 0 : i32
    %c0_i32_0 = arith.constant 0 : i32
    %c0_i32_1 = arith.constant 0 : i32
    return %c0_i32, %c0_i32_0 : i32, i32
  }
  func.func @transform_28(%arg0: i32) -> (i32, i32) {
    %c0_i32 = arith.constant 0 : i32
    %c0_i32_0 = arith.constant 0 : i32
    %c0_i32_1 = arith.constant 0 : i32
    return %c0_i32, %c0_i32_0 : i32, i32
  }
  func.func @transform_29(%arg0: i32) -> (i32, i32) {
    %c0_i32 = arith.constant 0 : i32
    %c0_i32_0 = arith.constant 0 : i32
    %c0_i32_1 = arith.constant 0 : i32
    return %c0_i32, %c0_i32_0 : i32, i32
  }
  func.func @transform_30(%arg0: i32) -> (i32, i32) {
    %c0_i32 = arith.constant 0 : i32
    %c0_i32_0 = arith.constant 0 : i32
    %c0_i32_1 = arith.constant 0 : i32
    return %c0_i32, %c0_i32_0 : i32, i32
  }
  func.func @transform_31(%arg0: i32) -> (i32, i32) {
    %c0_i32 = arith.constant 0 : i32
    %c0_i32_0 = arith.constant 0 : i32
    %c0_i32_1 = arith.constant 0 : i32
    return %c0_i32, %c0_i32_0 : i32, i32
  }
  func.func @transform_32(%arg0: i32) -> (i32, i32) {
    %c0_i32 = arith.constant 0 : i32
    %c0_i32_0 = arith.constant 0 : i32
    %c0_i32_1 = arith.constant 0 : i32
    return %c0_i32, %c0_i32_0 : i32, i32
  }
  func.func @transform_33(%arg0: i32) -> (i32, i32) {
    %c0_i32 = arith.constant 0 : i32
    %c0_i32_0 = arith.constant 0 : i32
    %c0_i32_1 = arith.constant 0 : i32
    return %c0_i32, %c0_i32_0 : i32, i32
  }
  func.func @transform_34(%arg0: i32) -> (i32, i32) {
    %c0_i32 = arith.constant 0 : i32
    %c0_i32_0 = arith.constant 0 : i32
    %c0_i32_1 = arith.constant 0 : i32
    return %c0_i32, %c0_i32_0 : i32, i32
  }
  func.func @transform_35(%arg0: i32) -> (i32, i32) {
    %c0_i32 = arith.constant 0 : i32
    %c0_i32_0 = arith.constant 0 : i32
    %c0_i32_1 = arith.constant 0 : i32
    return %c0_i32, %c0_i32_0 : i32, i32
  }
  func.func @transform_36(%arg0: i32) -> (i32, i32) {
    %c0_i32 = arith.constant 0 : i32
    %c0_i32_0 = arith.constant 0 : i32
    %c0_i32_1 = arith.constant 0 : i32
    return %c0_i32, %c0_i32_0 : i32, i32
  }
  func.func @transform_37(%arg0: i32) -> (i32, i32) {
    %c0_i32 = arith.constant 0 : i32
    %c0_i32_0 = arith.constant 0 : i32
    %c0_i32_1 = arith.constant 0 : i32
    return %c0_i32, %c0_i32_0 : i32, i32
  }
  func.func @transform_38(%arg0: i32) -> (i32, i32) {
    %c0_i32 = arith.constant 0 : i32
    %c0_i32_0 = arith.constant 0 : i32
    %c0_i32_1 = arith.constant 0 : i32
    return %c0_i32, %c0_i32_0 : i32, i32
  }
  func.func @transform_39(%arg0: i32) -> (i32, i32) {
    %c0_i32 = arith.constant 0 : i32
    %c0_i32_0 = arith.constant 0 : i32
    %c0_i32_1 = arith.constant 0 : i32
    return %c0_i32, %c0_i32_0 : i32, i32
  }
  func.func @transform_40(%arg0: i32) -> (i32, i32) {
    %c0_i32 = arith.constant 0 : i32
    %c0_i32_0 = arith.constant 0 : i32
    %c0_i32_1 = arith.constant 0 : i32
    return %c0_i32, %c0_i32_0 : i32, i32
  }
  func.func @transform_41(%arg0: i32) -> (i32, i32) {
    %c0_i32 = arith.constant 0 : i32
    %c0_i32_0 = arith.constant 0 : i32
    %c0_i32_1 = arith.constant 0 : i32
    return %c0_i32, %c0_i32_0 : i32, i32
  }
  func.func @transform_42(%arg0: i32) -> (i32, i32) {
    %c0_i32 = arith.constant 0 : i32
    %c0_i32_0 = arith.constant 0 : i32
    %c0_i32_1 = arith.constant 0 : i32
    return %c0_i32, %c0_i32_0 : i32, i32
  }
  func.func @transform_43(%arg0: i32) -> (i32, i32, i32) {
    %c0_i32 = arith.constant 0 : i32
    %c0_i32_0 = arith.constant 0 : i32
    %c0_i32_1 = arith.constant 0 : i32
    return %arg0, %c0_i32, %c0_i32_0 : i32, i32, i32
  }
}

</mosaic_0001>

<llo_original>
// kernel: tpu_custom_call.1
$region0: #{tpu_custom_call.1}
  #allocation0 [shape = 'u32[]', space=smem, size = 0x4, offset = 0x4, fixed_abs, tag = 'smem constant byte address 0x4 - core index']
  #allocation1 [shape = 'u32[72,128]{1,0:T(1,128)}', space=vmem, size = 0x9000, scoped, tag = 'internal scratch']
  %s0 = inlined_call_operand.smem [shape: u32[44], index: -1, kind: input, shape index: {}]
  %s1 = sld [smem:[%s0]]
  %s2 = scalar_lea.smem %s0, 1
  %s3 = sld [smem:[%s2]]
  %s4 = scalar_lea.smem %s0, 2
  %s5 = sld [smem:[%s4]]
  %s6 = scalar_lea.smem %s0, 3
  %s7 = sld [smem:[%s6]]
  %s8 = scalar_lea.smem %s0, 4
  %s9 = sld [smem:[%s8]]
  %s10 = scalar_lea.smem %s0, 5
  %s11 = sld [smem:[%s10]]
  %s12 = scalar_lea.smem %s0, 6
  %s13 = sld [smem:[%s12]]
  %s14 = scalar_lea.smem %s0, 7
  %s15 = sld [smem:[%s14]]
  %s16 = scalar_lea.smem %s0, 8
  %s17 = sld [smem:[%s16]]
  %s18 = scalar_lea.smem %s0, 9
  %s19 = sld [smem:[%s18]]
  %s20 = scalar_lea.smem %s0, 10
  %s21 = sld [smem:[%s20]]
  %s22 = scalar_lea.smem %s0, 11
  %s23 = sld [smem:[%s22]]
  %s24 = scalar_lea.smem %s0, 12
  %s25 = sld [smem:[%s24]]
  %s26 = scalar_lea.smem %s0, 13
  %s27 = sld [smem:[%s26]]
  %s28 = scalar_lea.smem %s0, 14
  %s29 = sld [smem:[%s28]]
  %s30 = scalar_lea.smem %s0, 15
  %s31 = sld [smem:[%s30]]
  %s32 = scalar_lea.smem %s0, 16
  %s33 = sld [smem:[%s32]]
  %s34 = scalar_lea.smem %s0, 17
  %s35 = sld [smem:[%s34]]
  %s36 = scalar_lea.smem %s0, 18
  %s37 = sld [smem:[%s36]]
  %s38 = scalar_lea.smem %s0, 19
  %s39 = sld [smem:[%s38]]
  %s40 = scalar_lea.smem %s0, 20
  %s41 = sld [smem:[%s40]]
  %s42 = scalar_lea.smem %s0, 21
  %s43 = sld [smem:[%s42]]
  %s44 = scalar_lea.smem %s0, 22
  %s45 = sld [smem:[%s44]]
  %s46 = scalar_lea.smem %s0, 23
  %s47 = sld [smem:[%s46]]
  %s48 = scalar_lea.smem %s0, 24
  %s49 = sld [smem:[%s48]]
  %s50 = scalar_lea.smem %s0, 25
  %s51 = sld [smem:[%s50]]
  %s52 = scalar_lea.smem %s0, 26
  %s53 = sld [smem:[%s52]]
  %s54 = scalar_lea.smem %s0, 27
  %s55 = sld [smem:[%s54]]
  %s56 = scalar_lea.smem %s0, 28
  %s57 = sld [smem:[%s56]]
  %s58 = scalar_lea.smem %s0, 29
  %s59 = sld [smem:[%s58]]
  %s60 = scalar_lea.smem %s0, 30
  %s61 = sld [smem:[%s60]]
  %s62 = scalar_lea.smem %s0, 31
  %s63 = sld [smem:[%s62]]
  %s64 = scalar_lea.smem %s0, 32
  %s65 = sld [smem:[%s64]]
  %s66 = scalar_lea.smem %s0, 33
  %s67 = sld [smem:[%s66]]
  %s68 = scalar_lea.smem %s0, 34
  %s69 = sld [smem:[%s68]]
  %s70 = scalar_lea.smem %s0, 35
  %s71 = sld [smem:[%s70]]
  %s72 = scalar_lea.smem %s0, 36
  %s73 = sld [smem:[%s72]]
  %s74 = scalar_lea.smem %s0, 37
  %s75 = sld [smem:[%s74]]
  %s76 = scalar_lea.smem %s0, 38
  %s77 = sld [smem:[%s76]]
  %s78 = scalar_lea.smem %s0, 39
  %s79 = sld [smem:[%s78]]
  %s80 = scalar_lea.smem %s0, 40
  %s81 = sld [smem:[%s80]]
  %s82 = scalar_lea.smem %s0, 41
  %s83 = sld [smem:[%s82]]
  %s84 = scalar_lea.smem %s0, 42
  %s85 = sld [smem:[%s84]]
  %s86 = scalar_lea.smem %s0, 43
  %s87 = sld [smem:[%s86]]
  %s88 = sld [smem:[#allocation0]]
  $region257: #{tpu_custom_call.1} parent=0
    _
  %s90 = ssub.s32 1, %s88
  %s91 = scalar_select 0, %s90, %s88
  $region1: #{tpu_custom_call.1} parent=0
    #allocation2 [shape = 'u8[512]{0}', space=vmem, size = 0x400, scoped, tag = 'input window, operand 2, single buffered']
    #allocation3 [shape = 's32[2]{0}', space=sflag, size = 0x8, scoped, tag = 'scoped memory for tpu_custom_call.1']
    #allocation4 [shape = 's32[2]{0}', space=sflag, size = 0x8, scoped, tag = 'scoped memory for tpu_custom_call.1']
    #allocation5 [shape = 'u8[512]{0}', space=vmem, size = 0x400, scoped, tag = 'input window, operand 6, single buffered']
    #allocation6 [shape = 's32[1]{0}', space=sflag, size = 0x4, scoped, tag = 'scoped memory for tpu_custom_call.1']
    #allocation7 [shape = 'u8[512]{0}', space=vmem, size = 0x400, scoped, tag = 'input window, operand 10, single buffered']
    #allocation8 [shape = 'u8[4096]{0}', space=vmem, size = 0x1000, scoped, tag = 'input window, operand 11, single buffered']
    #allocation9 [shape = 's32[1]{0}', space=sflag, size = 0x4, scoped, tag = 'scoped memory for tpu_custom_call.1']
    #allocation10 [shape = 'u8[4096]{0}', space=vmem, size = 0x1000, scoped, tag = 'input window, operand 12, single buffered']
    #allocation11 [shape = 'u8[512]{0}', space=vmem, size = 0x400, scoped, tag = 'input window, operand 15, single buffered']
    #allocation12 [shape = 's32[1]{0}', space=sflag, size = 0x4, scoped, tag = 'scoped memory for tpu_custom_call.1']
    #allocation13 [shape = 'u8[4096]{0}', space=vmem, size = 0x1000, scoped, tag = 'input window, operand 16, single buffered']
    #allocation14 [shape = 'u8[4096]{0}', space=vmem, size = 0x1000, scoped, tag = 'input window, operand 17, single buffered']
    #allocation15 [shape = 's32[1]{0}', space=sflag, size = 0x4, scoped, tag = 'scoped memory for tpu_custom_call.1']
    #allocation16 [shape = 'u8[512]{0}', space=vmem, size = 0x400, scoped, tag = 'input window, operand 29, single buffered']
    #allocation17 [shape = 'u8[512]{0}', space=vmem, size = 0x400, scoped, tag = 'input window, operand 34, single buffered']
    #allocation18 [shape = 's32[1]{0}', space=sflag, size = 0x4, scoped, tag = 'scoped memory for tpu_custom_call.1']
    #allocation19 [shape = 'u8[2048]{0}', space=vmem, size = 0x800, scoped, tag = 'input window, operand 40, single buffered']
    #allocation20 [shape = 'u8[4096]{0}', space=vmem, size = 0x1000, scoped, tag = 'input window, operand 41, single buffered']
    #allocation21 [shape = 's32[1]{0}', space=sflag, size = 0x4, scoped, tag = 'scoped memory for tpu_custom_call.1']
    #allocation22 [shape = 'u8[8192]{0}', space=vmem, size = 0x2000, scoped, tag = 'input window, operand 42, single buffered']
    #allocation23 [shape = 'u8[16384]{0}', space=vmem, size = 0x4000, scoped, tag = 'output window, operand 0']
    %92 = vsyncpa [#allocation3], 0
    %93 = vsyncpa [#allocation6], 0
    %94 = vsyncpa [#allocation9], 0
    %95 = vsyncpa [#allocation12], 0
    %96 = vsyncpa [#allocation15], 0
    %97 = vsyncpa [#allocation18], 0
    %98 = vsyncpa [#allocation21], 0
    %99 = vsyncpa [#allocation4], 0
    %s100 = scalar_lea.sflag [#allocation4], 1
    %101 = vsyncpa %s100, 0
    loop: start=0, step=1, limit=4
    $region2: #{tpu_custom_call.1} parent=1 // loop_pre_header
      _
    $region3: #{tpu_custom_call.1} parent=1 // loop_header
      %s103 = sphi 0, %s107
      %p104 = scmp.ge.s32.totalorder %s103, 4
      %s113 = sphi 0, %s115
      %s116 = sphi 0, %s113
      %s117 = sphi 0, %s116
      %s133 = sphi 0, %s117
      %s137 = sphi 0, %s137
      %s139 = sphi 0, %s137
      %s140 = sphi 0, %s139
      %s154 = sphi 0, %s140
      %s158 = sphi 0, %s158
      %s160 = sphi 0, %s158
      %s161 = sphi 0, %s160
      %s175 = sphi 0, %s161
      %s179 = sphi 0, %s179
      %s181 = sphi 0, %s179
      %s182 = sphi 0, %s181
      %s196 = sphi 0, %s182
      %s200 = sphi 0, %s200
      %s202 = sphi 0, %s200
      %s203 = sphi 0, %s202
      %s217 = sphi 0, %s203
      %s221 = sphi 0, %s221
      %s223 = sphi 0, %s221
      %s224 = sphi 0, %s223
      %s238 = sphi 0, %s224
      %s242 = sphi 0, %s242
      %s244 = sphi 0, %s242
      %s245 = sphi 0, %s244
      %s259 = sphi 0, %s245
      %s263 = sphi 0, %s263
      %s265 = sphi 0, %s263
      %s266 = sphi 0, %s265
      %s280 = sphi 0, %s266
      %s284 = sphi 0, %s284
      %s286 = sphi 0, %s284
      %s287 = sphi 0, %s286
      %s301 = sphi 0, %s287
      %s305 = sphi 0, %s305
      %s307 = sphi 0, %s305
      %s308 = sphi 0, %s307
      %s322 = sphi 0, %s308
      %s326 = sphi 0, %s326
      %s328 = sphi 0, %s326
      %s329 = sphi 0, %s328
      %s343 = sphi 0, %s329
      %s347 = sphi 0, %s347
      %s349 = sphi 0, %s347
      %s350 = sphi 0, %s349
      %s364 = sphi 0, %s350
      %s368 = sphi 0, %s368
      %s370 = sphi 0, %s368
      %s371 = sphi 0, %s370
      %s385 = sphi 0, %s371
      %s389 = sphi 0, %s389
      %s391 = sphi 0, %s389
      %s392 = sphi 0, %s391
      %s406 = sphi 0, %s392
      %s410 = sphi 0, %s410
      %s412 = sphi 0, %s410
      %s413 = sphi 0, %s412
      %s427 = sphi 0, %s413
      %s431 = sphi 0, %s431
      %s433 = sphi 0, %s431
      %s434 = sphi 0, %s433
      %s448 = sphi 0, %s434
      %s452 = sphi 0, %s452
      %s454 = sphi 0, %s452
      %s455 = sphi 0, %s454
      %s469 = sphi 0, %s455
      %s473 = sphi 0, %s473
      %s475 = sphi 0, %s473
      %s476 = sphi 0, %s475
      %s490 = sphi 0, %s476
      %s494 = sphi 0, %s494
      %s496 = sphi 0, %s494
      %s497 = sphi 0, %s496
      %s511 = sphi 0, %s497
      %s515 = sphi 0, %s515
      %s517 = sphi 0, %s515
      %s518 = sphi 0, %s517
      %s532 = sphi 0, %s518
      %s536 = sphi 0, %s536
      %s538 = sphi 0, %s536
      %s539 = sphi 0, %s538
      %s553 = sphi 0, %s539
      %s557 = sphi 0, %s557
      %s559 = sphi 0, %s557
      %s560 = sphi 0, %s559
      %s574 = sphi 0, %s560
      %s578 = sphi 0, %s578
      %s580 = sphi 0, %s578
      %s581 = sphi 0, %s580
      %s595 = sphi 0, %s581
      %s599 = sphi 0, %s599
      %s601 = sphi 0, %s599
      %s602 = sphi 0, %s601
      %s616 = sphi 0, %s602
      %s620 = sphi 0, %s620
      %s622 = sphi 0, %s620
      %s623 = sphi 0, %s622
      %s637 = sphi 0, %s623
      %s641 = sphi 0, %s641
      %s643 = sphi 0, %s641
      %s644 = sphi 0, %s643
      %s658 = sphi 0, %s644
      %s662 = sphi 0, %s662
      %s664 = sphi 0, %s662
      %s665 = sphi 0, %s664
      %s679 = sphi 0, %s665
      %s683 = sphi 0, %s683
      %s685 = sphi 0, %s683
      %s686 = sphi 0, %s685
      %s700 = sphi 0, %s686
      %s704 = sphi 0, %s704
      %s706 = sphi 0, %s704
      %s707 = sphi 0, %s706
      %s721 = sphi 0, %s707
      %s725 = sphi 0, %s725
      %s727 = sphi 0, %s725
      %s728 = sphi 0, %s727
      %s742 = sphi 0, %s728
      %s746 = sphi 0, %s746
      %s748 = sphi 0, %s746
      %s749 = sphi 0, %s748
      %s763 = sphi 0, %s749
      %s767 = sphi 0, %s767
      %s769 = sphi 0, %s767
      %s770 = sphi 0, %s769
      %s784 = sphi 0, %s770
      %s788 = sphi 0, %s788
      %s790 = sphi 0, %s788
      %s791 = sphi 0, %s790
      %s805 = sphi 0, %s791
      %s809 = sphi 0, %s809
      %s811 = sphi 0, %s809
      %s812 = sphi 0, %s811
      %s826 = sphi 0, %s812
      %s830 = sphi 0, %s830
      %s832 = sphi 0, %s830
      %s833 = sphi 0, %s832
      %s847 = sphi 0, %s833
      %s851 = sphi 0, %s851
      %s853 = sphi 0, %s851
      %s854 = sphi 0, %s853
      %s868 = sphi 0, %s854
      %s872 = sphi 0, %s872
      %s874 = sphi 0, %s872
      %s875 = sphi 0, %s874
      %s889 = sphi 0, %s875
      %s893 = sphi 0, %s893
      %s895 = sphi 0, %s893
      %s896 = sphi 0, %s895
      %s910 = sphi 0, %s896
      %s914 = sphi 0, %s914
      %s916 = sphi 0, %s914
      %s917 = sphi 0, %s916
      %s931 = sphi 0, %s917
      %s935 = sphi 0, %s935
      %s937 = sphi 0, %s935
      %s938 = sphi 0, %s937
      %s952 = sphi 0, %s938
      %s956 = sphi 0, %s956
      %s958 = sphi 0, %s956
      %s959 = sphi 0, %s958
      %s973 = sphi 0, %s959
      %s977 = sphi 0, %s977
      %s979 = sphi 0, %s977
      %s980 = sphi 0, %s979
      %s994 = sphi 0, %s980
      %s998 = sphi 0, %s998
      %s1000 = sphi 0, %s998
      %s1001 = sphi 0, %s1000
      %s1015 = sphi 0, %s1001
      %s1021 = sphi 0, %s1023
      %s1024 = sphi 0, %s1021
      %s1025 = sphi 0, %s1024
      %s1041 = sphi 0, %s1025
    $region4: #{tpu_custom_call.1} parent=1 // loop_header_branch
      %106 = sbr.rel (%p104) target = $region8
    $region5: #{tpu_custom_call.1} parent=1 // loop_body
      %s108 = ssub.s32 %s103, 1
      %s109 = ssub.s32 %s103, 2
      %s110 = sadd.s32 %s103, 1
      %s111 = ssub.s32 %s103, %s110
      %p112 = scmp.eq.s32.totalorder %s111, 0
      %s114 = sadd.s32 %s113, 1
      %s115 = scalar_select %p112, %s113, %s114
      %p118 = pneg %p112
      %p119 = scmp.eq.s32.totalorder %s103, 1
      %p120 = por %p118, %p119
      %p121 = scmp.ne.s32.totalorder %s113, %s116
      %p122 = scmp.eq.s32.totalorder %s103, 0
      %p123 = por %p121, %p122
      %p124 = scmp.ne.s32.totalorder %s113, %s116
      %p125 = scmp.eq.s32.totalorder %s108, 1
      %p126 = por %p124, %p125
      %p127 = scmp.ne.s32.totalorder %s116, %s117
      %p128 = scmp.eq.s32.totalorder %s108, 0
      %p129 = por %p127, %p128
      %p130 = scmp.ne.s32.totalorder %s116, %s117
      %p131 = scmp.eq.s32.totalorder %s109, 1
      %p132 = por %p130, %p131
      %p134 = scmp.ne.s32.totalorder %s117, %s133
      %p135 = scmp.eq.s32.totalorder %s109, 0
      %p136 = por %p134, %p135
      %s138 = sadd.s32 %s137, 1
      %p141 = scmp.eq.s32.totalorder %s103, 1
      %p142 = scmp.ne.s32.totalorder %s137, %s139
      %p143 = scmp.eq.s32.totalorder %s103, 0
      %p144 = por %p142, %p143
      %p145 = scmp.ne.s32.totalorder %s137, %s139
      %p146 = scmp.eq.s32.totalorder %s108, 1
      %p147 = por %p145, %p146
      %p148 = scmp.ne.s32.totalorder %s139, %s140
      %p149 = scmp.eq.s32.totalorder %s108, 0
      %p150 = por %p148, %p149
      %p151 = scmp.ne.s32.totalorder %s139, %s140
      %p152 = scmp.eq.s32.totalorder %s109, 1
      %p153 = por %p151, %p152
      %p155 = scmp.ne.s32.totalorder %s140, %s154
      %p156 = scmp.eq.s32.totalorder %s109, 0
      %p157 = por %p155, %p156
      %s159 = sadd.s32 %s158, 1
      %p162 = scmp.eq.s32.totalorder %s103, 1
      %p163 = scmp.ne.s32.totalorder %s158, %s160
      %p164 = scmp.eq.s32.totalorder %s103, 0
      %p165 = por %p163, %p164
      %p166 = scmp.ne.s32.totalorder %s158, %s160
      %p167 = scmp.eq.s32.totalorder %s108, 1
      %p168 = por %p166, %p167
      %p169 = scmp.ne.s32.totalorder %s160, %s161
      %p170 = scmp.eq.s32.totalorder %s108, 0
      %p171 = por %p169, %p170
      %p172 = scmp.ne.s32.totalorder %s160, %s161
      %p173 = scmp.eq.s32.totalorder %s109, 1
      %p174 = por %p172, %p173
      %p176 = scmp.ne.s32.totalorder %s161, %s175
      %p177 = scmp.eq.s32.totalorder %s109, 0
      %p178 = por %p176, %p177
      %s180 = sadd.s32 %s179, 1
      %p183 = scmp.eq.s32.totalorder %s103, 1
      %p184 = scmp.ne.s32.totalorder %s179, %s181
      %p185 = scmp.eq.s32.totalorder %s103, 0
      %p186 = por %p184, %p185
      %p187 = scmp.ne.s32.totalorder %s179, %s181
      %p188 = scmp.eq.s32.totalorder %s108, 1
      %p189 = por %p187, %p188
      %p190 = scmp.ne.s32.totalorder %s181, %s182
      %p191 = scmp.eq.s32.totalorder %s108, 0
      %p192 = por %p190, %p191
      %p193 = scmp.ne.s32.totalorder %s181, %s182
      %p194 = scmp.eq.s32.totalorder %s109, 1
      %p195 = por %p193, %p194
      %p197 = scmp.ne.s32.totalorder %s182, %s196
      %p198 = scmp.eq.s32.totalorder %s109, 0
      %p199 = por %p197, %p198
      %s201 = sadd.s32 %s200, 1
      %p204 = scmp.eq.s32.totalorder %s103, 1
      %p205 = scmp.ne.s32.totalorder %s200, %s202
      %p206 = scmp.eq.s32.totalorder %s103, 0
      %p207 = por %p205, %p206
      %p208 = scmp.ne.s32.totalorder %s200, %s202
      %p209 = scmp.eq.s32.totalorder %s108, 1
      %p210 = por %p208, %p209
      %p211 = scmp.ne.s32.totalorder %s202, %s203
      %p212 = scmp.eq.s32.totalorder %s108, 0
      %p213 = por %p211, %p212
      %p214 = scmp.ne.s32.totalorder %s202, %s203
      %p215 = scmp.eq.s32.totalorder %s109, 1
      %p216 = por %p214, %p215
      %p218 = scmp.ne.s32.totalorder %s203, %s217
      %p219 = scmp.eq.s32.totalorder %s109, 0
      %p220 = por %p218, %p219
      %s222 = sadd.s32 %s221, 1
      %p225 = scmp.eq.s32.totalorder %s103, 1
      %p226 = scmp.ne.s32.totalorder %s221, %s223
      %p227 = scmp.eq.s32.totalorder %s103, 0
      %p228 = por %p226, %p227
      %p229 = scmp.ne.s32.totalorder %s221, %s223
      %p230 = scmp.eq.s32.totalorder %s108, 1
      %p231 = por %p229, %p230
      %p232 = scmp.ne.s32.totalorder %s223, %s224
      %p233 = scmp.eq.s32.totalorder %s108, 0
      %p234 = por %p232, %p233
      %p235 = scmp.ne.s32.totalorder %s223, %s224
      %p236 = scmp.eq.s32.totalorder %s109, 1
      %p237 = por %p235, %p236
      %p239 = scmp.ne.s32.totalorder %s224, %s238
      %p240 = scmp.eq.s32.totalorder %s109, 0
      %p241 = por %p239, %p240
      %s243 = sadd.s32 %s242, 1
      %p246 = scmp.eq.s32.totalorder %s103, 1
      %p247 = scmp.ne.s32.totalorder %s242, %s244
      %p248 = scmp.eq.s32.totalorder %s103, 0
      %p249 = por %p247, %p248
      %p250 = scmp.ne.s32.totalorder %s242, %s244
      %p251 = scmp.eq.s32.totalorder %s108, 1
      %p252 = por %p250, %p251
      %p253 = scmp.ne.s32.totalorder %s244, %s245
      %p254 = scmp.eq.s32.totalorder %s108, 0
      %p255 = por %p253, %p254
      %p256 = scmp.ne.s32.totalorder %s244, %s245
      %p257 = scmp.eq.s32.totalorder %s109, 1
      %p258 = por %p256, %p257
      %p260 = scmp.ne.s32.totalorder %s245, %s259
      %p261 = scmp.eq.s32.totalorder %s109, 0
      %p262 = por %p260, %p261
      %s264 = sadd.s32 %s263, 1
      %p267 = scmp.eq.s32.totalorder %s103, 1
      %p268 = scmp.ne.s32.totalorder %s263, %s265
      %p269 = scmp.eq.s32.totalorder %s103, 0
      %p270 = por %p268, %p269
      %p271 = scmp.ne.s32.totalorder %s263, %s265
      %p272 = scmp.eq.s32.totalorder %s108, 1
      %p273 = por %p271, %p272
      %p274 = scmp.ne.s32.totalorder %s265, %s266
      %p275 = scmp.eq.s32.totalorder %s108, 0
      %p276 = por %p274, %p275
      %p277 = scmp.ne.s32.totalorder %s265, %s266
      %p278 = scmp.eq.s32.totalorder %s109, 1
      %p279 = por %p277, %p278
      %p281 = scmp.ne.s32.totalorder %s266, %s280
      %p282 = scmp.eq.s32.totalorder %s109, 0
      %p283 = por %p281, %p282
      %s285 = sadd.s32 %s284, 1
      %p288 = scmp.eq.s32.totalorder %s103, 1
      %p289 = scmp.ne.s32.totalorder %s284, %s286
      %p290 = scmp.eq.s32.totalorder %s103, 0
      %p291 = por %p289, %p290
      %p292 = scmp.ne.s32.totalorder %s284, %s286
      %p293 = scmp.eq.s32.totalorder %s108, 1
      %p294 = por %p292, %p293
      %p295 = scmp.ne.s32.totalorder %s286, %s287
      %p296 = scmp.eq.s32.totalorder %s108, 0
      %p297 = por %p295, %p296
      %p298 = scmp.ne.s32.totalorder %s286, %s287
      %p299 = scmp.eq.s32.totalorder %s109, 1
      %p300 = por %p298, %p299
      %p302 = scmp.ne.s32.totalorder %s287, %s301
      %p303 = scmp.eq.s32.totalorder %s109, 0
      %p304 = por %p302, %p303
      %s306 = sadd.s32 %s305, 1
      %p309 = scmp.eq.s32.totalorder %s103, 1
      %p310 = scmp.ne.s32.totalorder %s305, %s307
      %p311 = scmp.eq.s32.totalorder %s103, 0
      %p312 = por %p310, %p311
      %p313 = scmp.ne.s32.totalorder %s305, %s307
      %p314 = scmp.eq.s32.totalorder %s108, 1
      %p315 = por %p313, %p314
      %p316 = scmp.ne.s32.totalorder %s307, %s308
      %p317 = scmp.eq.s32.totalorder %s108, 0
      %p318 = por %p316, %p317
      %p319 = scmp.ne.s32.totalorder %s307, %s308
      %p320 = scmp.eq.s32.totalorder %s109, 1
      %p321 = por %p319, %p320
      %p323 = scmp.ne.s32.totalorder %s308, %s322
      %p324 = scmp.eq.s32.totalorder %s109, 0
      %p325 = por %p323, %p324
      %s327 = sadd.s32 %s326, 1
      %p330 = scmp.eq.s32.totalorder %s103, 1
      %p331 = scmp.ne.s32.totalorder %s326, %s328
      %p332 = scmp.eq.s32.totalorder %s103, 0
      %p333 = por %p331, %p332
      %p334 = scmp.ne.s32.totalorder %s326, %s328
      %p335 = scmp.eq.s32.totalorder %s108, 1
      %p336 = por %p334, %p335
      %p337 = scmp.ne.s32.totalorder %s328, %s329
      %p338 = scmp.eq.s32.totalorder %s108, 0
      %p339 = por %p337, %p338
      %p340 = scmp.ne.s32.totalorder %s328, %s329
      %p341 = scmp.eq.s32.totalorder %s109, 1
      %p342 = por %p340, %p341
      %p344 = scmp.ne.s32.totalorder %s329, %s343
      %p345 = scmp.eq.s32.totalorder %s109, 0
      %p346 = por %p344, %p345
      %s348 = sadd.s32 %s347, 1
      %p351 = scmp.eq.s32.totalorder %s103, 1
      %p352 = scmp.ne.s32.totalorder %s347, %s349
      %p353 = scmp.eq.s32.totalorder %s103, 0
      %p354 = por %p352, %p353
      %p355 = scmp.ne.s32.totalorder %s347, %s349
      %p356 = scmp.eq.s32.totalorder %s108, 1
      %p357 = por %p355, %p356
      %p358 = scmp.ne.s32.totalorder %s349, %s350
      %p359 = scmp.eq.s32.totalorder %s108, 0
      %p360 = por %p358, %p359
      %p361 = scmp.ne.s32.totalorder %s349, %s350
      %p362 = scmp.eq.s32.totalorder %s109, 1
      %p363 = por %p361, %p362
      %p365 = scmp.ne.s32.totalorder %s350, %s364
      %p366 = scmp.eq.s32.totalorder %s109, 0
      %p367 = por %p365, %p366
      %s369 = sadd.s32 %s368, 1
      %p372 = scmp.eq.s32.totalorder %s103, 1
      %p373 = scmp.ne.s32.totalorder %s368, %s370
      %p374 = scmp.eq.s32.totalorder %s103, 0
      %p375 = por %p373, %p374
      %p376 = scmp.ne.s32.totalorder %s368, %s370
      %p377 = scmp.eq.s32.totalorder %s108, 1
      %p378 = por %p376, %p377
      %p379 = scmp.ne.s32.totalorder %s370, %s371
      %p380 = scmp.eq.s32.totalorder %s108, 0
      %p381 = por %p379, %p380
      %p382 = scmp.ne.s32.totalorder %s370, %s371
      %p383 = scmp.eq.s32.totalorder %s109, 1
      %p384 = por %p382, %p383
      %p386 = scmp.ne.s32.totalorder %s371, %s385
      %p387 = scmp.eq.s32.totalorder %s109, 0
      %p388 = por %p386, %p387
      %s390 = sadd.s32 %s389, 1
      %p393 = scmp.eq.s32.totalorder %s103, 1
      %p394 = scmp.ne.s32.totalorder %s389, %s391
      %p395 = scmp.eq.s32.totalorder %s103, 0
      %p396 = por %p394, %p395
      %p397 = scmp.ne.s32.totalorder %s389, %s391
      %p398 = scmp.eq.s32.totalorder %s108, 1
      %p399 = por %p397, %p398
      %p400 = scmp.ne.s32.totalorder %s391, %s392
      %p401 = scmp.eq.s32.totalorder %s108, 0
      %p402 = por %p400, %p401
      %p403 = scmp.ne.s32.totalorder %s391, %s392
      %p404 = scmp.eq.s32.totalorder %s109, 1
      %p405 = por %p403, %p404
      %p407 = scmp.ne.s32.totalorder %s392, %s406
      %p408 = scmp.eq.s32.totalorder %s109, 0
      %p409 = por %p407, %p408
      %s411 = sadd.s32 %s410, 1
      %p414 = scmp.eq.s32.totalorder %s103, 1
      %p415 = scmp.ne.s32.totalorder %s410, %s412
      %p416 = scmp.eq.s32.totalorder %s103, 0
      %p417 = por %p415, %p416
      %p418 = scmp.ne.s32.totalorder %s410, %s412
      %p419 = scmp.eq.s32.totalorder %s108, 1
      %p420 = por %p418, %p419
      %p421 = scmp.ne.s32.totalorder %s412, %s413
      %p422 = scmp.eq.s32.totalorder %s108, 0
      %p423 = por %p421, %p422
      %p424 = scmp.ne.s32.totalorder %s412, %s413
      %p425 = scmp.eq.s32.totalorder %s109, 1
      %p426 = por %p424, %p425
      %p428 = scmp.ne.s32.totalorder %s413, %s427
      %p429 = scmp.eq.s32.totalorder %s109, 0
      %p430 = por %p428, %p429
      %s432 = sadd.s32 %s431, 1
      %p435 = scmp.eq.s32.totalorder %s103, 1
      %p436 = scmp.ne.s32.totalorder %s431, %s433
      %p437 = scmp.eq.s32.totalorder %s103, 0
      %p438 = por %p436, %p437
      %p439 = scmp.ne.s32.totalorder %s431, %s433
      %p440 = scmp.eq.s32.totalorder %s108, 1
      %p441 = por %p439, %p440
      %p442 = scmp.ne.s32.totalorder %s433, %s434
      %p443 = scmp.eq.s32.totalorder %s108, 0
      %p444 = por %p442, %p443
      %p445 = scmp.ne.s32.totalorder %s433, %s434
      %p446 = scmp.eq.s32.totalorder %s109, 1
      %p447 = por %p445, %p446
      %p449 = scmp.ne.s32.totalorder %s434, %s448
      %p450 = scmp.eq.s32.totalorder %s109, 0
      %p451 = por %p449, %p450
      %s453 = sadd.s32 %s452, 1
      %p456 = scmp.eq.s32.totalorder %s103, 1
      %p457 = scmp.ne.s32.totalorder %s452, %s454
      %p458 = scmp.eq.s32.totalorder %s103, 0
      %p459 = por %p457, %p458
      %p460 = scmp.ne.s32.totalorder %s452, %s454
      %p461 = scmp.eq.s32.totalorder %s108, 1
      %p462 = por %p460, %p461
      %p463 = scmp.ne.s32.totalorder %s454, %s455
      %p464 = scmp.eq.s32.totalorder %s108, 0
      %p465 = por %p463, %p464
      %p466 = scmp.ne.s32.totalorder %s454, %s455
      %p467 = scmp.eq.s32.totalorder %s109, 1
      %p468 = por %p466, %p467
      %p470 = scmp.ne.s32.totalorder %s455, %s469
      %p471 = scmp.eq.s32.totalorder %s109, 0
      %p472 = por %p470, %p471
      %s474 = sadd.s32 %s473, 1
      %p477 = scmp.eq.s32.totalorder %s103, 1
      %p478 = scmp.ne.s32.totalorder %s473, %s475
      %p479 = scmp.eq.s32.totalorder %s103, 0
      %p480 = por %p478, %p479
      %p481 = scmp.ne.s32.totalorder %s473, %s475
      %p482 = scmp.eq.s32.totalorder %s108, 1
      %p483 = por %p481, %p482
      %p484 = scmp.ne.s32.totalorder %s475, %s476
      %p485 = scmp.eq.s32.totalorder %s108, 0
      %p486 = por %p484, %p485
      %p487 = scmp.ne.s32.totalorder %s475, %s476
      %p488 = scmp.eq.s32.totalorder %s109, 1
      %p489 = por %p487, %p488
      %p491 = scmp.ne.s32.totalorder %s476, %s490
      %p492 = scmp.eq.s32.totalorder %s109, 0
      %p493 = por %p491, %p492
      %s495 = sadd.s32 %s494, 1
      %p498 = scmp.eq.s32.totalorder %s103, 1
      %p499 = scmp.ne.s32.totalorder %s494, %s496
      %p500 = scmp.eq.s32.totalorder %s103, 0
      %p501 = por %p499, %p500
      %p502 = scmp.ne.s32.totalorder %s494, %s496
      %p503 = scmp.eq.s32.totalorder %s108, 1
      %p504 = por %p502, %p503
      %p505 = scmp.ne.s32.totalorder %s496, %s497
      %p506 = scmp.eq.s32.totalorder %s108, 0
      %p507 = por %p505, %p506
      %p508 = scmp.ne.s32.totalorder %s496, %s497
      %p509 = scmp.eq.s32.totalorder %s109, 1
      %p510 = por %p508, %p509
      %p512 = scmp.ne.s32.totalorder %s497, %s511
      %p513 = scmp.eq.s32.totalorder %s109, 0
      %p514 = por %p512, %p513
      %s516 = sadd.s32 %s515, 1
      %p519 = scmp.eq.s32.totalorder %s103, 1
      %p520 = scmp.ne.s32.totalorder %s515, %s517
      %p521 = scmp.eq.s32.totalorder %s103, 0
      %p522 = por %p520, %p521
      %p523 = scmp.ne.s32.totalorder %s515, %s517
      %p524 = scmp.eq.s32.totalorder %s108, 1
      %p525 = por %p523, %p524
      %p526 = scmp.ne.s32.totalorder %s517, %s518
      %p527 = scmp.eq.s32.totalorder %s108, 0
      %p528 = por %p526, %p527
      %p529 = scmp.ne.s32.totalorder %s517, %s518
      %p530 = scmp.eq.s32.totalorder %s109, 1
      %p531 = por %p529, %p530
      %p533 = scmp.ne.s32.totalorder %s518, %s532
      %p534 = scmp.eq.s32.totalorder %s109, 0
      %p535 = por %p533, %p534
      %s537 = sadd.s32 %s536, 1
      %p540 = scmp.eq.s32.totalorder %s103, 1
      %p541 = scmp.ne.s32.totalorder %s536, %s538
      %p542 = scmp.eq.s32.totalorder %s103, 0
      %p543 = por %p541, %p542
      %p544 = scmp.ne.s32.totalorder %s536, %s538
      %p545 = scmp.eq.s32.totalorder %s108, 1
      %p546 = por %p544, %p545
      %p547 = scmp.ne.s32.totalorder %s538, %s539
      %p548 = scmp.eq.s32.totalorder %s108, 0
      %p549 = por %p547, %p548
      %p550 = scmp.ne.s32.totalorder %s538, %s539
      %p551 = scmp.eq.s32.totalorder %s109, 1
      %p552 = por %p550, %p551
      %p554 = scmp.ne.s32.totalorder %s539, %s553
      %p555 = scmp.eq.s32.totalorder %s109, 0
      %p556 = por %p554, %p555
      %s558 = sadd.s32 %s557, 1
      %p561 = scmp.eq.s32.totalorder %s103, 1
      %p562 = scmp.ne.s32.totalorder %s557, %s559
      %p563 = scmp.eq.s32.totalorder %s103, 0
      %p564 = por %p562, %p563
      %p565 = scmp.ne.s32.totalorder %s557, %s559
      %p566 = scmp.eq.s32.totalorder %s108, 1
      %p567 = por %p565, %p566
      %p568 = scmp.ne.s32.totalorder %s559, %s560
      %p569 = scmp.eq.s32.totalorder %s108, 0
      %p570 = por %p568, %p569
      %p571 = scmp.ne.s32.totalorder %s559, %s560
      %p572 = scmp.eq.s32.totalorder %s109, 1
      %p573 = por %p571, %p572
      %p575 = scmp.ne.s32.totalorder %s560, %s574
      %p576 = scmp.eq.s32.totalorder %s109, 0
      %p577 = por %p575, %p576
      %s579 = sadd.s32 %s578, 1
      %p582 = scmp.eq.s32.totalorder %s103, 1
      %p583 = scmp.ne.s32.totalorder %s578, %s580
      %p584 = scmp.eq.s32.totalorder %s103, 0
      %p585 = por %p583, %p584
      %p586 = scmp.ne.s32.totalorder %s578, %s580
      %p587 = scmp.eq.s32.totalorder %s108, 1
      %p588 = por %p586, %p587
      %p589 = scmp.ne.s32.totalorder %s580, %s581
      %p590 = scmp.eq.s32.totalorder %s108, 0
      %p591 = por %p589, %p590
      %p592 = scmp.ne.s32.totalorder %s580, %s581
      %p593 = scmp.eq.s32.totalorder %s109, 1
      %p594 = por %p592, %p593
      %p596 = scmp.ne.s32.totalorder %s581, %s595
      %p597 = scmp.eq.s32.totalorder %s109, 0
      %p598 = por %p596, %p597
      %s600 = sadd.s32 %s599, 1
      %p603 = scmp.eq.s32.totalorder %s103, 1
      %p604 = scmp.ne.s32.totalorder %s599, %s601
      %p605 = scmp.eq.s32.totalorder %s103, 0
      %p606 = por %p604, %p605
      %p607 = scmp.ne.s32.totalorder %s599, %s601
      %p608 = scmp.eq.s32.totalorder %s108, 1
      %p609 = por %p607, %p608
      %p610 = scmp.ne.s32.totalorder %s601, %s602
      %p611 = scmp.eq.s32.totalorder %s108, 0
      %p612 = por %p610, %p611
      %p613 = scmp.ne.s32.totalorder %s601, %s602
      %p614 = scmp.eq.s32.totalorder %s109, 1
      %p615 = por %p613, %p614
      %p617 = scmp.ne.s32.totalorder %s602, %s616
      %p618 = scmp.eq.s32.totalorder %s109, 0
      %p619 = por %p617, %p618
      %s621 = sadd.s32 %s620, 1
      %p624 = scmp.eq.s32.totalorder %s103, 1
      %p625 = scmp.ne.s32.totalorder %s620, %s622
      %p626 = scmp.eq.s32.totalorder %s103, 0
      %p627 = por %p625, %p626
      %p628 = scmp.ne.s32.totalorder %s620, %s622
      %p629 = scmp.eq.s32.totalorder %s108, 1
      %p630 = por %p628, %p629
      %p631 = scmp.ne.s32.totalorder %s622, %s623
      %p632 = scmp.eq.s32.totalorder %s108, 0
      %p633 = por %p631, %p632
      %p634 = scmp.ne.s32.totalorder %s622, %s623
      %p635 = scmp.eq.s32.totalorder %s109, 1
      %p636 = por %p634, %p635
      %p638 = scmp.ne.s32.totalorder %s623, %s637
      %p639 = scmp.eq.s32.totalorder %s109, 0
      %p640 = por %p638, %p639
      %s642 = sadd.s32 %s641, 1
      %p645 = scmp.eq.s32.totalorder %s103, 1
      %p646 = scmp.ne.s32.totalorder %s641, %s643
      %p647 = scmp.eq.s32.totalorder %s103, 0
      %p648 = por %p646, %p647
      %p649 = scmp.ne.s32.totalorder %s641, %s643
      %p650 = scmp.eq.s32.totalorder %s108, 1
      %p651 = por %p649, %p650
      %p652 = scmp.ne.s32.totalorder %s643, %s644
      %p653 = scmp.eq.s32.totalorder %s108, 0
      %p654 = por %p652, %p653
      %p655 = scmp.ne.s32.totalorder %s643, %s644
      %p656 = scmp.eq.s32.totalorder %s109, 1
      %p657 = por %p655, %p656
      %p659 = scmp.ne.s32.totalorder %s644, %s658
      %p660 = scmp.eq.s32.totalorder %s109, 0
      %p661 = por %p659, %p660
      %s663 = sadd.s32 %s662, 1
      %p666 = scmp.eq.s32.totalorder %s103, 1
      %p667 = scmp.ne.s32.totalorder %s662, %s664
      %p668 = scmp.eq.s32.totalorder %s103, 0
      %p669 = por %p667, %p668
      %p670 = scmp.ne.s32.totalorder %s662, %s664
      %p671 = scmp.eq.s32.totalorder %s108, 1
      %p672 = por %p670, %p671
      %p673 = scmp.ne.s32.totalorder %s664, %s665
      %p674 = scmp.eq.s32.totalorder %s108, 0
      %p675 = por %p673, %p674
      %p676 = scmp.ne.s32.totalorder %s664, %s665
      %p677 = scmp.eq.s32.totalorder %s109, 1
      %p678 = por %p676, %p677
      %p680 = scmp.ne.s32.totalorder %s665, %s679
      %p681 = scmp.eq.s32.totalorder %s109, 0
      %p682 = por %p680, %p681
      %s684 = sadd.s32 %s683, 1
      %p687 = scmp.eq.s32.totalorder %s103, 1
      %p688 = scmp.ne.s32.totalorder %s683, %s685
      %p689 = scmp.eq.s32.totalorder %s103, 0
      %p690 = por %p688, %p689
      %p691 = scmp.ne.s32.totalorder %s683, %s685
      %p692 = scmp.eq.s32.totalorder %s108, 1
      %p693 = por %p691, %p692
      %p694 = scmp.ne.s32.totalorder %s685, %s686
      %p695 = scmp.eq.s32.totalorder %s108, 0
      %p696 = por %p694, %p695
      %p697 = scmp.ne.s32.totalorder %s685, %s686
      %p698 = scmp.eq.s32.totalorder %s109, 1
      %p699 = por %p697, %p698
      %p701 = scmp.ne.s32.totalorder %s686, %s700
      %p702 = scmp.eq.s32.totalorder %s109, 0
      %p703 = por %p701, %p702
      %s705 = sadd.s32 %s704, 1
      %p708 = scmp.eq.s32.totalorder %s103, 1
      %p709 = scmp.ne.s32.totalorder %s704, %s706
      %p710 = scmp.eq.s32.totalorder %s103, 0
      %p711 = por %p709, %p710
      %p712 = scmp.ne.s32.totalorder %s704, %s706
      %p713 = scmp.eq.s32.totalorder %s108, 1
      %p714 = por %p712, %p713
      %p715 = scmp.ne.s32.totalorder %s706, %s707
      %p716 = scmp.eq.s32.totalorder %s108, 0
      %p717 = por %p715, %p716
      %p718 = scmp.ne.s32.totalorder %s706, %s707
      %p719 = scmp.eq.s32.totalorder %s109, 1
      %p720 = por %p718, %p719
      %p722 = scmp.ne.s32.totalorder %s707, %s721
      %p723 = scmp.eq.s32.totalorder %s109, 0
      %p724 = por %p722, %p723
      %s726 = sadd.s32 %s725, 1
      %p729 = scmp.eq.s32.totalorder %s103, 1
      %p730 = scmp.ne.s32.totalorder %s725, %s727
      %p731 = scmp.eq.s32.totalorder %s103, 0
      %p732 = por %p730, %p731
      %p733 = scmp.ne.s32.totalorder %s725, %s727
      %p734 = scmp.eq.s32.totalorder %s108, 1
      %p735 = por %p733, %p734
      %p736 = scmp.ne.s32.totalorder %s727, %s728
      %p737 = scmp.eq.s32.totalorder %s108, 0
      %p738 = por %p736, %p737
      %p739 = scmp.ne.s32.totalorder %s727, %s728
      %p740 = scmp.eq.s32.totalorder %s109, 1
      %p741 = por %p739, %p740
      %p743 = scmp.ne.s32.totalorder %s728, %s742
      %p744 = scmp.eq.s32.totalorder %s109, 0
      %p745 = por %p743, %p744
      %s747 = sadd.s32 %s746, 1
      %p750 = scmp.eq.s32.totalorder %s103, 1
      %p751 = scmp.ne.s32.totalorder %s746, %s748
      %p752 = scmp.eq.s32.totalorder %s103, 0
      %p753 = por %p751, %p752
      %p754 = scmp.ne.s32.totalorder %s746, %s748
      %p755 = scmp.eq.s32.totalorder %s108, 1
      %p756 = por %p754, %p755
      %p757 = scmp.ne.s32.totalorder %s748, %s749
      %p758 = scmp.eq.s32.totalorder %s108, 0
      %p759 = por %p757, %p758
      %p760 = scmp.ne.s32.totalorder %s748, %s749
      %p761 = scmp.eq.s32.totalorder %s109, 1
      %p762 = por %p760, %p761
      %p764 = scmp.ne.s32.totalorder %s749, %s763
      %p765 = scmp.eq.s32.totalorder %s109, 0
      %p766 = por %p764, %p765
      %s768 = sadd.s32 %s767, 1
      %p771 = scmp.eq.s32.totalorder %s103, 1
      %p772 = scmp.ne.s32.totalorder %s767, %s769
      %p773 = scmp.eq.s32.totalorder %s103, 0
      %p774 = por %p772, %p773
      %p775 = scmp.ne.s32.totalorder %s767, %s769
      %p776 = scmp.eq.s32.totalorder %s108, 1
      %p777 = por %p775, %p776
      %p778 = scmp.ne.s32.totalorder %s769, %s770
      %p779 = scmp.eq.s32.totalorder %s108, 0
      %p780 = por %p778, %p779
      %p781 = scmp.ne.s32.totalorder %s769, %s770
      %p782 = scmp.eq.s32.totalorder %s109, 1
      %p783 = por %p781, %p782
      %p785 = scmp.ne.s32.totalorder %s770, %s784
      %p786 = scmp.eq.s32.totalorder %s109, 0
      %p787 = por %p785, %p786
      %s789 = sadd.s32 %s788, 1
      %p792 = scmp.eq.s32.totalorder %s103, 1
      %p793 = scmp.ne.s32.totalorder %s788, %s790
      %p794 = scmp.eq.s32.totalorder %s103, 0
      %p795 = por %p793, %p794
      %p796 = scmp.ne.s32.totalorder %s788, %s790
      %p797 = scmp.eq.s32.totalorder %s108, 1
      %p798 = por %p796, %p797
      %p799 = scmp.ne.s32.totalorder %s790, %s791
      %p800 = scmp.eq.s32.totalorder %s108, 0
      %p801 = por %p799, %p800
      %p802 = scmp.ne.s32.totalorder %s790, %s791
      %p803 = scmp.eq.s32.totalorder %s109, 1
      %p804 = por %p802, %p803
      %p806 = scmp.ne.s32.totalorder %s791, %s805
      %p807 = scmp.eq.s32.totalorder %s109, 0
      %p808 = por %p806, %p807
      %s810 = sadd.s32 %s809, 1
      %p813 = scmp.eq.s32.totalorder %s103, 1
      %p814 = scmp.ne.s32.totalorder %s809, %s811
      %p815 = scmp.eq.s32.totalorder %s103, 0
      %p816 = por %p814, %p815
      %p817 = scmp.ne.s32.totalorder %s809, %s811
      %p818 = scmp.eq.s32.totalorder %s108, 1
      %p819 = por %p817, %p818
      %p820 = scmp.ne.s32.totalorder %s811, %s812
      %p821 = scmp.eq.s32.totalorder %s108, 0
      %p822 = por %p820, %p821
      %p823 = scmp.ne.s32.totalorder %s811, %s812
      %p824 = scmp.eq.s32.totalorder %s109, 1
      %p825 = por %p823, %p824
      %p827 = scmp.ne.s32.totalorder %s812, %s826
      %p828 = scmp.eq.s32.totalorder %s109, 0
      %p829 = por %p827, %p828
      %s831 = sadd.s32 %s830, 1
      %p834 = scmp.eq.s32.totalorder %s103, 1
      %p835 = scmp.ne.s32.totalorder %s830, %s832
      %p836 = scmp.eq.s32.totalorder %s103, 0
      %p837 = por %p835, %p836
      %p838 = scmp.ne.s32.totalorder %s830, %s832
      %p839 = scmp.eq.s32.totalorder %s108, 1
      %p840 = por %p838, %p839
      %p841 = scmp.ne.s32.totalorder %s832, %s833
      %p842 = scmp.eq.s32.totalorder %s108, 0
      %p843 = por %p841, %p842
      %p844 = scmp.ne.s32.totalorder %s832, %s833
      %p845 = scmp.eq.s32.totalorder %s109, 1
      %p846 = por %p844, %p845
      %p848 = scmp.ne.s32.totalorder %s833, %s847
      %p849 = scmp.eq.s32.totalorder %s109, 0
      %p850 = por %p848, %p849
      %s852 = sadd.s32 %s851, 1
      %p855 = scmp.eq.s32.totalorder %s103, 1
      %p856 = scmp.ne.s32.totalorder %s851, %s853
      %p857 = scmp.eq.s32.totalorder %s103, 0
      %p858 = por %p856, %p857
      %p859 = scmp.ne.s32.totalorder %s851, %s853
      %p860 = scmp.eq.s32.totalorder %s108, 1
      %p861 = por %p859, %p860
      %p862 = scmp.ne.s32.totalorder %s853, %s854
      %p863 = scmp.eq.s32.totalorder %s108, 0
      %p864 = por %p862, %p863
      %p865 = scmp.ne.s32.totalorder %s853, %s854
      %p866 = scmp.eq.s32.totalorder %s109, 1
      %p867 = por %p865, %p866
      %p869 = scmp.ne.s32.totalorder %s854, %s868
      %p870 = scmp.eq.s32.totalorder %s109, 0
      %p871 = por %p869, %p870
      %s873 = sadd.s32 %s872, 1
      %p876 = scmp.eq.s32.totalorder %s103, 1
      %p877 = scmp.ne.s32.totalorder %s872, %s874
      %p878 = scmp.eq.s32.totalorder %s103, 0
      %p879 = por %p877, %p878
      %p880 = scmp.ne.s32.totalorder %s872, %s874
      %p881 = scmp.eq.s32.totalorder %s108, 1
      %p882 = por %p880, %p881
      %p883 = scmp.ne.s32.totalorder %s874, %s875
      %p884 = scmp.eq.s32.totalorder %s108, 0
      %p885 = por %p883, %p884
      %p886 = scmp.ne.s32.totalorder %s874, %s875
      %p887 = scmp.eq.s32.totalorder %s109, 1
      %p888 = por %p886, %p887
      %p890 = scmp.ne.s32.totalorder %s875, %s889
      %p891 = scmp.eq.s32.totalorder %s109, 0
      %p892 = por %p890, %p891
      %s894 = sadd.s32 %s893, 1
      %p897 = scmp.eq.s32.totalorder %s103, 1
      %p898 = scmp.ne.s32.totalorder %s893, %s895
      %p899 = scmp.eq.s32.totalorder %s103, 0
      %p900 = por %p898, %p899
      %p901 = scmp.ne.s32.totalorder %s893, %s895
      %p902 = scmp.eq.s32.totalorder %s108, 1
      %p903 = por %p901, %p902
      %p904 = scmp.ne.s32.totalorder %s895, %s896
      %p905 = scmp.eq.s32.totalorder %s108, 0
      %p906 = por %p904, %p905
      %p907 = scmp.ne.s32.totalorder %s895, %s896
      %p908 = scmp.eq.s32.totalorder %s109, 1
      %p909 = por %p907, %p908
      %p911 = scmp.ne.s32.totalorder %s896, %s910
      %p912 = scmp.eq.s32.totalorder %s109, 0
      %p913 = por %p911, %p912
      %s915 = sadd.s32 %s914, 1
      %p918 = scmp.eq.s32.totalorder %s103, 1
      %p919 = scmp.ne.s32.totalorder %s914, %s916
      %p920 = scmp.eq.s32.totalorder %s103, 0
      %p921 = por %p919, %p920
      %p922 = scmp.ne.s32.totalorder %s914, %s916
      %p923 = scmp.eq.s32.totalorder %s108, 1
      %p924 = por %p922, %p923
      %p925 = scmp.ne.s32.totalorder %s916, %s917
      %p926 = scmp.eq.s32.totalorder %s108, 0
      %p927 = por %p925, %p926
      %p928 = scmp.ne.s32.totalorder %s916, %s917
      %p929 = scmp.eq.s32.totalorder %s109, 1
      %p930 = por %p928, %p929
      %p932 = scmp.ne.s32.totalorder %s917, %s931
      %p933 = scmp.eq.s32.totalorder %s109, 0
      %p934 = por %p932, %p933
      %s936 = sadd.s32 %s935, 1
      %p939 = scmp.eq.s32.totalorder %s103, 1
      %p940 = scmp.ne.s32.totalorder %s935, %s937
      %p941 = scmp.eq.s32.totalorder %s103, 0
      %p942 = por %p940, %p941
      %p943 = scmp.ne.s32.totalorder %s935, %s937
      %p944 = scmp.eq.s32.totalorder %s108, 1
      %p945 = por %p943, %p944
      %p946 = scmp.ne.s32.totalorder %s937, %s938
      %p947 = scmp.eq.s32.totalorder %s108, 0
      %p948 = por %p946, %p947
      %p949 = scmp.ne.s32.totalorder %s937, %s938
      %p950 = scmp.eq.s32.totalorder %s109, 1
      %p951 = por %p949, %p950
      %p953 = scmp.ne.s32.totalorder %s938, %s952
      %p954 = scmp.eq.s32.totalorder %s109, 0
      %p955 = por %p953, %p954
      %s957 = sadd.s32 %s956, 1
      %p960 = scmp.eq.s32.totalorder %s103, 1
      %p961 = scmp.ne.s32.totalorder %s956, %s958
      %p962 = scmp.eq.s32.totalorder %s103, 0
      %p963 = por %p961, %p962
      %p964 = scmp.ne.s32.totalorder %s956, %s958
      %p965 = scmp.eq.s32.totalorder %s108, 1
      %p966 = por %p964, %p965
      %p967 = scmp.ne.s32.totalorder %s958, %s959
      %p968 = scmp.eq.s32.totalorder %s108, 0
      %p969 = por %p967, %p968
      %p970 = scmp.ne.s32.totalorder %s958, %s959
      %p971 = scmp.eq.s32.totalorder %s109, 1
      %p972 = por %p970, %p971
      %p974 = scmp.ne.s32.totalorder %s959, %s973
      %p975 = scmp.eq.s32.totalorder %s109, 0
      %p976 = por %p974, %p975
      %s978 = sadd.s32 %s977, 1
      %p981 = scmp.eq.s32.totalorder %s103, 1
      %p982 = scmp.ne.s32.totalorder %s977, %s979
      %p983 = scmp.eq.s32.totalorder %s103, 0
      %p984 = por %p982, %p983
      %p985 = scmp.ne.s32.totalorder %s977, %s979
      %p986 = scmp.eq.s32.totalorder %s108, 1
      %p987 = por %p985, %p986
      %p988 = scmp.ne.s32.totalorder %s979, %s980
      %p989 = scmp.eq.s32.totalorder %s108, 0
      %p990 = por %p988, %p989
      %p991 = scmp.ne.s32.totalorder %s979, %s980
      %p992 = scmp.eq.s32.totalorder %s109, 1
      %p993 = por %p991, %p992
      %p995 = scmp.ne.s32.totalorder %s980, %s994
      %p996 = scmp.eq.s32.totalorder %s109, 0
      %p997 = por %p995, %p996
      %s999 = sadd.s32 %s998, 1
      %p1002 = scmp.eq.s32.totalorder %s103, 1
      %p1003 = scmp.ne.s32.totalorder %s998, %s1000
      %p1004 = scmp.eq.s32.totalorder %s103, 0
      %p1005 = por %p1003, %p1004
      %p1006 = scmp.ne.s32.totalorder %s998, %s1000
      %p1007 = scmp.eq.s32.totalorder %s108, 1
      %p1008 = por %p1006, %p1007
      %p1009 = scmp.ne.s32.totalorder %s1000, %s1001
      %p1010 = scmp.eq.s32.totalorder %s108, 0
      %p1011 = por %p1009, %p1010
      %p1012 = scmp.ne.s32.totalorder %s1000, %s1001
      %p1013 = scmp.eq.s32.totalorder %s109, 1
      %p1014 = por %p1012, %p1013
      %p1016 = scmp.ne.s32.totalorder %s1001, %s1015
      %p1017 = scmp.eq.s32.totalorder %s109, 0
      %p1018 = por %p1016, %p1017
      %s1019 = ssub.s32 %s103, %s110
      %p1020 = scmp.eq.s32.totalorder %s1019, 0
      %s1022 = sadd.s32 %s1021, 1
      %s1023 = scalar_select %p1020, %s1021, %s1022
      %p1026 = pneg %p1020
      %p1027 = scmp.eq.s32.totalorder %s103, 1
      %p1028 = por %p1026, %p1027
      %p1029 = scmp.ne.s32.totalorder %s1021, %s1024
      %p1030 = scmp.eq.s32.totalorder %s103, 0
      %p1031 = por %p1029, %p1030
      %p1032 = scmp.ne.s32.totalorder %s1021, %s1024
      %p1033 = scmp.eq.s32.totalorder %s108, 1
      %p1034 = por %p1032, %p1033
      %p1035 = scmp.ne.s32.totalorder %s1024, %s1025
      %p1036 = scmp.eq.s32.totalorder %s108, 0
      %p1037 = por %p1035, %p1036
      %p1038 = scmp.ne.s32.totalorder %s1024, %s1025
      %p1039 = scmp.eq.s32.totalorder %s109, 1
      %p1040 = por %p1038, %p1039
      %p1042 = scmp.ne.s32.totalorder %s1025, %s1041
      %p1043 = scmp.eq.s32.totalorder %s109, 0
      %p1044 = por %p1042, %p1043
      %p1045 = scmp.le.s32.totalorder 1, %s103
      %p1046 = scmp.lt.s32.totalorder %s103, 3
      %p1047 = pnand %p1045, %p1046
      %p1048 = pneg %p1047
      // Predicated region
      $region9: #{tpu_custom_call.1} parent=5 // pred_check
        _
      $region10: #{tpu_custom_call.1} parent=5 // pred_check_branch
        %1050 = sbr.rel (%p1047) target = $region12
      $region11: #{tpu_custom_call.1} parent=5 // pred_region
        %s1051 = ssub.s32 %s103, 1
        // Predicated region
        $region13: #{tpu_custom_call.1} parent=11 // pred_check
          %p1052 = pneg %p150
        $region14: #{tpu_custom_call.1} parent=11 // pred_check_branch
          %1054 = sbr.rel (%p1052) target = $region16
        $region15: #{tpu_custom_call.1} parent=11 // pred_region
          _
        $region16: #{tpu_custom_call.1} parent=11 // pred_fallthru
          _
        // Predicated region
        $region17: #{tpu_custom_call.1} parent=11 // pred_check
          %p1055 = pneg %p171
        $region18: #{tpu_custom_call.1} parent=11 // pred_check_branch
          %1057 = sbr.rel (%p1055) target = $region20
        $region19: #{tpu_custom_call.1} parent=11 // pred_region
          %1059 = vsyncadd [#allocation3], 0
          %s1061 = sshll.u32 %s5, 4
          %s1062 = int_to_ptr.hbm [resolvable:$true] %s1061
          %s1063 = sshll.u32 [#allocation2], 4
          %s1064 = int_to_ptr.vmem [resolvable:$true] %s1063
          %1066 = dma.hbm_to_vmem [thread:$0]  %s1062, 16, %s1064, [#allocation3]
        $region20: #{tpu_custom_call.1} parent=11 // pred_fallthru
          _
        // Predicated region
        $region21: #{tpu_custom_call.1} parent=11 // pred_check
          %p1067 = pneg %p192
        $region22: #{tpu_custom_call.1} parent=11 // pred_check_branch
          %1069 = sbr.rel (%p1067) target = $region24
        $region23: #{tpu_custom_call.1} parent=11 // pred_region
          _
        $region24: #{tpu_custom_call.1} parent=11 // pred_fallthru
          _
        // Predicated region
        $region25: #{tpu_custom_call.1} parent=11 // pred_check
          %p1070 = pneg %p213
        $region26: #{tpu_custom_call.1} parent=11 // pred_check_branch
          %1072 = sbr.rel (%p1070) target = $region28
        $region27: #{tpu_custom_call.1} parent=11 // pred_region
          _
        $region28: #{tpu_custom_call.1} parent=11 // pred_fallthru
          _
        // Predicated region
        $region29: #{tpu_custom_call.1} parent=11 // pred_check
          %p1073 = pneg %p234
        $region30: #{tpu_custom_call.1} parent=11 // pred_check_branch
          %1075 = sbr.rel (%p1073) target = $region32
        $region31: #{tpu_custom_call.1} parent=11 // pred_region
          _
        $region32: #{tpu_custom_call.1} parent=11 // pred_fallthru
          _
        // Predicated region
        $region33: #{tpu_custom_call.1} parent=11 // pred_check
          %p1076 = pneg %p255
        $region34: #{tpu_custom_call.1} parent=11 // pred_check_branch
          %1078 = sbr.rel (%p1076) target = $region36
        $region35: #{tpu_custom_call.1} parent=11 // pred_region
          %1080 = vsyncadd [#allocation6], 0
          %s1082 = sshll.u32 %s13, 4
          %s1083 = int_to_ptr.hbm [resolvable:$true] %s1082
          %s1084 = sshll.u32 [#allocation5], 4
          %s1085 = int_to_ptr.vmem [resolvable:$true] %s1084
          %1087 = dma.hbm_to_vmem [thread:$0]  %s1083, 16, %s1085, [#allocation6]
        $region36: #{tpu_custom_call.1} parent=11 // pred_fallthru
          _
        // Predicated region
        $region37: #{tpu_custom_call.1} parent=11 // pred_check
          %p1088 = pneg %p276
        $region38: #{tpu_custom_call.1} parent=11 // pred_check_branch
          %1090 = sbr.rel (%p1088) target = $region40
        $region39: #{tpu_custom_call.1} parent=11 // pred_region
          _
        $region40: #{tpu_custom_call.1} parent=11 // pred_fallthru
          _
        // Predicated region
        $region41: #{tpu_custom_call.1} parent=11 // pred_check
          %p1091 = pneg %p297
        $region42: #{tpu_custom_call.1} parent=11 // pred_check_branch
          %1093 = sbr.rel (%p1091) target = $region44
        $region43: #{tpu_custom_call.1} parent=11 // pred_region
          _
        $region44: #{tpu_custom_call.1} parent=11 // pred_fallthru
          _
        // Predicated region
        $region45: #{tpu_custom_call.1} parent=11 // pred_check
          %p1094 = pneg %p318
        $region46: #{tpu_custom_call.1} parent=11 // pred_check_branch
          %1096 = sbr.rel (%p1094) target = $region48
        $region47: #{tpu_custom_call.1} parent=11 // pred_region
          _
        $region48: #{tpu_custom_call.1} parent=11 // pred_fallthru
          _
        // Predicated region
        $region49: #{tpu_custom_call.1} parent=11 // pred_check
          %p1097 = pneg %p339
        $region50: #{tpu_custom_call.1} parent=11 // pred_check_branch
          %1099 = sbr.rel (%p1097) target = $region52
        $region51: #{tpu_custom_call.1} parent=11 // pred_region
          %1101 = vsyncadd [#allocation6], 0
          %s1103 = sshll.u32 %s21, 4
          %s1104 = int_to_ptr.hbm [resolvable:$true] %s1103
          %s1105 = sshll.u32 [#allocation7], 4
          %s1106 = int_to_ptr.vmem [resolvable:$true] %s1105
          %1108 = dma.hbm_to_vmem [thread:$0]  %s1104, 16, %s1106, [#allocation6]
        $region52: #{tpu_custom_call.1} parent=11 // pred_fallthru
          _
        // Predicated region
        $region53: #{tpu_custom_call.1} parent=11 // pred_check
          %p1109 = pneg %p360
        $region54: #{tpu_custom_call.1} parent=11 // pred_check_branch
          %1111 = sbr.rel (%p1109) target = $region56
        $region55: #{tpu_custom_call.1} parent=11 // pred_region
          %1113 = vsyncadd [#allocation9], 0
          %s1115 = sshll.u32 %s23, 4
          %s1116 = int_to_ptr.hbm [resolvable:$true] %s1115
          %s1117 = sshll.u32 [#allocation8], 4
          %s1118 = int_to_ptr.vmem [resolvable:$true] %s1117
          %1120 = dma.hbm_to_vmem [thread:$0]  %s1116, 128, %s1118, [#allocation9]
        $region56: #{tpu_custom_call.1} parent=11 // pred_fallthru
          _
        // Predicated region
        $region57: #{tpu_custom_call.1} parent=11 // pred_check
          %p1121 = pneg %p381
        $region58: #{tpu_custom_call.1} parent=11 // pred_check_branch
          %1123 = sbr.rel (%p1121) target = $region60
        $region59: #{tpu_custom_call.1} parent=11 // pred_region
          %1125 = vsyncadd [#allocation9], 0
          %s1127 = sshll.u32 %s25, 4
          %s1128 = int_to_ptr.hbm [resolvable:$true] %s1127
          %s1129 = sshll.u32 [#allocation10], 4
          %s1130 = int_to_ptr.vmem [resolvable:$true] %s1129
          %1132 = dma.hbm_to_vmem [thread:$0]  %s1128, 128, %s1130, [#allocation9]
        $region60: #{tpu_custom_call.1} parent=11 // pred_fallthru
          _
        // Predicated region
        $region61: #{tpu_custom_call.1} parent=11 // pred_check
          %p1133 = pneg %p402
        $region62: #{tpu_custom_call.1} parent=11 // pred_check_branch
          %1135 = sbr.rel (%p1133) target = $region64
        $region63: #{tpu_custom_call.1} parent=11 // pred_region
          _
        $region64: #{tpu_custom_call.1} parent=11 // pred_fallthru
          _
        // Predicated region
        $region65: #{tpu_custom_call.1} parent=11 // pred_check
          %p1136 = pneg %p423
        $region66: #{tpu_custom_call.1} parent=11 // pred_check_branch
          %1138 = sbr.rel (%p1136) target = $region68
        $region67: #{tpu_custom_call.1} parent=11 // pred_region
          _
        $region68: #{tpu_custom_call.1} parent=11 // pred_fallthru
          _
        // Predicated region
        $region69: #{tpu_custom_call.1} parent=11 // pred_check
          %p1139 = pneg %p444
        $region70: #{tpu_custom_call.1} parent=11 // pred_check_branch
          %1141 = sbr.rel (%p1139) target = $region72
        $region71: #{tpu_custom_call.1} parent=11 // pred_region
          %1143 = vsyncadd [#allocation12], 0
          %s1145 = sshll.u32 %s31, 4
          %s1146 = int_to_ptr.hbm [resolvable:$true] %s1145
          %s1147 = sshll.u32 [#allocation11], 4
          %s1148 = int_to_ptr.vmem [resolvable:$true] %s1147
          %1150 = dma.hbm_to_vmem [thread:$0]  %s1146, 16, %s1148, [#allocation12]
        $region72: #{tpu_custom_call.1} parent=11 // pred_fallthru
          _
        // Predicated region
        $region73: #{tpu_custom_call.1} parent=11 // pred_check
          %p1151 = pneg %p465
        $region74: #{tpu_custom_call.1} parent=11 // pred_check_branch
          %1153 = sbr.rel (%p1151) target = $region76
        $region75: #{tpu_custom_call.1} parent=11 // pred_region
          %1155 = vsyncadd [#allocation12], 0
          %s1157 = sshll.u32 %s33, 4
          %s1158 = int_to_ptr.hbm [resolvable:$true] %s1157
          %s1159 = sshll.u32 [#allocation13], 4
          %s1160 = int_to_ptr.vmem [resolvable:$true] %s1159
          %1162 = dma.hbm_to_vmem [thread:$0]  %s1158, 128, %s1160, [#allocation12]
        $region76: #{tpu_custom_call.1} parent=11 // pred_fallthru
          _
        // Predicated region
        $region77: #{tpu_custom_call.1} parent=11 // pred_check
          %p1163 = pneg %p486
        $region78: #{tpu_custom_call.1} parent=11 // pred_check_branch
          %1165 = sbr.rel (%p1163) target = $region80
        $region79: #{tpu_custom_call.1} parent=11 // pred_region
          %1167 = vsyncadd [#allocation15], 0
          %s1169 = sshll.u32 %s35, 4
          %s1170 = int_to_ptr.hbm [resolvable:$true] %s1169
          %s1171 = sshll.u32 [#allocation14], 4
          %s1172 = int_to_ptr.vmem [resolvable:$true] %s1171
          %1174 = dma.hbm_to_vmem [thread:$0]  %s1170, 128, %s1172, [#allocation15]
        $region80: #{tpu_custom_call.1} parent=11 // pred_fallthru
          _
        // Predicated region
        $region81: #{tpu_custom_call.1} parent=11 // pred_check
          %p1175 = pneg %p507
        $region82: #{tpu_custom_call.1} parent=11 // pred_check_branch
          %1177 = sbr.rel (%p1175) target = $region84
        $region83: #{tpu_custom_call.1} parent=11 // pred_region
          _
        $region84: #{tpu_custom_call.1} parent=11 // pred_fallthru
          _
        // Predicated region
        $region85: #{tpu_custom_call.1} parent=11 // pred_check
          %p1178 = pneg %p528
        $region86: #{tpu_custom_call.1} parent=11 // pred_check_branch
          %1180 = sbr.rel (%p1178) target = $region88
        $region87: #{tpu_custom_call.1} parent=11 // pred_region
          _
        $region88: #{tpu_custom_call.1} parent=11 // pred_fallthru
          _
        // Predicated region
        $region89: #{tpu_custom_call.1} parent=11 // pred_check
          %p1181 = pneg %p549
        $region90: #{tpu_custom_call.1} parent=11 // pred_check_branch
          %1183 = sbr.rel (%p1181) target = $region92
        $region91: #{tpu_custom_call.1} parent=11 // pred_region
          _
        $region92: #{tpu_custom_call.1} parent=11 // pred_fallthru
          _
        // Predicated region
        $region93: #{tpu_custom_call.1} parent=11 // pred_check
          %p1184 = pneg %p570
        $region94: #{tpu_custom_call.1} parent=11 // pred_check_branch
          %1186 = sbr.rel (%p1184) target = $region96
        $region95: #{tpu_custom_call.1} parent=11 // pred_region
          _
        $region96: #{tpu_custom_call.1} parent=11 // pred_fallthru
          _
        // Predicated region
        $region97: #{tpu_custom_call.1} parent=11 // pred_check
          %p1187 = pneg %p591
        $region98: #{tpu_custom_call.1} parent=11 // pred_check_branch
          %1189 = sbr.rel (%p1187) target = $region100
        $region99: #{tpu_custom_call.1} parent=11 // pred_region
          _
        $region100: #{tpu_custom_call.1} parent=11 // pred_fallthru
          _
        // Predicated region
        $region101: #{tpu_custom_call.1} parent=11 // pred_check
          %p1190 = pneg %p612
        $region102: #{tpu_custom_call.1} parent=11 // pred_check_branch
          %1192 = sbr.rel (%p1190) target = $region104
        $region103: #{tpu_custom_call.1} parent=11 // pred_region
          _
        $region104: #{tpu_custom_call.1} parent=11 // pred_fallthru
          _
        // Predicated region
        $region105: #{tpu_custom_call.1} parent=11 // pred_check
          %p1193 = pneg %p633
        $region106: #{tpu_custom_call.1} parent=11 // pred_check_branch
          %1195 = sbr.rel (%p1193) target = $region108
        $region107: #{tpu_custom_call.1} parent=11 // pred_region
          _
        $region108: #{tpu_custom_call.1} parent=11 // pred_fallthru
          _
        // Predicated region
        $region109: #{tpu_custom_call.1} parent=11 // pred_check
          %p1196 = pneg %p654
        $region110: #{tpu_custom_call.1} parent=11 // pred_check_branch
          %1198 = sbr.rel (%p1196) target = $region112
        $region111: #{tpu_custom_call.1} parent=11 // pred_region
          _
        $region112: #{tpu_custom_call.1} parent=11 // pred_fallthru
          _
        // Predicated region
        $region113: #{tpu_custom_call.1} parent=11 // pred_check
          %p1199 = pneg %p675
        $region114: #{tpu_custom_call.1} parent=11 // pred_check_branch
          %1201 = sbr.rel (%p1199) target = $region116
        $region115: #{tpu_custom_call.1} parent=11 // pred_region
          _
        $region116: #{tpu_custom_call.1} parent=11 // pred_fallthru
          _
        // Predicated region
        $region117: #{tpu_custom_call.1} parent=11 // pred_check
          %p1202 = pneg %p696
        $region118: #{tpu_custom_call.1} parent=11 // pred_check_branch
          %1204 = sbr.rel (%p1202) target = $region120
        $region119: #{tpu_custom_call.1} parent=11 // pred_region
          _
        $region120: #{tpu_custom_call.1} parent=11 // pred_fallthru
          _
        // Predicated region
        $region121: #{tpu_custom_call.1} parent=11 // pred_check
          %p1205 = pneg %p717
        $region122: #{tpu_custom_call.1} parent=11 // pred_check_branch
          %1207 = sbr.rel (%p1205) target = $region124
        $region123: #{tpu_custom_call.1} parent=11 // pred_region
          _
        $region124: #{tpu_custom_call.1} parent=11 // pred_fallthru
          _
        // Predicated region
        $region125: #{tpu_custom_call.1} parent=11 // pred_check
          %p1208 = pneg %p738
        $region126: #{tpu_custom_call.1} parent=11 // pred_check_branch
          %1210 = sbr.rel (%p1208) target = $region128
        $region127: #{tpu_custom_call.1} parent=11 // pred_region
          %1212 = vsyncadd [#allocation15], 0
          %s1214 = sshll.u32 %s59, 4
          %s1215 = int_to_ptr.hbm [resolvable:$true] %s1214
          %s1216 = sshll.u32 [#allocation16], 4
          %s1217 = int_to_ptr.vmem [resolvable:$true] %s1216
          %1219 = dma.hbm_to_vmem [thread:$0]  %s1215, 16, %s1217, [#allocation15]
        $region128: #{tpu_custom_call.1} parent=11 // pred_fallthru
          _
        // Predicated region
        $region129: #{tpu_custom_call.1} parent=11 // pred_check
          %p1220 = pneg %p759
        $region130: #{tpu_custom_call.1} parent=11 // pred_check_branch
          %1222 = sbr.rel (%p1220) target = $region132
        $region131: #{tpu_custom_call.1} parent=11 // pred_region
          _
        $region132: #{tpu_custom_call.1} parent=11 // pred_fallthru
          _
        // Predicated region
        $region133: #{tpu_custom_call.1} parent=11 // pred_check
          %p1223 = pneg %p780
        $region134: #{tpu_custom_call.1} parent=11 // pred_check_branch
          %1225 = sbr.rel (%p1223) target = $region136
        $region135: #{tpu_custom_call.1} parent=11 // pred_region
          _
        $region136: #{tpu_custom_call.1} parent=11 // pred_fallthru
          _
        // Predicated region
        $region137: #{tpu_custom_call.1} parent=11 // pred_check
          %p1226 = pneg %p801
        $region138: #{tpu_custom_call.1} parent=11 // pred_check_branch
          %1228 = sbr.rel (%p1226) target = $region140
        $region139: #{tpu_custom_call.1} parent=11 // pred_region
          _
        $region140: #{tpu_custom_call.1} parent=11 // pred_fallthru
          _
        // Predicated region
        $region141: #{tpu_custom_call.1} parent=11 // pred_check
          %p1229 = pneg %p822
        $region142: #{tpu_custom_call.1} parent=11 // pred_check_branch
          %1231 = sbr.rel (%p1229) target = $region144
        $region143: #{tpu_custom_call.1} parent=11 // pred_region
          _
        $region144: #{tpu_custom_call.1} parent=11 // pred_fallthru
          _
        // Predicated region
        $region145: #{tpu_custom_call.1} parent=11 // pred_check
          %p1232 = pneg %p843
        $region146: #{tpu_custom_call.1} parent=11 // pred_check_branch
          %1234 = sbr.rel (%p1232) target = $region148
        $region147: #{tpu_custom_call.1} parent=11 // pred_region
          %1236 = vsyncadd [#allocation18], 0
          %s1238 = sshll.u32 %s69, 4
          %s1239 = int_to_ptr.hbm [resolvable:$true] %s1238
          %s1240 = sshll.u32 [#allocation17], 4
          %s1241 = int_to_ptr.vmem [resolvable:$true] %s1240
          %1243 = dma.hbm_to_vmem [thread:$0]  %s1239, 16, %s1241, [#allocation18]
        $region148: #{tpu_custom_call.1} parent=11 // pred_fallthru
          _
        // Predicated region
        $region149: #{tpu_custom_call.1} parent=11 // pred_check
          %p1244 = pneg %p864
        $region150: #{tpu_custom_call.1} parent=11 // pred_check_branch
          %1246 = sbr.rel (%p1244) target = $region152
        $region151: #{tpu_custom_call.1} parent=11 // pred_region
          _
        $region152: #{tpu_custom_call.1} parent=11 // pred_fallthru
          _
        // Predicated region
        $region153: #{tpu_custom_call.1} parent=11 // pred_check
          %p1247 = pneg %p885
        $region154: #{tpu_custom_call.1} parent=11 // pred_check_branch
          %1249 = sbr.rel (%p1247) target = $region156
        $region155: #{tpu_custom_call.1} parent=11 // pred_region
          _
        $region156: #{tpu_custom_call.1} parent=11 // pred_fallthru
          _
        // Predicated region
        $region157: #{tpu_custom_call.1} parent=11 // pred_check
          %p1250 = pneg %p906
        $region158: #{tpu_custom_call.1} parent=11 // pred_check_branch
          %1252 = sbr.rel (%p1250) target = $region160
        $region159: #{tpu_custom_call.1} parent=11 // pred_region
          _
        $region160: #{tpu_custom_call.1} parent=11 // pred_fallthru
          _
        // Predicated region
        $region161: #{tpu_custom_call.1} parent=11 // pred_check
          %p1253 = pneg %p927
        $region162: #{tpu_custom_call.1} parent=11 // pred_check_branch
          %1255 = sbr.rel (%p1253) target = $region164
        $region163: #{tpu_custom_call.1} parent=11 // pred_region
          _
        $region164: #{tpu_custom_call.1} parent=11 // pred_fallthru
          _
        // Predicated region
        $region165: #{tpu_custom_call.1} parent=11 // pred_check
          %p1256 = pneg %p948
        $region166: #{tpu_custom_call.1} parent=11 // pred_check_branch
          %1258 = sbr.rel (%p1256) target = $region168
        $region167: #{tpu_custom_call.1} parent=11 // pred_region
          _
        $region168: #{tpu_custom_call.1} parent=11 // pred_fallthru
          _
        // Predicated region
        $region169: #{tpu_custom_call.1} parent=11 // pred_check
          %p1259 = pneg %p969
        $region170: #{tpu_custom_call.1} parent=11 // pred_check_branch
          %1261 = sbr.rel (%p1259) target = $region172
        $region171: #{tpu_custom_call.1} parent=11 // pred_region
          %1263 = vsyncadd [#allocation18], 0
          %s1265 = sshll.u32 %s81, 4
          %s1266 = int_to_ptr.hbm [resolvable:$true] %s1265
          %s1267 = sshll.u32 [#allocation19], 4
          %s1268 = int_to_ptr.vmem [resolvable:$true] %s1267
          %1270 = dma.hbm_to_vmem [thread:$0]  %s1266, 64, %s1268, [#allocation18]
        $region172: #{tpu_custom_call.1} parent=11 // pred_fallthru
          _
        // Predicated region
        $region173: #{tpu_custom_call.1} parent=11 // pred_check
          %p1271 = pneg %p990
        $region174: #{tpu_custom_call.1} parent=11 // pred_check_branch
          %1273 = sbr.rel (%p1271) target = $region176
        $region175: #{tpu_custom_call.1} parent=11 // pred_region
          %1275 = vsyncadd [#allocation21], 0
          %s1276 = sshll.u32 %s83, 4
          %s1277 = int_to_ptr.hbm [resolvable:$true] %s1276
          %s1278 = sshll.u32 [#allocation20], 4
          %s1279 = int_to_ptr.vmem [resolvable:$true] %s1278
          %1284 = dma.hbm_to_vmem [thread:$0]  %s1277, 128, %s1279, [#allocation21], 64, 64, 4
        $region176: #{tpu_custom_call.1} parent=11 // pred_fallthru
          _
        // Predicated region
        $region177: #{tpu_custom_call.1} parent=11 // pred_check
          %p1285 = pneg %p1011
        $region178: #{tpu_custom_call.1} parent=11 // pred_check_branch
          %1287 = sbr.rel (%p1285) target = $region180
        $region179: #{tpu_custom_call.1} parent=11 // pred_region
          %1289 = vsyncadd [#allocation21], 0
          %s1290 = sshll.u32 %s85, 4
          %s1291 = int_to_ptr.hbm [resolvable:$true] %s1290
          %s1292 = sshll.u32 [#allocation22], 4
          %s1293 = int_to_ptr.vmem [resolvable:$true] %s1292
          %1298 = dma.hbm_to_vmem [thread:$0]  %s1291, 256, %s1293, [#allocation21], 64, 64, 4
        $region180: #{tpu_custom_call.1} parent=11 // pred_fallthru
          _
      $region12: #{tpu_custom_call.1} parent=5 // pred_fallthru
        _
      %p1299 = scmp.lt.s32.totalorder %s103, 2
      // Predicated region
      $region181: #{tpu_custom_call.1} parent=5 // pred_check
        %p1300 = pneg %p1299
      $region182: #{tpu_custom_call.1} parent=5 // pred_check_branch
        %1302 = sbr.rel (%p1300) target = $region184
      $region183: #{tpu_custom_call.1} parent=5 // pred_region
        // Predicated region
        $region185: #{tpu_custom_call.1} parent=183 // pred_check
          %p1303 = pneg %p123
        $region186: #{tpu_custom_call.1} parent=183 // pred_check_branch
          %1305 = sbr.rel (%p1303) target = $region188
        $region187: #{tpu_custom_call.1} parent=183 // pred_region
          %p1306 = scmp.lt.s32.totalorder %s103, 1
          %s1307 = scalar_select %p1306, %s103, 1
          %s1308 = smul.addr %s1307, 2
          %s1309 = smul.addr %s1308, 8
          %s1310 = scalar_lea.vmem %s1, %s1309
        $region188: #{tpu_custom_call.1} parent=183 // pred_fallthru
          _
      $region184: #{tpu_custom_call.1} parent=5 // pred_fallthru
        _
      %p1311 = scmp.le.s32.totalorder 1, %s103
      %p1312 = scmp.lt.s32.totalorder %s103, 3
      %p1313 = pnand %p1311, %p1312
      %p1314 = pneg %p1313
      // Predicated region
      $region189: #{tpu_custom_call.1} parent=5 // pred_check
        _
      $region190: #{tpu_custom_call.1} parent=5 // pred_check_branch
        %1316 = sbr.rel (%p1313) target = $region192
      $region191: #{tpu_custom_call.1} parent=5 // pred_region
        %s1317 = ssub.s32 %s103, 1
        // Predicated region
        $region193: #{tpu_custom_call.1} parent=191 // pred_check
          %p1318 = pneg %p171
        $region194: #{tpu_custom_call.1} parent=191 // pred_check_branch
          %1320 = sbr.rel (%p1318) target = $region196
        $region195: #{tpu_custom_call.1} parent=191 // pred_region
          %1322 = dma.done [#allocation3], 16
        $region196: #{tpu_custom_call.1} parent=191 // pred_fallthru
          _
        // Predicated region
        $region197: #{tpu_custom_call.1} parent=191 // pred_check
          %p1323 = pneg %p255
        $region198: #{tpu_custom_call.1} parent=191 // pred_check_branch
          %1325 = sbr.rel (%p1323) target = $region200
        $region199: #{tpu_custom_call.1} parent=191 // pred_region
          %1327 = dma.done [#allocation6], 16
        $region200: #{tpu_custom_call.1} parent=191 // pred_fallthru
          _
        // Predicated region
        $region201: #{tpu_custom_call.1} parent=191 // pred_check
          %p1328 = pneg %p339
        $region202: #{tpu_custom_call.1} parent=191 // pred_check_branch
          %1330 = sbr.rel (%p1328) target = $region204
        $region203: #{tpu_custom_call.1} parent=191 // pred_region
          %1332 = dma.done [#allocation6], 16
        $region204: #{tpu_custom_call.1} parent=191 // pred_fallthru
          _
        // Predicated region
        $region205: #{tpu_custom_call.1} parent=191 // pred_check
          %p1333 = pneg %p360
        $region206: #{tpu_custom_call.1} parent=191 // pred_check_branch
          %1335 = sbr.rel (%p1333) target = $region208
        $region207: #{tpu_custom_call.1} parent=191 // pred_region
          %1337 = dma.done [#allocation9], 128
        $region208: #{tpu_custom_call.1} parent=191 // pred_fallthru
          _
        // Predicated region
        $region209: #{tpu_custom_call.1} parent=191 // pred_check
          %p1338 = pneg %p381
        $region210: #{tpu_custom_call.1} parent=191 // pred_check_branch
          %1340 = sbr.rel (%p1338) target = $region212
        $region211: #{tpu_custom_call.1} parent=191 // pred_region
          %1342 = dma.done [#allocation9], 128
        $region212: #{tpu_custom_call.1} parent=191 // pred_fallthru
          _
        // Predicated region
        $region213: #{tpu_custom_call.1} parent=191 // pred_check
          %p1343 = pneg %p444
        $region214: #{tpu_custom_call.1} parent=191 // pred_check_branch
          %1345 = sbr.rel (%p1343) target = $region216
        $region215: #{tpu_custom_call.1} parent=191 // pred_region
          %1347 = dma.done [#allocation12], 16
        $region216: #{tpu_custom_call.1} parent=191 // pred_fallthru
          _
        // Predicated region
        $region217: #{tpu_custom_call.1} parent=191 // pred_check
          %p1348 = pneg %p465
        $region218: #{tpu_custom_call.1} parent=191 // pred_check_branch
          %1350 = sbr.rel (%p1348) target = $region220
        $region219: #{tpu_custom_call.1} parent=191 // pred_region
          %1352 = dma.done [#allocation12], 128
        $region220: #{tpu_custom_call.1} parent=191 // pred_fallthru
          _
        // Predicated region
        $region221: #{tpu_custom_call.1} parent=191 // pred_check
          %p1353 = pneg %p486
        $region222: #{tpu_custom_call.1} parent=191 // pred_check_branch
          %1355 = sbr.rel (%p1353) target = $region224
        $region223: #{tpu_custom_call.1} parent=191 // pred_region
          %1357 = dma.done [#allocation15], 128
        $region224: #{tpu_custom_call.1} parent=191 // pred_fallthru
          _
        // Predicated region
        $region225: #{tpu_custom_call.1} parent=191 // pred_check
          %p1358 = pneg %p738
        $region226: #{tpu_custom_call.1} parent=191 // pred_check_branch
          %1360 = sbr.rel (%p1358) target = $region228
        $region227: #{tpu_custom_call.1} parent=191 // pred_region
          %1362 = dma.done [#allocation15], 16
        $region228: #{tpu_custom_call.1} parent=191 // pred_fallthru
          _
        // Predicated region
        $region229: #{tpu_custom_call.1} parent=191 // pred_check
          %p1363 = pneg %p843
        $region230: #{tpu_custom_call.1} parent=191 // pred_check_branch
          %1365 = sbr.rel (%p1363) target = $region232
        $region231: #{tpu_custom_call.1} parent=191 // pred_region
          %1367 = dma.done [#allocation18], 16
        $region232: #{tpu_custom_call.1} parent=191 // pred_fallthru
          _
        // Predicated region
        $region233: #{tpu_custom_call.1} parent=191 // pred_check
          %p1368 = pneg %p969
        $region234: #{tpu_custom_call.1} parent=191 // pred_check_branch
          %1370 = sbr.rel (%p1368) target = $region236
        $region235: #{tpu_custom_call.1} parent=191 // pred_region
          %1372 = dma.done [#allocation18], 64
        $region236: #{tpu_custom_call.1} parent=191 // pred_fallthru
          _
        // Predicated region
        $region237: #{tpu_custom_call.1} parent=191 // pred_check
          %p1373 = pneg %p990
        $region238: #{tpu_custom_call.1} parent=191 // pred_check_branch
          %1375 = sbr.rel (%p1373) target = $region240
        $region239: #{tpu_custom_call.1} parent=191 // pred_region
          %1377 = dma.done [#allocation21], 128
        $region240: #{tpu_custom_call.1} parent=191 // pred_fallthru
          _
        // Predicated region
        $region241: #{tpu_custom_call.1} parent=191 // pred_check
          %p1378 = pneg %p1011
        $region242: #{tpu_custom_call.1} parent=191 // pred_check_branch
          %1380 = sbr.rel (%p1378) target = $region244
        $region243: #{tpu_custom_call.1} parent=191 // pred_region
          %1382 = dma.done [#allocation21], 256
        $region244: #{tpu_custom_call.1} parent=191 // pred_fallthru
          _
        %p1383 = scmp.lt.s32.totalorder %s108, 1
        %s1384 = scalar_select %p1383, %s108, 1
        %s1385 = smul.addr %s1384, 2
        %s1386 = smul.addr %s1385, 8
        %s1387 = scalar_lea.vmem %s1, %s1386
        %p1388 = pneg %p129
        %p1389 = pneg %p126
        %p1390 = pneg %p150
        %p1391 = pneg %p147
        %p1392 = pneg %p171
        %p1393 = pneg %p168
        %p1394 = pneg %p192
        %p1395 = pneg %p189
        %p1396 = pneg %p213
        %p1397 = pneg %p210
        %p1398 = pneg %p234
        %p1399 = pneg %p231
        %p1400 = pneg %p255
        %p1401 = pneg %p252
        %p1402 = pneg %p276
        %p1403 = pneg %p273
        %p1404 = pneg %p297
        %p1405 = pneg %p294
        %p1406 = pneg %p318
        %p1407 = pneg %p315
        %p1408 = pneg %p339
        %p1409 = pneg %p336
        %p1410 = pneg %p360
        %p1411 = pneg %p357
        %p1412 = pneg %p381
        %p1413 = pneg %p378
        %p1414 = pneg %p402
        %p1415 = pneg %p399
        %p1416 = pneg %p423
        %p1417 = pneg %p420
        %p1418 = pneg %p444
        %p1419 = pneg %p441
        %p1420 = pneg %p465
        %p1421 = pneg %p462
        %p1422 = pneg %p486
        %p1423 = pneg %p483
        %p1424 = pneg %p507
        %p1425 = pneg %p504
        %p1426 = pneg %p528
        %p1427 = pneg %p525
        %p1428 = pneg %p549
        %p1429 = pneg %p546
        %p1430 = pneg %p570
        %p1431 = pneg %p567
        %p1432 = pneg %p591
        %p1433 = pneg %p588
        %p1434 = pneg %p612
        %p1435 = pneg %p609
        %p1436 = pneg %p633
        %p1437 = pneg %p630
        %p1438 = pneg %p654
        %p1439 = pneg %p651
        %p1440 = pneg %p675
        %p1441 = pneg %p672
        %p1442 = pneg %p696
        %p1443 = pneg %p693
        %p1444 = pneg %p717
        %p1445 = pneg %p714
        %p1446 = pneg %p738
        %p1447 = pneg %p735
        %p1448 = pneg %p759
        %p1449 = pneg %p756
        %p1450 = pneg %p780
        %p1451 = pneg %p777
        %p1452 = pneg %p801
        %p1453 = pneg %p798
        %p1454 = pneg %p822
        %p1455 = pneg %p819
        %p1456 = pneg %p843
        %p1457 = pneg %p840
        %p1458 = pneg %p864
        %p1459 = pneg %p861
        %p1460 = pneg %p885
        %p1461 = pneg %p882
        %p1462 = pneg %p906
        %p1463 = pneg %p903
        %p1464 = pneg %p927
        %p1465 = pneg %p924
        %p1466 = pneg %p948
        %p1467 = pneg %p945
        %p1468 = pneg %p969
        %p1469 = pneg %p966
        %p1470 = pneg %p990
        %p1471 = pneg %p987
        %p1472 = pneg %p1011
        %p1473 = pneg %p1008
        %p1474 = pneg %p1037
        %p1475 = pneg %p1034
        %s1476 = sand.u32 %s1024, 1
        %s1477 = scalar_lea.sflag [#allocation4], %s1476
        %s1478 = sand.u32 %s1024, 1
        %s1479 = smul.addr %s1478, 16
        %s1480 = scalar_lea.vmem [#allocation23], %s1479
        %p1481 = scmp.lt.s32.totalorder %s108, 1
        %s1482 = scalar_select %p1481, %s108, 1
        %s1483 = smul.addr %s1482, 2
        %s1484 = smul.addr %s1483, 8
        %s1485 = scalar_lea.vmem %s1, %s1484
        %v1487 = vld [vmem:[%s1485] sm:$0xff]
        %v1488 = vld [vmem:[%s1485 + $0x8] sm:$0xff]
        %1489 = vxpose.xlu0.b32.start [1/16] %v1487, 128
        %1490 = vxpose.xlu0.b32.cont [2/16] %v1488, 128
        %1491 = vxpose.xlu0.b32.cont [3/16] 0.0, 128
        %1492 = vxpose.xlu0.b32.cont [4/16] 0.0, 128
        %1493 = vxpose.xlu0.b32.cont [5/16] 0.0, 128
        %1494 = vxpose.xlu0.b32.cont [6/16] 0.0, 128
        %1495 = vxpose.xlu0.b32.cont [7/16] 0.0, 128
        %1496 = vxpose.xlu0.b32.cont [8/16] 0.0, 128
        %1497 = vxpose.xlu0.b32.cont [9/16] 0.0, 128
        %1498 = vxpose.xlu0.b32.cont [10/16] 0.0, 128
        %1499 = vxpose.xlu0.b32.cont [11/16] 0.0, 128
        %1500 = vxpose.xlu0.b32.cont [12/16] 0.0, 128
        %1501 = vxpose.xlu0.b32.cont [13/16] 0.0, 128
        %1502 = vxpose.xlu0.b32.cont [14/16] 0.0, 128
        %1503 = vxpose.xlu0.b32.cont [15/16] 0.0, 128
        %1504 = vxpose.xlu0.b32.end [16/16] 0.0, 128
        %v1505 = vpop.trf.xlu0
        %v1506 = vpop.trf.xlu0
        %v1507 = vpop.trf.xlu0
        %v1508 = vpop.trf.xlu0
        %v1509 = vpop.trf.xlu0
        %v1510 = vpop.trf.xlu0
        %v1511 = vpop.trf.xlu0
        %v1512 = vpop.trf.xlu0
        %v1513 = vpop.trf.xlu0
        %v1514 = vpop.trf.xlu0
        %v1515 = vpop.trf.xlu0
        %v1516 = vpop.trf.xlu0
        %v1517 = vpop.trf.xlu0
        %v1518 = vpop.trf.xlu0
        %v1519 = vpop.trf.xlu0
        %v1520 = vpop.trf.xlu0
        %v1521 = vrot.slane %v1505, 7
        %v1522 = vrot.slane %v1506, 7
        %v1523 = vrot.slane %v1507, 7
        %v1524 = vrot.slane %v1508, 7
        %v1525 = vlaneseq
        %v1526 = vshrl.u32 %v1525, 7
        %vm1527 = vcmp.lt.s32.totalorder %v1526, 1
        %v1528 = vsel %vm1527, %v1523, %v1524
        %v1529 = vsel %vm1527, %v1522, %v1523
        %v1530 = vsel %vm1527, %v1521, %v1522
        %v1531 = vsel %vm1527, %v1524, %v1521
        %v1532 = vadd.s32 %v1526, 8
        %v1533 = vadd.s32 %v1526, 16
        %v1534 = vadd.s32 %v1526, 24
        %vm1535 = vcmp.ge.s32.totalorder %v1526, 1
        %vm1536 = vcmp.ge.s32.totalorder %v1532, 1
        %vm1537 = vcmp.ge.s32.totalorder %v1533, 1
        %vm1538 = vcmp.ge.s32.totalorder %v1534, 1
        %v1539 = vsel %vm1535, %v1531, 0.0
        %v1540 = vsel %vm1536, %v1530, 0.0
        %v1541 = vsel %vm1537, %v1529, 0.0
        %v1542 = vsel %vm1538, %v1528, 0.0
        %v1543 = vrot.slane %v1505, 1
        %v1544 = vrot.slane %v1506, 1
        %v1545 = vrot.slane %v1507, 1
        %v1546 = vrot.slane %v1508, 1
        %vm1547 = vcmp.lt.s32.totalorder %v1526, 7
        %v1548 = vsel %vm1547, %v1545, %v1546
        %v1549 = vsel %vm1547, %v1544, %v1545
        %v1550 = vsel %vm1547, %v1543, %v1544
        %v1551 = vsel %vm1547, %v1546, %v1543
        %vm1552 = vcmp.lt.s32.totalorder %v1526, 31
        %vm1553 = vcmp.lt.s32.totalorder %v1532, 31
        %vm1554 = vcmp.lt.s32.totalorder %v1533, 31
        %vm1555 = vcmp.lt.s32.totalorder %v1534, 31
        %v1556 = vsel %vm1552, %v1550, 0.0
        %v1557 = vsel %vm1553, %v1549, 0.0
        %v1558 = vsel %vm1554, %v1548, 0.0
        %v1559 = vsel %vm1555, %v1551, 0.0
        %1564 = vrot.lane.b32.xlu0 %v1505, 16
        %v1565 = vpop.permute.xlu0 %1564
        %1566 = vrot.lane.b32.xlu0 %v1506, 16
        %v1567 = vpop.permute.xlu0 %1566
        %1568 = vrot.lane.b32.xlu0 %v1507, 16
        %v1569 = vpop.permute.xlu0 %1568
        %1570 = vrot.lane.b32.xlu0 %v1508, 16
        %v1571 = vpop.permute.xlu0 %1570
        %1580 = vrot.lane.b32.xlu0 %v1556, 32
        %v1581 = vpop.permute.xlu0 %1580
        %1582 = vrot.lane.b32.xlu0 %v1557, 32
        %v1583 = vpop.permute.xlu0 %1582
        %1584 = vrot.lane.b32.xlu0 %v1558, 32
        %v1585 = vpop.permute.xlu0 %1584
        %1586 = vrot.lane.b32.xlu0 %v1559, 32
        %v1587 = vpop.permute.xlu0 %1586
        %vm1592 = vcmask 130048
        %v1593 = vsel %vm1592, %v1539, %v1565
        %v1594 = vsel %vm1592, %v1540, %v1567
        %v1595 = vsel %vm1592, %v1541, %v1569
        %v1596 = vsel %vm1592, %v1542, %v1571
        %vm1597 = vcmask 261120
        %v1598 = vsel %vm1597, %v1593, %v1581
        %v1599 = vsel %vm1597, %v1594, %v1583
        %v1600 = vsel %vm1597, %v1595, %v1585
        %v1601 = vsel %vm1597, %v1596, %v1587
        %v1602 = vpack.c.bf16 %v1599, %v1598
        %v1603 = vpack.c.bf16 %v1601, %v1600
        %v1604 = vld [vmem:[%s3] sm:$0xf]
        %v1605 = vld [vmem:[%s3 + $0x4] sm:$0xf]
        %v1606 = vld [vmem:[%s3 + $0x8] sm:$0xf]
        %v1607 = vld [vmem:[%s3 + $0xc] sm:$0xf]
        %v1608 = vld [vmem:[%s3 + $0x10] sm:$0xf]
        %v1609 = vld [vmem:[%s3 + $0x14] sm:$0xf]
        %v1610 = vld [vmem:[#allocation2] sm:$0x1]
        %v1612 = vperm.slane %v1610, 0
        %v1620 = vunpack.c.l.b16 %v1604
        %v1621 = vunpack.c.l.b16 %v1605
        %v1622 = vunpack.c.l.b16 %v1606
        %v1623 = vunpack.c.l.b16 %v1607
        %v1624 = vunpack.c.l.b16 %v1608
        %v1625 = vunpack.c.l.b16 %v1609
        %v1626 = vpack.c.b16 %v1621, %v1620
        %v1627 = vpack.c.b16 %v1623, %v1622
        %v1628 = vpack.c.b16 %v1625, %v1624
        %vm1632 = vcmask 392192
        %v1634 = vsel %vm1632, %v1602, 0
        %v1637 = vsel %vm1632, %v1603, 0
        %1639 = vmatpush.bf16.msra.mxu0 0
        %1640 = vmatpush.bf16.msra.mxu0 0
        %1641 = vmatpush.bf16.msra.mxu0 0
        %1642 = vmatpush.bf16.msra.mxu0 0
        %1643 = vmatpush.bf16.msra.mxu0 0
        %1644 = vmatpush.bf16.msra.mxu0 %v1628
        %1645 = vmatpush.bf16.msra.mxu0 %v1627
        %1646 = vmatpush.bf16.msra.mxu0 %v1626
        %1647 = vmatmul.bf16.gmra.mxu0 %v1634
        %v1648 = vpop.f32.mrf.mxu0
        %v1649 = vadd.f32 %v1612, %v1648
        %v1650 = vpop.f32.mrf.mxu0
        %v1651 = vadd.f32 %v1612, %v1650
        %1652 = vmatmul.bf16.gmra.mxu0 %v1637
        %v1653 = vpop.f32.mrf.mxu0
        %v1654 = vadd.f32 %v1612, %v1653
        %v1655 = vpop.f32.mrf.mxu0
        %v1656 = vadd.f32 %v1612, %v1655
        %1657 = vdwg.mxu0
        %vm1658 = vcmask 523264
        %v1659 = vsel %vm1658, %v1649, 0.0
        %1660 = vadd.xlane.f32.xlu0 %v1659
        %v1661 = vpop.xlane.xlu0 %1660
        %v1662 = vsel %vm1658, %v1651, 0.0
        %1663 = vadd.xlane.f32.xlu0 %v1662
        %v1664 = vpop.xlane.xlu0 %1663
        %v1665 = vsel %vm1658, %v1654, 0.0
        %1666 = vadd.xlane.f32.xlu0 %v1665
        %v1667 = vpop.xlane.xlu0 %1666
        %v1668 = vsel %vm1658, %v1656, 0.0
        %1669 = vadd.xlane.f32.xlu0 %v1668
        %v1670 = vpop.xlane.xlu0 %1669
        %v1671 = vadd.f32 %v1661, %v1664
        %v1672 = vadd.f32 %v1671, %v1667
        %v1673 = vadd.f32 %v1672, %v1670
        %v1674 = vrot.slane %v1673, 4
        %v1675 = vadd.f32 %v1673, %v1674
        %v1676 = vrot.slane %v1675, 2
        %v1677 = vadd.f32 %v1675, %v1676
        %v1678 = vrot.slane %v1677, 1
        %v1679 = vadd.f32 %v1677, %v1678
        %v1680 = vrcp.pop 2048.0
        %v1681 = vmul.f32 2048.0, %v1680
        %v1682 = vsub.f32 1.0, %v1681
        %v1683 = vmul.f32 %v1680, %v1682
        %v1684 = vadd.f32 %v1680, %v1683
        %vm1685 = vweird.f32 %v1680
        %v1686 = vsel %vm1685, %v1680, %v1684
        %v1687 = vmul.f32 %v1679, %v1686
        %v1688 = vsub.f32 %v1649, %v1687
        %v1689 = vsub.f32 %v1651, %v1687
        %v1690 = vsub.f32 %v1654, %v1687
        %v1691 = vsub.f32 %v1656, %v1687
        %v1692 = vmul.f32 %v1688, %v1688
        %v1693 = vmul.f32 %v1689, %v1689
        %v1694 = vmul.f32 %v1690, %v1690
        %v1695 = vmul.f32 %v1691, %v1691
        %v1696 = vsel %vm1658, %v1692, 0.0
        %1697 = vadd.xlane.f32.xlu0 %v1696
        %v1698 = vpop.xlane.xlu0 %1697
        %v1699 = vsel %vm1658, %v1693, 0.0
        %1700 = vadd.xlane.f32.xlu0 %v1699
        %v1701 = vpop.xlane.xlu0 %1700
        %v1702 = vsel %vm1658, %v1694, 0.0
        %1703 = vadd.xlane.f32.xlu0 %v1702
        %v1704 = vpop.xlane.xlu0 %1703
        %v1705 = vsel %vm1658, %v1695, 0.0
        %1706 = vadd.xlane.f32.xlu0 %v1705
        %v1707 = vpop.xlane.xlu0 %1706
        %v1708 = vadd.f32 %v1698, %v1701
        %v1709 = vadd.f32 %v1708, %v1704
        %v1710 = vadd.f32 %v1709, %v1707
        %v1711 = vrot.slane %v1710, 4
        %v1712 = vadd.f32 %v1710, %v1711
        %v1713 = vrot.slane %v1712, 2
        %v1714 = vadd.f32 %v1712, %v1713
        %v1715 = vrot.slane %v1714, 1
        %v1716 = vadd.f32 %v1714, %v1715
        %v1717 = vmul.f32 %v1716, %v1686
        %v1718 = vadd.f32 %v1717, 1e-05
        %v1719 = vrsqrt.pop %v1718
        %v1720 = vmul.f32 %v1719, %v1718
        %v1721 = vmul.f32 %v1720, %v1719
        %v1722 = vmul.f32 0.5, %v1721
        %v1723 = vsub.f32 1.5, %v1722
        %v1724 = vmul.f32 %v1719, %v1723
        %vm1725 = vweird.f32 %v1718
        %vm1726 = vweird.f32 %v1719
        %vm1727 = vmor %vm1725, %vm1726
        %v1728 = vsel %vm1727, %v1719, %v1724
        %v1729 = vmul.f32 %v1688, %v1728
        %v1730 = vmul.f32 %v1689, %v1728
        %v1731 = vmul.f32 %v1690, %v1728
        %v1732 = vmul.f32 %v1691, %v1728
        %v1733 = vld [vmem:[%s7] sm:$0xff]
        %v1734 = vld [vmem:[%s7 + $0x8] sm:$0xff]
        %v1735 = vld [vmem:[%s7 + $0x10] sm:$0xff]
        %v1736 = vld [vmem:[%s7 + $0x18] sm:$0xff]
        %v1737 = vmul.f32 %v1729, %v1733
        %v1738 = vmul.f32 %v1730, %v1734
        %v1739 = vmul.f32 %v1731, %v1735
        %v1740 = vmul.f32 %v1732, %v1736
        %v1741 = vld [vmem:[%s9] sm:$0xff]
        %v1742 = vld [vmem:[%s9 + $0x8] sm:$0xff]
        %v1743 = vld [vmem:[%s9 + $0x10] sm:$0xff]
        %v1744 = vld [vmem:[%s9 + $0x18] sm:$0xff]
        %v1745 = vadd.f32 %v1737, %v1741
        %v1746 = vadd.f32 %v1738, %v1742
        %v1747 = vadd.f32 %v1739, %v1743
        %v1748 = vadd.f32 %v1740, %v1744
        %vm1749 = vcmp.gt.f32.partialorder %v1745, 0.0
        %vm1750 = vcmp.gt.f32.partialorder %v1746, 0.0
        %vm1751 = vcmp.gt.f32.partialorder %v1747, 0.0
        %vm1752 = vcmp.gt.f32.partialorder %v1748, 0.0
        %v1753 = vmin.f32 %v1745, 0.0
        %v1754 = vmin.f32 %v1746, 0.0
        %v1755 = vmin.f32 %v1747, 0.0
        %v1756 = vmin.f32 %v1748, 0.0
        %v1757 = vmul.f32 %v1753, 1.442695
        %v1758 = vpow.pop %v1757
        %v1759 = vmul.f32 %v1754, 1.442695
        %v1760 = vpow.pop %v1759
        %v1761 = vmul.f32 %v1755, 1.442695
        %v1762 = vpow.pop %v1761
        %v1763 = vmul.f32 %v1756, 1.442695
        %v1764 = vpow.pop %v1763
        %v1765 = vsub.f32 %v1758, 1.0
        %v1766 = vsub.f32 %v1760, 1.0
        %v1767 = vsub.f32 %v1762, 1.0
        %v1768 = vsub.f32 %v1764, 1.0
        %v1769 = vsel %vm1749, %v1745, %v1765
        %v1770 = vsel %vm1750, %v1746, %v1766
        %v1771 = vsel %vm1751, %v1747, %v1767
        %v1772 = vsel %vm1752, %v1748, %v1768
        %v1773 = vrot.slane %v1769, 1
        %v1774 = vrot.slane %v1770, 1
        %v1775 = vrot.slane %v1771, 1
        %v1776 = vrot.slane %v1772, 1
        %v1777 = vsel %vm1547, %v1775, %v1776
        %v1778 = vsel %vm1547, %v1774, %v1775
        %v1779 = vsel %vm1547, %v1773, %v1774
        %v1780 = vsel %vm1547, %v1776, %v1773
        %v1781 = vsel %vm1552, %v1779, 0.0
        %v1782 = vsel %vm1553, %v1778, 0.0
        %v1783 = vsel %vm1554, %v1777, 0.0
        %v1784 = vsel %vm1555, %v1780, 0.0
        %v1785 = vmax.f32 %v1769, %v1781
        %v1786 = vmax.f32 %v1770, %v1782
        %v1787 = vmax.f32 %v1771, %v1783
        %v1788 = vmax.f32 %v1772, %v1784
        %v1789 = vld [vmem:[%s75] sm:$0xf]
        %v1790 = vld [vmem:[%s75 + $0x4] sm:$0xf]
        %v1791 = vpack.c.bf16 %v1786, %v1785
        %v1792 = vpack.c.bf16 %v1788, %v1787
        %v1795 = vunpack.c.l.b16 %v1789
        %v1796 = vunpack.c.l.b16 %v1790
        %v1797 = vpack.c.b16 %v1796, %v1795
        %v1799 = vsel %vm1597, %v1797, 0
        %1801 = vmatpush.bf16.msra.mxu0 0
        %1802 = vmatpush.bf16.msra.mxu0 0
        %1803 = vmatpush.bf16.msra.mxu0 0
        %1804 = vmatpush.bf16.msra.mxu0 0
        %1805 = vmatpush.bf16.msra.mxu0 0
        %1806 = vmatpush.bf16.msra.mxu0 0
        %1807 = vmatpush.bf16.msra.mxu0 %v1792
        %1808 = vmatpush.bf16.msra.mxu0 %v1791
        %1809 = vmatmul.bf16.gmra.mxu0 %v1799
        %v1810 = vpop.f32.mrf.mxu0
        %v1811 = vadd.f32 0.0, %v1810
        %v1812 = vpop.f32.mrf.mxu0
        %v1813 = vadd.f32 0.0, %v1812
        %1814 = vdwg.mxu0
        %v1815 = vrot.slane %v1811, 7
        %v1816 = vrot.slane %v1813, 7
        %v1817 = vsel %vm1527, %v1815, %v1816
        %v1818 = vsel %vm1527, %v1816, %v1815
        %v1819 = vsel %vm1535, %v1818, 0.0
        %v1820 = vsel %vm1536, %v1817, 0.0
        %v1821 = vrot.slane %v1811, 1
        %v1822 = vrot.slane %v1813, 1
        %v1823 = vsel %vm1547, %v1821, %v1822
        %v1824 = vsel %vm1547, %v1822, %v1821
        %vm1825 = vcmp.lt.s32.totalorder %v1526, 15
        %vm1826 = vcmp.lt.s32.totalorder %v1532, 15
        %v1827 = vsel %vm1825, %v1823, 0.0
        %v1828 = vsel %vm1826, %v1824, 0.0
        %1831 = vrot.lane.b32.xlu0 %v1811, 64
        %v1832 = vpop.permute.xlu0 %1831
        %1833 = vrot.lane.b32.xlu0 %v1813, 64
        %v1834 = vpop.permute.xlu0 %1833
        %v1837 = vsel %vm1658, %v1819, %v1832
        %v1838 = vsel %vm1658, %v1820, %v1834
        %v1839 = vpack.c.bf16 %v1838, %v1837
        %v1840 = vpack.c.bf16 %v1828, %v1827
        %v1841 = vld [vmem:[%s11] sm:$0xf]
        %v1842 = vld [vmem:[%s11 + $0x4] sm:$0xf]
        %v1843 = vld [vmem:[%s11 + $0x8] sm:$0xf]
        %v1844 = vld [vmem:[%s11 + $0xc] sm:$0xf]
        %v1845 = vld [vmem:[%s11 + $0x10] sm:$0xf]
        %v1846 = vld [vmem:[%s11 + $0x14] sm:$0xf]
        %v1847 = vld [vmem:[%s11 + $0x18] sm:$0xf]
        %v1848 = vld [vmem:[%s11 + $0x1c] sm:$0xf]
        %v1849 = vld [vmem:[%s11 + $0x20] sm:$0xf]
        %v1850 = vld [vmem:[%s11 + $0x24] sm:$0xf]
        %v1851 = vld [vmem:[%s11 + $0x28] sm:$0xf]
        %v1852 = vld [vmem:[%s11 + $0x2c] sm:$0xf]
        %v1853 = vld [vmem:[%s11 + $0x30] sm:$0xf]
        %v1854 = vld [vmem:[%s11 + $0x34] sm:$0xf]
        %v1855 = vld [vmem:[%s11 + $0x38] sm:$0xf]
        %v1856 = vld [vmem:[%s11 + $0x3c] sm:$0xf]
        %v1857 = vld [vmem:[%s11 + $0x40] sm:$0xf]
        %v1858 = vld [vmem:[%s11 + $0x44] sm:$0xf]
        %v1859 = vld [vmem:[%s11 + $0x48] sm:$0xf]
        %v1860 = vld [vmem:[%s11 + $0x4c] sm:$0xf]
        %v1861 = vld [vmem:[%s11 + $0x50] sm:$0xf]
        %v1862 = vld [vmem:[%s11 + $0x54] sm:$0xf]
        %v1863 = vld [vmem:[%s11 + $0x58] sm:$0xf]
        %v1864 = vld [vmem:[%s11 + $0x5c] sm:$0xf]
        %v1865 = vld [vmem:[#allocation5] sm:$0x1]
        %v1867 = vperm.slane %v1865, 0
        %v1893 = vunpack.c.l.b16 %v1841
        %v1894 = vunpack.c.l.b16 %v1842
        %v1895 = vunpack.c.l.b16 %v1843
        %v1896 = vunpack.c.l.b16 %v1844
        %v1897 = vunpack.c.l.b16 %v1845
        %v1898 = vunpack.c.l.b16 %v1846
        %v1899 = vunpack.c.l.b16 %v1847
        %v1900 = vunpack.c.l.b16 %v1848
        %v1901 = vunpack.c.l.b16 %v1849
        %v1902 = vunpack.c.l.b16 %v1850
        %v1903 = vunpack.c.l.b16 %v1851
        %v1904 = vunpack.c.l.b16 %v1852
        %v1905 = vunpack.c.l.b16 %v1853
        %v1906 = vunpack.c.l.b16 %v1854
        %v1907 = vunpack.c.l.b16 %v1855
        %v1908 = vunpack.c.l.b16 %v1856
        %v1909 = vunpack.c.l.b16 %v1857
        %v1910 = vunpack.c.l.b16 %v1858
        %v1911 = vunpack.c.l.b16 %v1859
        %v1912 = vunpack.c.l.b16 %v1860
        %v1913 = vunpack.c.l.b16 %v1861
        %v1914 = vunpack.c.l.b16 %v1862
        %v1915 = vunpack.c.l.b16 %v1863
        %v1916 = vunpack.c.l.b16 %v1864
        %v1917 = vpack.c.b16 %v1894, %v1893
        %v1918 = vpack.c.b16 %v1896, %v1895
        %v1919 = vpack.c.b16 %v1898, %v1897
        %v1920 = vpack.c.b16 %v1900, %v1899
        %v1921 = vpack.c.b16 %v1902, %v1901
        %v1922 = vpack.c.b16 %v1904, %v1903
        %v1923 = vpack.c.b16 %v1906, %v1905
        %v1924 = vpack.c.b16 %v1908, %v1907
        %v1925 = vpack.c.b16 %v1910, %v1909
        %v1926 = vpack.c.b16 %v1912, %v1911
        %v1927 = vpack.c.b16 %v1914, %v1913
        %v1928 = vpack.c.b16 %v1916, %v1915
        %v1942 = vsel %vm1658, %v1840, 0
        %1944 = vmatpush.bf16.msra.mxu0 %v1924
        %1945 = vmatpush.bf16.msra.mxu0 %v1923
        %1946 = vmatpush.bf16.msra.mxu0 %v1922
        %1947 = vmatpush.bf16.msra.mxu0 %v1921
        %1948 = vmatpush.bf16.msra.mxu0 %v1920
        %1949 = vmatpush.bf16.msra.mxu0 %v1919
        %1950 = vmatpush.bf16.msra.mxu0 %v1918
        %1951 = vmatpush.bf16.msra.mxu0 %v1917
        %1952 = vmatmul.bf16.gmra.mxu0 %v1839
        %v1953 = vpop.f32.mrf.mxu0
        %v1954 = vadd.f32 %v1867, %v1953
        %v1955 = vpop.f32.mrf.mxu0
        %v1956 = vadd.f32 %v1867, %v1955
        %1957 = vdwg.mxu0
        %1958 = vmatpush.bf16.msra.mxu0 0
        %1959 = vmatpush.bf16.msra.mxu0 0
        %1960 = vmatpush.bf16.msra.mxu0 0
        %1961 = vmatpush.bf16.msra.mxu0 0
        %1962 = vmatpush.bf16.msra.mxu0 %v1928
        %1963 = vmatpush.bf16.msra.mxu0 %v1927
        %1964 = vmatpush.bf16.msra.mxu0 %v1926
        %1965 = vmatpush.bf16.msra.mxu0 %v1925
        %1966 = vmatmul.bf16.gmra.mxu0 %v1942
        %v1967 = vpop.f32.mrf.mxu0
        %v1968 = vadd.f32 %v1954, %v1967
        %v1969 = vpop.f32.mrf.mxu0
        %v1970 = vadd.f32 %v1956, %v1969
        %1971 = vdwg.mxu0
        %1972 = vadd.xlane.f32.xlu0 %v1968
        %v1973 = vpop.xlane.xlu0 %1972
        %1974 = vadd.xlane.f32.xlu0 %v1970
        %v1975 = vpop.xlane.xlu0 %1974
        %v1976 = vadd.f32 %v1973, %v1975
        %v1977 = vrot.slane %v1976, 4
        %v1978 = vadd.f32 %v1976, %v1977
        %v1979 = vrot.slane %v1978, 2
        %v1980 = vadd.f32 %v1978, %v1979
        %v1981 = vrot.slane %v1980, 1
        %v1982 = vadd.f32 %v1980, %v1981
        %v1983 = vmul.f32 %v1982, %v1686
        %v1984 = vsub.f32 %v1968, %v1983
        %v1985 = vsub.f32 %v1970, %v1983
        %v1986 = vmul.f32 %v1984, %v1984
        %v1987 = vmul.f32 %v1985, %v1985
        %1988 = vadd.xlane.f32.xlu0 %v1986
        %v1989 = vpop.xlane.xlu0 %1988
        %1990 = vadd.xlane.f32.xlu0 %v1987
        %v1991 = vpop.xlane.xlu0 %1990
        %v1992 = vadd.f32 %v1989, %v1991
        %v1993 = vrot.slane %v1992, 4
        %v1994 = vadd.f32 %v1992, %v1993
        %v1995 = vrot.slane %v1994, 2
        %v1996 = vadd.f32 %v1994, %v1995
        %v1997 = vrot.slane %v1996, 1
        %v1998 = vadd.f32 %v1996, %v1997
        %v1999 = vmul.f32 %v1998, %v1686
        %v2000 = vadd.f32 %v1999, 1e-05
        %v2001 = vrsqrt.pop %v2000
        %v2002 = vmul.f32 %v2001, %v2000
        %v2003 = vmul.f32 %v2002, %v2001
        %v2004 = vmul.f32 0.5, %v2003
        %v2005 = vsub.f32 1.5, %v2004
        %v2006 = vmul.f32 %v2001, %v2005
        %vm2007 = vweird.f32 %v2000
        %vm2008 = vweird.f32 %v2001
        %vm2009 = vmor %vm2007, %vm2008
        %v2010 = vsel %vm2009, %v2001, %v2006
        %v2011 = vmul.f32 %v1984, %v2010
        %v2012 = vmul.f32 %v1985, %v2010
        %v2013 = vld [vmem:[%s15] sm:$0xff]
        %v2014 = vld [vmem:[%s15 + $0x8] sm:$0xff]
        %v2015 = vmul.f32 %v2011, %v2013
        %v2016 = vmul.f32 %v2012, %v2014
        %v2017 = vld [vmem:[%s17] sm:$0xff]
        %v2018 = vld [vmem:[%s17 + $0x8] sm:$0xff]
        %v2019 = vadd.f32 %v2015, %v2017
        %v2020 = vadd.f32 %v2016, %v2018
        %vm2021 = vcmp.gt.f32.partialorder %v2019, 0.0
        %vm2022 = vcmp.gt.f32.partialorder %v2020, 0.0
        %v2023 = vmin.f32 %v2019, 0.0
        %v2024 = vmin.f32 %v2020, 0.0
        %v2025 = vmul.f32 %v2023, 1.442695
        %v2026 = vpow.pop %v2025
        %v2027 = vmul.f32 %v2024, 1.442695
        %v2028 = vpow.pop %v2027
        %v2029 = vsub.f32 %v2026, 1.0
        %v2030 = vsub.f32 %v2028, 1.0
        %v2031 = vsel %vm2021, %v2019, %v2029
        %v2032 = vsel %vm2022, %v2020, %v2030
        %v2033 = vrot.slane %v2031, 1
        %v2034 = vrot.slane %v2032, 1
        %v2035 = vsel %vm1547, %v2033, %v2034
        %v2036 = vsel %vm1547, %v2034, %v2033
        %v2037 = vsel %vm1825, %v2035, 0.0
        %v2038 = vsel %vm1826, %v2036, 0.0
        %v2039 = vmax.f32 %v2031, %v2037
        %v2040 = vmax.f32 %v2032, %v2038
        %v2041 = vld [vmem:[%s77] sm:$0xf]
        %v2042 = vpack.c.bf16 %v2040, %v2039
        %v2044 = vsel %vm1592, %v2041, 0
        %2046 = vmatpush.bf16.msra.mxu0 0
        %2047 = vmatpush.bf16.msra.mxu0 0
        %2048 = vmatpush.bf16.msra.mxu0 0
        %2049 = vmatpush.bf16.msra.mxu0 0
        %2050 = vmatpush.bf16.msra.mxu0 0
        %2051 = vmatpush.bf16.msra.mxu0 0
        %2052 = vmatpush.bf16.msra.mxu0 0
        %2053 = vmatpush.bf16.msra.mxu0 %v2042
        %2054 = vmatmul.bf16.gmra.mxu0 %v2044
        %v2055 = vpop.f32.mrf.mxu0
        %v2056 = vadd.f32 0.0, %v2055
        %v2057 = vpop.f32.mrf.mxu0
        %2058 = vdwg.mxu0
        %v2059 = vrot.slane %v2056, 7
        %v2060 = vsel %vm1535, %v2059, 0.0
        %v2061 = vrot.slane %v2056, 1
        %v2062 = vsel %vm1547, %v2061, 0.0
        %v2063 = vpack.c.bf16 %v2060, %v2060
        %v2064 = vpack.c.bf16 %v2056, %v2056
        %v2065 = vpack.c.bf16 %v2062, %v2062
        %v2066 = vld [vmem:[%s19] sm:$0xf]
        %v2067 = vld [vmem:[%s19 + $0x4] sm:$0xf]
        %v2068 = vld [vmem:[%s19 + $0x8] sm:$0xf]
        %v2069 = vld [vmem:[%s19 + $0xc] sm:$0xf]
        %v2070 = vld [vmem:[%s19 + $0x10] sm:$0xf]
        %v2071 = vld [vmem:[%s19 + $0x14] sm:$0xf]
        %v2072 = vld [vmem:[%s19 + $0x18] sm:$0xf]
        %v2073 = vld [vmem:[%s19 + $0x1c] sm:$0xf]
        %v2074 = vld [vmem:[%s19 + $0x20] sm:$0xf]
        %v2075 = vld [vmem:[%s19 + $0x24] sm:$0xf]
        %v2076 = vld [vmem:[%s19 + $0x28] sm:$0xf]
        %v2077 = vld [vmem:[%s19 + $0x2c] sm:$0xf]
        %v2078 = vld [vmem:[%s19 + $0x30] sm:$0xf]
        %v2079 = vld [vmem:[%s19 + $0x34] sm:$0xf]
        %v2080 = vld [vmem:[%s19 + $0x38] sm:$0xf]
        %v2081 = vld [vmem:[%s19 + $0x3c] sm:$0xf]
        %v2082 = vld [vmem:[%s19 + $0x40] sm:$0xf]
        %v2083 = vld [vmem:[%s19 + $0x44] sm:$0xf]
        %v2084 = vld [vmem:[%s19 + $0x48] sm:$0xf]
        %v2085 = vld [vmem:[%s19 + $0x4c] sm:$0xf]
        %v2086 = vld [vmem:[%s19 + $0x50] sm:$0xf]
        %v2087 = vld [vmem:[%s19 + $0x54] sm:$0xf]
        %v2088 = vld [vmem:[%s19 + $0x58] sm:$0xf]
        %v2089 = vld [vmem:[%s19 + $0x5c] sm:$0xf]
        %v2090 = vld [vmem:[%s19 + $0x60] sm:$0xf]
        %v2091 = vld [vmem:[%s19 + $0x64] sm:$0xf]
        %v2092 = vld [vmem:[%s19 + $0x68] sm:$0xf]
        %v2093 = vld [vmem:[%s19 + $0x6c] sm:$0xf]
        %v2094 = vld [vmem:[%s19 + $0x70] sm:$0xf]
        %v2095 = vld [vmem:[%s19 + $0x74] sm:$0xf]
        %v2096 = vld [vmem:[%s19 + $0x78] sm:$0xf]
        %v2097 = vld [vmem:[%s19 + $0x7c] sm:$0xf]
        %v2098 = vld [vmem:[%s19 + $0x80] sm:$0xf]
        %v2099 = vld [vmem:[%s19 + $0x84] sm:$0xf]
        %v2100 = vld [vmem:[%s19 + $0x88] sm:$0xf]
        %v2101 = vld [vmem:[%s19 + $0x8c] sm:$0xf]
        %v2102 = vld [vmem:[%s19 + $0x90] sm:$0xf]
        %v2103 = vld [vmem:[%s19 + $0x94] sm:$0xf]
        %v2104 = vld [vmem:[%s19 + $0x98] sm:$0xf]
        %v2105 = vld [vmem:[%s19 + $0x9c] sm:$0xf]
        %v2106 = vld [vmem:[%s19 + $0xa0] sm:$0xf]
        %v2107 = vld [vmem:[%s19 + $0xa4] sm:$0xf]
        %v2108 = vld [vmem:[%s19 + $0xa8] sm:$0xf]
        %v2109 = vld [vmem:[%s19 + $0xac] sm:$0xf]
        %v2110 = vld [vmem:[%s19 + $0xb0] sm:$0xf]
        %v2111 = vld [vmem:[%s19 + $0xb4] sm:$0xf]
        %v2112 = vld [vmem:[%s19 + $0xb8] sm:$0xf]
        %v2113 = vld [vmem:[%s19 + $0xbc] sm:$0xf]
        %v2114 = vld [vmem:[#allocation7] sm:$0x1]
        %v2116 = vperm.slane %v2114, 0
        %v2166 = vunpack.c.l.b16 %v2066
        %v2167 = vunpack.c.l.b16 %v2067
        %v2168 = vunpack.c.l.b16 %v2068
        %v2169 = vunpack.c.l.b16 %v2069
        %v2170 = vunpack.c.l.b16 %v2070
        %v2171 = vunpack.c.l.b16 %v2071
        %v2172 = vunpack.c.l.b16 %v2072
        %v2173 = vunpack.c.l.b16 %v2073
        %v2174 = vunpack.c.l.b16 %v2074
        %v2175 = vunpack.c.l.b16 %v2075
        %v2176 = vunpack.c.l.b16 %v2076
        %v2177 = vunpack.c.l.b16 %v2077
        %v2178 = vunpack.c.l.b16 %v2078
        %v2179 = vunpack.c.l.b16 %v2079
        %v2180 = vunpack.c.l.b16 %v2080
        %v2181 = vunpack.c.l.b16 %v2081
        %v2182 = vunpack.c.l.b16 %v2082
        %v2183 = vunpack.c.l.b16 %v2083
        %v2184 = vunpack.c.l.b16 %v2084
        %v2185 = vunpack.c.l.b16 %v2085
        %v2186 = vunpack.c.l.b16 %v2086
        %v2187 = vunpack.c.l.b16 %v2087
        %v2188 = vunpack.c.l.b16 %v2088
        %v2189 = vunpack.c.l.b16 %v2089
        %v2190 = vunpack.c.l.b16 %v2090
        %v2191 = vunpack.c.l.b16 %v2091
        %v2192 = vunpack.c.l.b16 %v2092
        %v2193 = vunpack.c.l.b16 %v2093
        %v2194 = vunpack.c.l.b16 %v2094
        %v2195 = vunpack.c.l.b16 %v2095
        %v2196 = vunpack.c.l.b16 %v2096
        %v2197 = vunpack.c.l.b16 %v2097
        %v2198 = vunpack.c.l.b16 %v2098
        %v2199 = vunpack.c.l.b16 %v2099
        %v2200 = vunpack.c.l.b16 %v2100
        %v2201 = vunpack.c.l.b16 %v2101
        %v2202 = vunpack.c.l.b16 %v2102
        %v2203 = vunpack.c.l.b16 %v2103
        %v2204 = vunpack.c.l.b16 %v2104
        %v2205 = vunpack.c.l.b16 %v2105
        %v2206 = vunpack.c.l.b16 %v2106
        %v2207 = vunpack.c.l.b16 %v2107
        %v2208 = vunpack.c.l.b16 %v2108
        %v2209 = vunpack.c.l.b16 %v2109
        %v2210 = vunpack.c.l.b16 %v2110
        %v2211 = vunpack.c.l.b16 %v2111
        %v2212 = vunpack.c.l.b16 %v2112
        %v2213 = vunpack.c.l.b16 %v2113
        %v2214 = vpack.c.b16 %v2167, %v2166
        %v2215 = vpack.c.b16 %v2169, %v2168
        %v2216 = vpack.c.b16 %v2171, %v2170
        %v2217 = vpack.c.b16 %v2173, %v2172
        %v2218 = vpack.c.b16 %v2175, %v2174
        %v2219 = vpack.c.b16 %v2177, %v2176
        %v2220 = vpack.c.b16 %v2179, %v2178
        %v2221 = vpack.c.b16 %v2181, %v2180
        %v2222 = vpack.c.b16 %v2183, %v2182
        %v2223 = vpack.c.b16 %v2185, %v2184
        %v2224 = vpack.c.b16 %v2187, %v2186
        %v2225 = vpack.c.b16 %v2189, %v2188
        %v2226 = vpack.c.b16 %v2191, %v2190
        %v2227 = vpack.c.b16 %v2193, %v2192
        %v2228 = vpack.c.b16 %v2195, %v2194
        %v2229 = vpack.c.b16 %v2197, %v2196
        %v2230 = vpack.c.b16 %v2199, %v2198
        %v2231 = vpack.c.b16 %v2201, %v2200
        %v2232 = vpack.c.b16 %v2203, %v2202
        %v2233 = vpack.c.b16 %v2205, %v2204
        %v2234 = vpack.c.b16 %v2207, %v2206
        %v2235 = vpack.c.b16 %v2209, %v2208
        %v2236 = vpack.c.b16 %v2211, %v2210
        %v2237 = vpack.c.b16 %v2213, %v2212
        %2262 = vmatpush.bf16.msra.mxu0 %v2221
        %2263 = vmatpush.bf16.msra.mxu0 %v2220
        %2264 = vmatpush.bf16.msra.mxu0 %v2219
        %2265 = vmatpush.bf16.msra.mxu0 %v2218
        %2266 = vmatpush.bf16.msra.mxu0 %v2217
        %2267 = vmatpush.bf16.msra.mxu0 %v2216
        %2268 = vmatpush.bf16.msra.mxu0 %v2215
        %2269 = vmatpush.bf16.msra.mxu0 %v2214
        %2270 = vmatmul.bf16.gmra.mxu0 %v2063
        %v2271 = vpop.f32.mrf.mxu0
        %v2272 = vadd.f32 %v2116, %v2271
        %v2273 = vpop.f32.mrf.mxu0
        %2274 = vdwg.mxu0
        %2275 = vmatpush.bf16.msra.mxu0 %v2229
        %2276 = vmatpush.bf16.msra.mxu0 %v2228
        %2277 = vmatpush.bf16.msra.mxu0 %v2227
        %2278 = vmatpush.bf16.msra.mxu0 %v2226
        %2279 = vmatpush.bf16.msra.mxu0 %v2225
        %2280 = vmatpush.bf16.msra.mxu0 %v2224
        %2281 = vmatpush.bf16.msra.mxu0 %v2223
        %2282 = vmatpush.bf16.msra.mxu0 %v2222
        %2283 = vmatmul.bf16.gmra.mxu0 %v2064
        %v2284 = vpop.f32.mrf.mxu0
        %v2285 = vadd.f32 %v2272, %v2284
        %v2286 = vpop.f32.mrf.mxu0
        %2287 = vdwg.mxu0
        %2288 = vmatpush.bf16.msra.mxu0 %v2237
        %2289 = vmatpush.bf16.msra.mxu0 %v2236
        %2290 = vmatpush.bf16.msra.mxu0 %v2235
        %2291 = vmatpush.bf16.msra.mxu0 %v2234
        %2292 = vmatpush.bf16.msra.mxu0 %v2233
        %2293 = vmatpush.bf16.msra.mxu0 %v2232
        %2294 = vmatpush.bf16.msra.mxu0 %v2231
        %2295 = vmatpush.bf16.msra.mxu0 %v2230
        %2296 = vmatmul.bf16.gmra.mxu0 %v2065
        %v2297 = vpop.f32.mrf.mxu0
        %v2298 = vadd.f32 %v2285, %v2297
        %v2299 = vpop.f32.mrf.mxu0
        %2300 = vdwg.mxu0
        %2301 = vadd.xlane.f32.xlu0 %v2298
        %v2302 = vpop.xlane.xlu0 %2301
        %v2303 = vrot.slane %v2302, 4
        %v2304 = vadd.f32 %v2302, %v2303
        %v2305 = vrot.slane %v2304, 2
        %v2306 = vadd.f32 %v2304, %v2305
        %v2307 = vrot.slane %v2306, 1
        %v2308 = vadd.f32 %v2306, %v2307
        %v2309 = vrcp.pop 1024.0
        %v2310 = vmul.f32 1024.0, %v2309
        %v2311 = vsub.f32 1.0, %v2310
        %v2312 = vmul.f32 %v2309, %v2311
        %v2313 = vadd.f32 %v2309, %v2312
        %vm2314 = vweird.f32 %v2309
        %v2315 = vsel %vm2314, %v2309, %v2313
        %v2316 = vmul.f32 %v2308, %v2315
        %v2317 = vsub.f32 %v2298, %v2316
        %v2318 = vmul.f32 %v2317, %v2317
        %2319 = vadd.xlane.f32.xlu0 %v2318
        %v2320 = vpop.xlane.xlu0 %2319
        %v2321 = vrot.slane %v2320, 4
        %v2322 = vadd.f32 %v2320, %v2321
        %v2323 = vrot.slane %v2322, 2
        %v2324 = vadd.f32 %v2322, %v2323
        %v2325 = vrot.slane %v2324, 1
        %v2326 = vadd.f32 %v2324, %v2325
        %v2327 = vmul.f32 %v2326, %v2315
        %v2328 = vadd.f32 %v2327, 1e-05
        %v2329 = vrsqrt.pop %v2328
        %v2330 = vmul.f32 %v2329, %v2328
        %v2331 = vmul.f32 %v2330, %v2329
        %v2332 = vmul.f32 0.5, %v2331
        %v2333 = vsub.f32 1.5, %v2332
        %v2334 = vmul.f32 %v2329, %v2333
        %vm2335 = vweird.f32 %v2328
        %vm2336 = vweird.f32 %v2329
        %vm2337 = vmor %vm2335, %vm2336
        %v2338 = vsel %vm2337, %v2329, %v2334
        %v2339 = vmul.f32 %v2317, %v2338
        %v2340 = vld [vmem:[#allocation8] sm:$0xff]
        %v2341 = vmul.f32 %v2339, %v2340
        %v2342 = vld [vmem:[#allocation10] sm:$0xff]
        %v2343 = vadd.f32 %v2341, %v2342
        %vm2344 = vcmp.gt.f32.partialorder %v2343, 0.0
        %v2345 = vmin.f32 %v2343, 0.0
        %v2346 = vmul.f32 %v2345, 1.442695
        %v2347 = vpow.pop %v2346
        %v2348 = vsub.f32 %v2347, 1.0
        %v2349 = vsel %vm2344, %v2343, %v2348
        %v2350 = vrot.slane %v2349, 1
        %v2351 = vsel %vm1547, %v2350, 0.0
        %v2352 = vmax.f32 %v2349, %v2351
        %v2353 = vld [vmem:[%s79] sm:$0x3]
        %v2354 = vpack.c.bf16 %v2352, %v2352
        %vm2355 = vcmask 64512
        %v2357 = vsel %vm2355, %v2353, 0
        %vm2359 = vcmask 1043456
        %v2361 = vsel %vm2359, %v2354, 0
        %2363 = vmatpush.bf16.msra.mxu0 0
        %2364 = vmatpush.bf16.msra.mxu0 0
        %2365 = vmatpush.bf16.msra.mxu0 0
        %2366 = vmatpush.bf16.msra.mxu0 0
        %2367 = vmatpush.bf16.msra.mxu0 0
        %2368 = vmatpush.bf16.msra.mxu0 0
        %2369 = vmatpush.bf16.msra.mxu0 0
        %2370 = vmatpush.bf16.msra.mxu0 %v2361
        %2371 = vmatmul.bf16.gmra.mxu0 %v2357
        %v2372 = vpop.f32.mrf.mxu0
        %v2373 = vadd.f32 0.0, %v2372
        %v2374 = vpop.f32.mrf.mxu0
        %2375 = vdwg.mxu0
        %v2376 = vpack.c.bf16 %v2373, %v2373
        %v2377 = vld [vmem:[%s27] sm:$0xf]
        %v2378 = vld [vmem:[%s27 + $0x4] sm:$0xf]
        %v2379 = vld [vmem:[%s27 + $0x8] sm:$0xf]
        %v2380 = vld [vmem:[%s27 + $0xc] sm:$0xf]
        %v2381 = vld [vmem:[%s27 + $0x10] sm:$0xf]
        %v2382 = vld [vmem:[%s27 + $0x14] sm:$0xf]
        %v2383 = vld [vmem:[%s27 + $0x18] sm:$0xf]
        %v2384 = vld [vmem:[%s27 + $0x1c] sm:$0xf]
        %v2385 = vld [vmem:[%s27 + $0x20] sm:$0xf]
        %v2386 = vld [vmem:[%s27 + $0x24] sm:$0xf]
        %v2387 = vld [vmem:[%s27 + $0x28] sm:$0xf]
        %v2388 = vld [vmem:[%s27 + $0x2c] sm:$0xf]
        %v2389 = vld [vmem:[%s27 + $0x30] sm:$0xf]
        %v2390 = vld [vmem:[%s27 + $0x34] sm:$0xf]
        %v2391 = vld [vmem:[%s27 + $0x38] sm:$0xf]
        %v2392 = vld [vmem:[%s27 + $0x3c] sm:$0xf]
        %v2409 = vunpack.c.l.b16 %v2377
        %v2410 = vunpack.c.l.b16 %v2378
        %v2411 = vunpack.c.l.b16 %v2379
        %v2412 = vunpack.c.l.b16 %v2380
        %v2413 = vunpack.c.l.b16 %v2381
        %v2414 = vunpack.c.l.b16 %v2382
        %v2415 = vunpack.c.l.b16 %v2383
        %v2416 = vunpack.c.l.b16 %v2384
        %v2417 = vunpack.c.l.b16 %v2385
        %v2418 = vunpack.c.l.b16 %v2386
        %v2419 = vunpack.c.l.b16 %v2387
        %v2420 = vunpack.c.l.b16 %v2388
        %v2421 = vunpack.c.l.b16 %v2389
        %v2422 = vunpack.c.l.b16 %v2390
        %v2423 = vunpack.c.l.b16 %v2391
        %v2424 = vunpack.c.l.b16 %v2392
        %v2425 = vpack.c.b16 %v2410, %v2409
        %v2426 = vpack.c.b16 %v2412, %v2411
        %v2427 = vpack.c.b16 %v2414, %v2413
        %v2428 = vpack.c.b16 %v2416, %v2415
        %v2429 = vpack.c.b16 %v2418, %v2417
        %v2430 = vpack.c.b16 %v2420, %v2419
        %v2431 = vpack.c.b16 %v2422, %v2421
        %v2432 = vpack.c.b16 %v2424, %v2423
        %2441 = vmatpush.bf16.msra.mxu0 %v2432
        %2442 = vmatpush.bf16.msra.mxu0 %v2431
        %2443 = vmatpush.bf16.msra.mxu0 %v2430
        %2444 = vmatpush.bf16.msra.mxu0 %v2429
        %2445 = vmatpush.bf16.msra.mxu0 %v2428
        %2446 = vmatpush.bf16.msra.mxu0 %v2427
        %2447 = vmatpush.bf16.msra.mxu0 %v2426
        %2448 = vmatpush.bf16.msra.mxu0 %v2425
        %2449 = vmatmul.bf16.gmra.mxu0 %v2376
        %v2450 = vpop.f32.mrf.mxu0
        %v2451 = vadd.f32 0.0, %v2450
        %v2452 = vpop.f32.mrf.mxu0
        %2453 = vdwg.mxu0
        %vm2454 = vcmask 1047556
        %v2455 = vrot.slane %v2373, 4
        %v2456 = vsel %vm2454, %v2455, %v2373
        %v2457 = vrot.slane %v2456, 4
        %v2458 = vsel %vm2454, %v2457, %v2373
        %vm2459 = vcmp.lt.s32.totalorder %v1526, 3
        %v2461 = vrot.slane %v2458, 1
        %v2463 = vsel %vm2459, %v2461, 0.0
        %v2464 = vpack.c.bf16 %v2463, %v2463
        %v2465 = vld [vmem:[%s29] sm:$0xf]
        %v2466 = vld [vmem:[%s29 + $0x4] sm:$0xf]
        %v2467 = vld [vmem:[%s29 + $0x8] sm:$0xf]
        %v2468 = vld [vmem:[%s29 + $0xc] sm:$0xf]
        %v2469 = vld [vmem:[%s29 + $0x10] sm:$0xf]
        %v2470 = vld [vmem:[%s29 + $0x14] sm:$0xf]
        %v2471 = vld [vmem:[%s29 + $0x18] sm:$0xf]
        %v2472 = vld [vmem:[%s29 + $0x1c] sm:$0xf]
        %v2473 = vld [vmem:[%s29 + $0x20] sm:$0xf]
        %v2474 = vld [vmem:[%s29 + $0x24] sm:$0xf]
        %v2475 = vld [vmem:[%s29 + $0x28] sm:$0xf]
        %v2476 = vld [vmem:[%s29 + $0x2c] sm:$0xf]
        %v2477 = vld [vmem:[%s29 + $0x30] sm:$0xf]
        %v2478 = vld [vmem:[%s29 + $0x34] sm:$0xf]
        %v2479 = vld [vmem:[%s29 + $0x38] sm:$0xf]
        %v2480 = vld [vmem:[%s29 + $0x3c] sm:$0xf]
        %v2481 = vld [vmem:[%s29 + $0x40] sm:$0xf]
        %v2482 = vld [vmem:[%s29 + $0x44] sm:$0xf]
        %v2483 = vld [vmem:[%s29 + $0x48] sm:$0xf]
        %v2484 = vld [vmem:[%s29 + $0x4c] sm:$0xf]
        %v2485 = vld [vmem:[%s29 + $0x50] sm:$0xf]
        %v2486 = vld [vmem:[%s29 + $0x54] sm:$0xf]
        %v2487 = vld [vmem:[%s29 + $0x58] sm:$0xf]
        %v2488 = vld [vmem:[%s29 + $0x5c] sm:$0xf]
        %v2489 = vld [vmem:[%s29 + $0x60] sm:$0xf]
        %v2490 = vld [vmem:[%s29 + $0x64] sm:$0xf]
        %v2491 = vld [vmem:[%s29 + $0x68] sm:$0xf]
        %v2492 = vld [vmem:[%s29 + $0x6c] sm:$0xf]
        %v2493 = vld [vmem:[%s29 + $0x70] sm:$0xf]
        %v2494 = vld [vmem:[%s29 + $0x74] sm:$0xf]
        %v2495 = vld [vmem:[%s29 + $0x78] sm:$0xf]
        %v2496 = vld [vmem:[%s29 + $0x7c] sm:$0xf]
        %v2529 = vunpack.c.l.b16 %v2465
        %v2530 = vunpack.c.l.b16 %v2466
        %v2531 = vunpack.c.l.b16 %v2467
        %v2532 = vunpack.c.l.b16 %v2468
        %v2533 = vunpack.c.l.b16 %v2469
        %v2534 = vunpack.c.l.b16 %v2470
        %v2535 = vunpack.c.l.b16 %v2471
        %v2536 = vunpack.c.l.b16 %v2472
        %v2537 = vunpack.c.l.b16 %v2473
        %v2538 = vunpack.c.l.b16 %v2474
        %v2539 = vunpack.c.l.b16 %v2475
        %v2540 = vunpack.c.l.b16 %v2476
        %v2541 = vunpack.c.l.b16 %v2477
        %v2542 = vunpack.c.l.b16 %v2478
        %v2543 = vunpack.c.l.b16 %v2479
        %v2544 = vunpack.c.l.b16 %v2480
        %v2545 = vunpack.c.l.b16 %v2481
        %v2546 = vunpack.c.l.b16 %v2482
        %v2547 = vunpack.c.l.b16 %v2483
        %v2548 = vunpack.c.l.b16 %v2484
        %v2549 = vunpack.c.l.b16 %v2485
        %v2550 = vunpack.c.l.b16 %v2486
        %v2551 = vunpack.c.l.b16 %v2487
        %v2552 = vunpack.c.l.b16 %v2488
        %v2553 = vunpack.c.l.b16 %v2489
        %v2554 = vunpack.c.l.b16 %v2490
        %v2555 = vunpack.c.l.b16 %v2491
        %v2556 = vunpack.c.l.b16 %v2492
        %v2557 = vunpack.c.l.b16 %v2493
        %v2558 = vunpack.c.l.b16 %v2494
        %v2559 = vunpack.c.l.b16 %v2495
        %v2560 = vunpack.c.l.b16 %v2496
        %v2561 = vpack.c.b16 %v2530, %v2529
        %v2562 = vpack.c.b16 %v2532, %v2531
        %v2563 = vpack.c.b16 %v2534, %v2533
        %v2564 = vpack.c.b16 %v2536, %v2535
        %v2565 = vpack.c.b16 %v2538, %v2537
        %v2566 = vpack.c.b16 %v2540, %v2539
        %v2567 = vpack.c.b16 %v2542, %v2541
        %v2568 = vpack.c.b16 %v2544, %v2543
        %v2569 = vpack.c.b16 %v2546, %v2545
        %v2570 = vpack.c.b16 %v2548, %v2547
        %v2571 = vpack.c.b16 %v2550, %v2549
        %v2572 = vpack.c.b16 %v2552, %v2551
        %v2573 = vpack.c.b16 %v2554, %v2553
        %v2574 = vpack.c.b16 %v2556, %v2555
        %v2575 = vpack.c.b16 %v2558, %v2557
        %v2576 = vpack.c.b16 %v2560, %v2559
        %2593 = vmatpush.bf16.msra.mxu0 %v2568
        %2594 = vmatpush.bf16.msra.mxu0 %v2567
        %2595 = vmatpush.bf16.msra.mxu0 %v2566
        %2596 = vmatpush.bf16.msra.mxu0 %v2565
        %2597 = vmatpush.bf16.msra.mxu0 %v2564
        %2598 = vmatpush.bf16.msra.mxu0 %v2563
        %2599 = vmatpush.bf16.msra.mxu0 %v2562
        %2600 = vmatpush.bf16.msra.mxu0 %v2561
        %2601 = vmatmul.bf16.gmra.mxu0 %v2376
        %v2602 = vpop.f32.mrf.mxu0
        %v2603 = vadd.f32 0.0, %v2602
        %v2604 = vpop.f32.mrf.mxu0
        %2605 = vdwg.mxu0
        %2606 = vmatpush.bf16.msra.mxu0 %v2576
        %2607 = vmatpush.bf16.msra.mxu0 %v2575
        %2608 = vmatpush.bf16.msra.mxu0 %v2574
        %2609 = vmatpush.bf16.msra.mxu0 %v2573
        %2610 = vmatpush.bf16.msra.mxu0 %v2572
        %2611 = vmatpush.bf16.msra.mxu0 %v2571
        %2612 = vmatpush.bf16.msra.mxu0 %v2570
        %2613 = vmatpush.bf16.msra.mxu0 %v2569
        %2614 = vmatmul.bf16.gmra.mxu0 %v2464
        %v2615 = vpop.f32.mrf.mxu0
        %v2616 = vadd.f32 %v2603, %v2615
        %v2617 = vpop.f32.mrf.mxu0
        %2618 = vdwg.mxu0
        %v2620 = vrot.slane %v2616, 4
        %v2622 = vsel %vm2359, %v2451, %v2620
        %v2623 = vld [vmem:[#allocation19] sm:$0xf]
        %v2624 = vpack.c.bf16 %v2622, %v2622
        %v2625 = vld [vmem:[#allocation11] sm:$0x1]
        %v2627 = vperm.slane %v2625, 0
        %v2630 = vsel %vm2355, %v2623, 0
        %v2633 = vsel %vm2359, %v2624, 0
        %2635 = vmatpush.bf16.msra.mxu0 0
        %2636 = vmatpush.bf16.msra.mxu0 0
        %2637 = vmatpush.bf16.msra.mxu0 0
        %2638 = vmatpush.bf16.msra.mxu0 0
        %2639 = vmatpush.bf16.msra.mxu0 0
        %2640 = vmatpush.bf16.msra.mxu0 0
        %2641 = vmatpush.bf16.msra.mxu0 0
        %2642 = vmatpush.bf16.msra.mxu0 %v2633
        %2643 = vmatmul.bf16.gmra.mxu0 %v2630
        %v2644 = vpop.f32.mrf.mxu0
        %v2645 = vadd.f32 %v2627, %v2644
        %v2646 = vpop.f32.mrf.mxu0
        %2647 = vdwg.mxu0
        %2648 = vadd.xlane.f32.xlu0 %v2645
        %v2649 = vpop.xlane.xlu0 %2648
        %v2650 = vrot.slane %v2649, 4
        %v2651 = vadd.f32 %v2649, %v2650
        %v2652 = vrot.slane %v2651, 2
        %v2653 = vadd.f32 %v2651, %v2652
        %v2654 = vrot.slane %v2653, 1
        %v2655 = vadd.f32 %v2653, %v2654
        %v2656 = vmul.f32 %v2655, %v2315
        %v2657 = vsub.f32 %v2645, %v2656
        %v2658 = vmul.f32 %v2657, %v2657
        %2659 = vadd.xlane.f32.xlu0 %v2658
        %v2660 = vpop.xlane.xlu0 %2659
        %v2661 = vrot.slane %v2660, 4
        %v2662 = vadd.f32 %v2660, %v2661
        %v2663 = vrot.slane %v2662, 2
        %v2664 = vadd.f32 %v2662, %v2663
        %v2665 = vrot.slane %v2664, 1
        %v2666 = vadd.f32 %v2664, %v2665
        %v2667 = vmul.f32 %v2666, %v2315
        %v2668 = vadd.f32 %v2667, 1e-05
        %v2669 = vrsqrt.pop %v2668
        %v2670 = vmul.f32 %v2669, %v2668
        %v2671 = vmul.f32 %v2670, %v2669
        %v2672 = vmul.f32 0.5, %v2671
        %v2673 = vsub.f32 1.5, %v2672
        %v2674 = vmul.f32 %v2669, %v2673
        %vm2675 = vweird.f32 %v2668
        %vm2676 = vweird.f32 %v2669
        %vm2677 = vmor %vm2675, %vm2676
        %v2678 = vsel %vm2677, %v2669, %v2674
        %v2679 = vmul.f32 %v2657, %v2678
        %v2680 = vld [vmem:[#allocation13] sm:$0xff]
        %v2681 = vmul.f32 %v2679, %v2680
        %v2682 = vld [vmem:[#allocation14] sm:$0xff]
        %v2683 = vadd.f32 %v2681, %v2682
        %vm2684 = vcmp.gt.f32.partialorder %v2683, 0.0
        %v2685 = vmin.f32 %v2683, 0.0
        %v2686 = vmul.f32 %v2685, 1.442695
        %v2687 = vpow.pop %v2686
        %v2688 = vsub.f32 %v2687, 1.0
        %v2689 = vsel %vm2684, %v2683, %v2688
        %v2690 = vld [vmem:[%s37] sm:$0xf]
        %v2691 = vld [vmem:[%s37 + $0x4] sm:$0xf]
        %v2692 = vld [vmem:[%s37 + $0x8] sm:$0xf]
        %v2693 = vld [vmem:[%s37 + $0xc] sm:$0xf]
        %v2694 = vld [vmem:[%s37 + $0x10] sm:$0xf]
        %v2695 = vld [vmem:[%s37 + $0x14] sm:$0xf]
        %v2696 = vld [vmem:[%s37 + $0x18] sm:$0xf]
        %v2697 = vld [vmem:[%s37 + $0x1c] sm:$0xf]
        %v2698 = vld [vmem:[%s37 + $0x20] sm:$0xf]
        %v2699 = vld [vmem:[%s37 + $0x24] sm:$0xf]
        %v2700 = vld [vmem:[%s37 + $0x28] sm:$0xf]
        %v2701 = vld [vmem:[%s37 + $0x2c] sm:$0xf]
        %v2702 = vld [vmem:[%s37 + $0x30] sm:$0xf]
        %v2703 = vld [vmem:[%s37 + $0x34] sm:$0xf]
        %v2704 = vld [vmem:[%s37 + $0x38] sm:$0xf]
        %v2705 = vld [vmem:[%s37 + $0x3c] sm:$0xf]
        %v2706 = vld [vmem:[%s39] sm:$0xf]
        %v2707 = vld [vmem:[%s39 + $0x4] sm:$0xf]
        %v2708 = vld [vmem:[%s39 + $0x8] sm:$0xf]
        %v2709 = vld [vmem:[%s39 + $0xc] sm:$0xf]
        %v2710 = vld [vmem:[%s39 + $0x10] sm:$0xf]
        %v2711 = vld [vmem:[%s39 + $0x14] sm:$0xf]
        %v2712 = vld [vmem:[%s39 + $0x18] sm:$0xf]
        %v2713 = vld [vmem:[%s39 + $0x1c] sm:$0xf]
        %v2714 = vld [vmem:[%s39 + $0x20] sm:$0xf]
        %v2715 = vld [vmem:[%s39 + $0x24] sm:$0xf]
        %v2716 = vld [vmem:[%s39 + $0x28] sm:$0xf]
        %v2717 = vld [vmem:[%s39 + $0x2c] sm:$0xf]
        %v2718 = vld [vmem:[%s39 + $0x30] sm:$0xf]
        %v2719 = vld [vmem:[%s39 + $0x34] sm:$0xf]
        %v2720 = vld [vmem:[%s39 + $0x38] sm:$0xf]
        %v2721 = vld [vmem:[%s39 + $0x3c] sm:$0xf]
        %v2722 = vld [vmem:[%s39 + $0x40] sm:$0xf]
        %v2723 = vld [vmem:[%s39 + $0x44] sm:$0xf]
        %v2724 = vld [vmem:[%s39 + $0x48] sm:$0xf]
        %v2725 = vld [vmem:[%s39 + $0x4c] sm:$0xf]
        %v2726 = vld [vmem:[%s39 + $0x50] sm:$0xf]
        %v2727 = vld [vmem:[%s39 + $0x54] sm:$0xf]
        %v2728 = vld [vmem:[%s39 + $0x58] sm:$0xf]
        %v2729 = vld [vmem:[%s39 + $0x5c] sm:$0xf]
        %v2730 = vld [vmem:[%s39 + $0x60] sm:$0xf]
        %v2731 = vld [vmem:[%s39 + $0x64] sm:$0xf]
        %v2732 = vld [vmem:[%s39 + $0x68] sm:$0xf]
        %v2733 = vld [vmem:[%s39 + $0x6c] sm:$0xf]
        %v2734 = vld [vmem:[%s39 + $0x70] sm:$0xf]
        %v2735 = vld [vmem:[%s39 + $0x74] sm:$0xf]
        %v2736 = vld [vmem:[%s39 + $0x78] sm:$0xf]
        %v2737 = vld [vmem:[%s39 + $0x7c] sm:$0xf]
        %v2738 = vpack.c.bf16 %v2689, %v2689
        %v2739 = vld [vmem:[%s41] sm:$0xf]
        %v2740 = vld [vmem:[%s41 + $0x4] sm:$0xf]
        %v2741 = vld [vmem:[%s41 + $0x8] sm:$0xf]
        %v2742 = vld [vmem:[%s41 + $0xc] sm:$0xf]
        %v2743 = vld [vmem:[%s41 + $0x10] sm:$0xf]
        %v2744 = vld [vmem:[%s41 + $0x14] sm:$0xf]
        %v2745 = vld [vmem:[%s41 + $0x18] sm:$0xf]
        %v2746 = vld [vmem:[%s41 + $0x1c] sm:$0xf]
        %v2747 = vld [vmem:[%s41 + $0x20] sm:$0xf]
        %v2748 = vld [vmem:[%s41 + $0x24] sm:$0xf]
        %v2749 = vld [vmem:[%s41 + $0x28] sm:$0xf]
        %v2750 = vld [vmem:[%s41 + $0x2c] sm:$0xf]
        %v2751 = vld [vmem:[%s41 + $0x30] sm:$0xf]
        %v2752 = vld [vmem:[%s41 + $0x34] sm:$0xf]
        %v2753 = vld [vmem:[%s41 + $0x38] sm:$0xf]
        %v2754 = vld [vmem:[%s41 + $0x3c] sm:$0xf]
        %v2771 = vunpack.c.l.b16 %v2739
        %v2772 = vunpack.c.l.b16 %v2740
        %v2773 = vunpack.c.l.b16 %v2741
        %v2774 = vunpack.c.l.b16 %v2742
        %v2775 = vunpack.c.l.b16 %v2743
        %v2776 = vunpack.c.l.b16 %v2744
        %v2777 = vunpack.c.l.b16 %v2745
        %v2778 = vunpack.c.l.b16 %v2746
        %v2779 = vunpack.c.l.b16 %v2747
        %v2780 = vunpack.c.l.b16 %v2748
        %v2781 = vunpack.c.l.b16 %v2749
        %v2782 = vunpack.c.l.b16 %v2750
        %v2783 = vunpack.c.l.b16 %v2751
        %v2784 = vunpack.c.l.b16 %v2752
        %v2785 = vunpack.c.l.b16 %v2753
        %v2786 = vunpack.c.l.b16 %v2754
        %v2787 = vpack.c.b16 %v2772, %v2771
        %v2788 = vpack.c.b16 %v2774, %v2773
        %v2789 = vpack.c.b16 %v2776, %v2775
        %v2790 = vpack.c.b16 %v2778, %v2777
        %v2791 = vpack.c.b16 %v2780, %v2779
        %v2792 = vpack.c.b16 %v2782, %v2781
        %v2793 = vpack.c.b16 %v2784, %v2783
        %v2794 = vpack.c.b16 %v2786, %v2785
        %2803 = vmatpush.bf16.msra.mxu0 %v2794
        %2804 = vmatpush.bf16.msra.mxu0 %v2793
        %2805 = vmatpush.bf16.msra.mxu0 %v2792
        %2806 = vmatpush.bf16.msra.mxu0 %v2791
        %2807 = vmatpush.bf16.msra.mxu0 %v2790
        %2808 = vmatpush.bf16.msra.mxu0 %v2789
        %2809 = vmatpush.bf16.msra.mxu0 %v2788
        %2810 = vmatpush.bf16.msra.mxu0 %v2787
        %2811 = vmatmul.bf16.gmra.mxu0 %v2738
        %v2812 = vpop.f32.mrf.mxu0
        %v2813 = vadd.f32 0.0, %v2812
        %v2814 = vpop.f32.mrf.mxu0
        %2815 = vdwg.mxu0
        %v2816 = vrot.slane %v2689, 1
        %v2817 = vsel %vm1547, %v2816, 0.0
        %v2818 = vpack.c.bf16 %v2817, %v2817
        %v2819 = vld [vmem:[%s43] sm:$0xf]
        %v2820 = vld [vmem:[%s43 + $0x4] sm:$0xf]
        %v2821 = vld [vmem:[%s43 + $0x8] sm:$0xf]
        %v2822 = vld [vmem:[%s43 + $0xc] sm:$0xf]
        %v2823 = vld [vmem:[%s43 + $0x10] sm:$0xf]
        %v2824 = vld [vmem:[%s43 + $0x14] sm:$0xf]
        %v2825 = vld [vmem:[%s43 + $0x18] sm:$0xf]
        %v2826 = vld [vmem:[%s43 + $0x1c] sm:$0xf]
        %v2827 = vld [vmem:[%s43 + $0x20] sm:$0xf]
        %v2828 = vld [vmem:[%s43 + $0x24] sm:$0xf]
        %v2829 = vld [vmem:[%s43 + $0x28] sm:$0xf]
        %v2830 = vld [vmem:[%s43 + $0x2c] sm:$0xf]
        %v2831 = vld [vmem:[%s43 + $0x30] sm:$0xf]
        %v2832 = vld [vmem:[%s43 + $0x34] sm:$0xf]
        %v2833 = vld [vmem:[%s43 + $0x38] sm:$0xf]
        %v2834 = vld [vmem:[%s43 + $0x3c] sm:$0xf]
        %v2835 = vld [vmem:[%s43 + $0x40] sm:$0xf]
        %v2836 = vld [vmem:[%s43 + $0x44] sm:$0xf]
        %v2837 = vld [vmem:[%s43 + $0x48] sm:$0xf]
        %v2838 = vld [vmem:[%s43 + $0x4c] sm:$0xf]
        %v2839 = vld [vmem:[%s43 + $0x50] sm:$0xf]
        %v2840 = vld [vmem:[%s43 + $0x54] sm:$0xf]
        %v2841 = vld [vmem:[%s43 + $0x58] sm:$0xf]
        %v2842 = vld [vmem:[%s43 + $0x5c] sm:$0xf]
        %v2843 = vld [vmem:[%s43 + $0x60] sm:$0xf]
        %v2844 = vld [vmem:[%s43 + $0x64] sm:$0xf]
        %v2845 = vld [vmem:[%s43 + $0x68] sm:$0xf]
        %v2846 = vld [vmem:[%s43 + $0x6c] sm:$0xf]
        %v2847 = vld [vmem:[%s43 + $0x70] sm:$0xf]
        %v2848 = vld [vmem:[%s43 + $0x74] sm:$0xf]
        %v2849 = vld [vmem:[%s43 + $0x78] sm:$0xf]
        %v2850 = vld [vmem:[%s43 + $0x7c] sm:$0xf]
        %v2883 = vunpack.c.l.b16 %v2819
        %v2884 = vunpack.c.l.b16 %v2820
        %v2885 = vunpack.c.l.b16 %v2821
        %v2886 = vunpack.c.l.b16 %v2822
        %v2887 = vunpack.c.l.b16 %v2823
        %v2888 = vunpack.c.l.b16 %v2824
        %v2889 = vunpack.c.l.b16 %v2825
        %v2890 = vunpack.c.l.b16 %v2826
        %v2891 = vunpack.c.l.b16 %v2827
        %v2892 = vunpack.c.l.b16 %v2828
        %v2893 = vunpack.c.l.b16 %v2829
        %v2894 = vunpack.c.l.b16 %v2830
        %v2895 = vunpack.c.l.b16 %v2831
        %v2896 = vunpack.c.l.b16 %v2832
        %v2897 = vunpack.c.l.b16 %v2833
        %v2898 = vunpack.c.l.b16 %v2834
        %v2899 = vunpack.c.l.b16 %v2835
        %v2900 = vunpack.c.l.b16 %v2836
        %v2901 = vunpack.c.l.b16 %v2837
        %v2902 = vunpack.c.l.b16 %v2838
        %v2903 = vunpack.c.l.b16 %v2839
        %v2904 = vunpack.c.l.b16 %v2840
        %v2905 = vunpack.c.l.b16 %v2841
        %v2906 = vunpack.c.l.b16 %v2842
        %v2907 = vunpack.c.l.b16 %v2843
        %v2908 = vunpack.c.l.b16 %v2844
        %v2909 = vunpack.c.l.b16 %v2845
        %v2910 = vunpack.c.l.b16 %v2846
        %v2911 = vunpack.c.l.b16 %v2847
        %v2912 = vunpack.c.l.b16 %v2848
        %v2913 = vunpack.c.l.b16 %v2849
        %v2914 = vunpack.c.l.b16 %v2850
        %v2915 = vpack.c.b16 %v2884, %v2883
        %v2916 = vpack.c.b16 %v2886, %v2885
        %v2917 = vpack.c.b16 %v2888, %v2887
        %v2918 = vpack.c.b16 %v2890, %v2889
        %v2919 = vpack.c.b16 %v2892, %v2891
        %v2920 = vpack.c.b16 %v2894, %v2893
        %v2921 = vpack.c.b16 %v2896, %v2895
        %v2922 = vpack.c.b16 %v2898, %v2897
        %v2923 = vpack.c.b16 %v2900, %v2899
        %v2924 = vpack.c.b16 %v2902, %v2901
        %v2925 = vpack.c.b16 %v2904, %v2903
        %v2926 = vpack.c.b16 %v2906, %v2905
        %v2927 = vpack.c.b16 %v2908, %v2907
        %v2928 = vpack.c.b16 %v2910, %v2909
        %v2929 = vpack.c.b16 %v2912, %v2911
        %v2930 = vpack.c.b16 %v2914, %v2913
        %2947 = vmatpush.bf16.msra.mxu0 %v2922
        %2948 = vmatpush.bf16.msra.mxu0 %v2921
        %2949 = vmatpush.bf16.msra.mxu0 %v2920
        %2950 = vmatpush.bf16.msra.mxu0 %v2919
        %2951 = vmatpush.bf16.msra.mxu0 %v2918
        %2952 = vmatpush.bf16.msra.mxu0 %v2917
        %2953 = vmatpush.bf16.msra.mxu0 %v2916
        %2954 = vmatpush.bf16.msra.mxu0 %v2915
        %2955 = vmatmul.bf16.gmra.mxu0 %v2738
        %v2956 = vpop.f32.mrf.mxu0
        %v2957 = vadd.f32 0.0, %v2956
        %v2958 = vpop.f32.mrf.mxu0
        %2959 = vdwg.mxu0
        %2960 = vmatpush.bf16.msra.mxu0 %v2930
        %2961 = vmatpush.bf16.msra.mxu0 %v2929
        %2962 = vmatpush.bf16.msra.mxu0 %v2928
        %2963 = vmatpush.bf16.msra.mxu0 %v2927
        %2964 = vmatpush.bf16.msra.mxu0 %v2926
        %2965 = vmatpush.bf16.msra.mxu0 %v2925
        %2966 = vmatpush.bf16.msra.mxu0 %v2924
        %2967 = vmatpush.bf16.msra.mxu0 %v2923
        %2968 = vmatmul.bf16.gmra.mxu0 %v2818
        %v2969 = vpop.f32.mrf.mxu0
        %v2970 = vadd.f32 %v2957, %v2969
        %v2971 = vpop.f32.mrf.mxu0
        %2972 = vdwg.mxu0
        %v2989 = vunpack.c.l.b16 %v2690
        %v2990 = vunpack.c.l.b16 %v2691
        %v2991 = vunpack.c.l.b16 %v2692
        %v2992 = vunpack.c.l.b16 %v2693
        %v2993 = vunpack.c.l.b16 %v2694
        %v2994 = vunpack.c.l.b16 %v2695
        %v2995 = vunpack.c.l.b16 %v2696
        %v2996 = vunpack.c.l.b16 %v2697
        %v2997 = vunpack.c.l.b16 %v2698
        %v2998 = vunpack.c.l.b16 %v2699
        %v2999 = vunpack.c.l.b16 %v2700
        %v3000 = vunpack.c.l.b16 %v2701
        %v3001 = vunpack.c.l.b16 %v2702
        %v3002 = vunpack.c.l.b16 %v2703
        %v3003 = vunpack.c.l.b16 %v2704
        %v3004 = vunpack.c.l.b16 %v2705
        %v3005 = vpack.c.b16 %v2990, %v2989
        %v3006 = vpack.c.b16 %v2992, %v2991
        %v3007 = vpack.c.b16 %v2994, %v2993
        %v3008 = vpack.c.b16 %v2996, %v2995
        %v3009 = vpack.c.b16 %v2998, %v2997
        %v3010 = vpack.c.b16 %v3000, %v2999
        %v3011 = vpack.c.b16 %v3002, %v3001
        %v3012 = vpack.c.b16 %v3004, %v3003
        %3021 = vmatpush.bf16.msra.mxu0 %v3012
        %3022 = vmatpush.bf16.msra.mxu0 %v3011
        %3023 = vmatpush.bf16.msra.mxu0 %v3010
        %3024 = vmatpush.bf16.msra.mxu0 %v3009
        %3025 = vmatpush.bf16.msra.mxu0 %v3008
        %3026 = vmatpush.bf16.msra.mxu0 %v3007
        %3027 = vmatpush.bf16.msra.mxu0 %v3006
        %3028 = vmatpush.bf16.msra.mxu0 %v3005
        %3029 = vmatmul.bf16.gmra.mxu0 %v2064
        %v3030 = vpop.f32.mrf.mxu0
        %v3031 = vadd.f32 %v2813, %v3030
        %v3032 = vpop.f32.mrf.mxu0
        %3033 = vdwg.mxu0
        %v3066 = vunpack.c.l.b16 %v2706
        %v3067 = vunpack.c.l.b16 %v2707
        %v3068 = vunpack.c.l.b16 %v2708
        %v3069 = vunpack.c.l.b16 %v2709
        %v3070 = vunpack.c.l.b16 %v2710
        %v3071 = vunpack.c.l.b16 %v2711
        %v3072 = vunpack.c.l.b16 %v2712
        %v3073 = vunpack.c.l.b16 %v2713
        %v3074 = vunpack.c.l.b16 %v2714
        %v3075 = vunpack.c.l.b16 %v2715
        %v3076 = vunpack.c.l.b16 %v2716
        %v3077 = vunpack.c.l.b16 %v2717
        %v3078 = vunpack.c.l.b16 %v2718
        %v3079 = vunpack.c.l.b16 %v2719
        %v3080 = vunpack.c.l.b16 %v2720
        %v3081 = vunpack.c.l.b16 %v2721
        %v3082 = vunpack.c.l.b16 %v2722
        %v3083 = vunpack.c.l.b16 %v2723
        %v3084 = vunpack.c.l.b16 %v2724
        %v3085 = vunpack.c.l.b16 %v2725
        %v3086 = vunpack.c.l.b16 %v2726
        %v3087 = vunpack.c.l.b16 %v2727
        %v3088 = vunpack.c.l.b16 %v2728
        %v3089 = vunpack.c.l.b16 %v2729
        %v3090 = vunpack.c.l.b16 %v2730
        %v3091 = vunpack.c.l.b16 %v2731
        %v3092 = vunpack.c.l.b16 %v2732
        %v3093 = vunpack.c.l.b16 %v2733
        %v3094 = vunpack.c.l.b16 %v2734
        %v3095 = vunpack.c.l.b16 %v2735
        %v3096 = vunpack.c.l.b16 %v2736
        %v3097 = vunpack.c.l.b16 %v2737
        %v3098 = vpack.c.b16 %v3067, %v3066
        %v3099 = vpack.c.b16 %v3069, %v3068
        %v3100 = vpack.c.b16 %v3071, %v3070
        %v3101 = vpack.c.b16 %v3073, %v3072
        %v3102 = vpack.c.b16 %v3075, %v3074
        %v3103 = vpack.c.b16 %v3077, %v3076
        %v3104 = vpack.c.b16 %v3079, %v3078
        %v3105 = vpack.c.b16 %v3081, %v3080
        %v3106 = vpack.c.b16 %v3083, %v3082
        %v3107 = vpack.c.b16 %v3085, %v3084
        %v3108 = vpack.c.b16 %v3087, %v3086
        %v3109 = vpack.c.b16 %v3089, %v3088
        %v3110 = vpack.c.b16 %v3091, %v3090
        %v3111 = vpack.c.b16 %v3093, %v3092
        %v3112 = vpack.c.b16 %v3095, %v3094
        %v3113 = vpack.c.b16 %v3097, %v3096
        %3130 = vmatpush.bf16.msra.mxu0 %v3105
        %3131 = vmatpush.bf16.msra.mxu0 %v3104
        %3132 = vmatpush.bf16.msra.mxu0 %v3103
        %3133 = vmatpush.bf16.msra.mxu0 %v3102
        %3134 = vmatpush.bf16.msra.mxu0 %v3101
        %3135 = vmatpush.bf16.msra.mxu0 %v3100
        %3136 = vmatpush.bf16.msra.mxu0 %v3099
        %3137 = vmatpush.bf16.msra.mxu0 %v3098
        %3138 = vmatmul.bf16.gmra.mxu0 %v2064
        %v3139 = vpop.f32.mrf.mxu0
        %v3140 = vadd.f32 %v2970, %v3139
        %v3141 = vpop.f32.mrf.mxu0
        %3142 = vdwg.mxu0
        %3143 = vmatpush.bf16.msra.mxu0 %v3113
        %3144 = vmatpush.bf16.msra.mxu0 %v3112
        %3145 = vmatpush.bf16.msra.mxu0 %v3111
        %3146 = vmatpush.bf16.msra.mxu0 %v3110
        %3147 = vmatpush.bf16.msra.mxu0 %v3109
        %3148 = vmatpush.bf16.msra.mxu0 %v3108
        %3149 = vmatpush.bf16.msra.mxu0 %v3107
        %3150 = vmatpush.bf16.msra.mxu0 %v3106
        %3151 = vmatmul.bf16.gmra.mxu0 %v2065
        %v3152 = vpop.f32.mrf.mxu0
        %v3153 = vadd.f32 %v3140, %v3152
        %v3154 = vpop.f32.mrf.mxu0
        %3155 = vdwg.mxu0
        %v3156 = vld [vmem:[#allocation20] sm:$0xf]
        %v3157 = vld [vmem:[#allocation20 + $0x4] sm:$0xf]
        %v3158 = vpack.c.bf16 %v3153, %v3031
        %v3159 = vld [vmem:[%s45] sm:$0x1]
        %v3161 = vperm.slane %v3159, 0
        %v3165 = vunpack.c.l.b16 %v3156
        %v3166 = vunpack.c.l.b16 %v3157
        %v3167 = vpack.c.b16 %v3166, %v3165
        %v3169 = vsel %vm1592, %v3167, 0
        %3171 = vmatpush.bf16.msra.mxu0 0
        %3172 = vmatpush.bf16.msra.mxu0 0
        %3173 = vmatpush.bf16.msra.mxu0 0
        %3174 = vmatpush.bf16.msra.mxu0 0
        %3175 = vmatpush.bf16.msra.mxu0 0
        %3176 = vmatpush.bf16.msra.mxu0 0
        %3177 = vmatpush.bf16.msra.mxu0 0
        %3178 = vmatpush.bf16.msra.mxu0 %v3158
        %3179 = vmatmul.bf16.gmra.mxu0 %v3169
        %v3180 = vpop.f32.mrf.mxu0
        %v3181 = vadd.f32 %v3161, %v3180
        %v3182 = vpop.f32.mrf.mxu0
        %v3183 = vadd.f32 %v3161, %v3182
        %3184 = vdwg.mxu0
        %v3185 = vsel %vm1658, %v3181, 0.0
        %3186 = vadd.xlane.f32.xlu0 %v3185
        %v3187 = vpop.xlane.xlu0 %3186
        %v3188 = vsel %vm1658, %v3183, 0.0
        %3189 = vadd.xlane.f32.xlu0 %v3188
        %v3190 = vpop.xlane.xlu0 %3189
        %v3191 = vadd.f32 %v3187, %v3190
        %v3192 = vrot.slane %v3191, 4
        %v3193 = vadd.f32 %v3191, %v3192
        %v3194 = vrot.slane %v3193, 2
        %v3195 = vadd.f32 %v3193, %v3194
        %v3196 = vrot.slane %v3195, 1
        %v3197 = vadd.f32 %v3195, %v3196
        %v3198 = vmul.f32 %v3197, %v2315
        %v3199 = vsub.f32 %v3181, %v3198
        %v3200 = vsub.f32 %v3183, %v3198
        %v3201 = vmul.f32 %v3199, %v3199
        %v3202 = vmul.f32 %v3200, %v3200
        %v3203 = vsel %vm1658, %v3201, 0.0
        %3204 = vadd.xlane.f32.xlu0 %v3203
        %v3205 = vpop.xlane.xlu0 %3204
        %v3206 = vsel %vm1658, %v3202, 0.0
        %3207 = vadd.xlane.f32.xlu0 %v3206
        %v3208 = vpop.xlane.xlu0 %3207
        %v3209 = vadd.f32 %v3205, %v3208
        %v3210 = vrot.slane %v3209, 4
        %v3211 = vadd.f32 %v3209, %v3210
        %v3212 = vrot.slane %v3211, 2
        %v3213 = vadd.f32 %v3211, %v3212
        %v3214 = vrot.slane %v3213, 1
        %v3215 = vadd.f32 %v3213, %v3214
        %v3216 = vmul.f32 %v3215, %v2315
        %v3217 = vadd.f32 %v3216, 1e-05
        %v3218 = vrsqrt.pop %v3217
        %v3219 = vmul.f32 %v3218, %v3217
        %v3220 = vmul.f32 %v3219, %v3218
        %v3221 = vmul.f32 0.5, %v3220
        %v3222 = vsub.f32 1.5, %v3221
        %v3223 = vmul.f32 %v3218, %v3222
        %vm3224 = vweird.f32 %v3217
        %vm3225 = vweird.f32 %v3218
        %vm3226 = vmor %vm3224, %vm3225
        %v3227 = vsel %vm3226, %v3218, %v3223
        %v3228 = vmul.f32 %v3199, %v3227
        %v3229 = vmul.f32 %v3200, %v3227
        %v3230 = vld [vmem:[%s47] sm:$0xff]
        %v3231 = vld [vmem:[%s47 + $0x8] sm:$0xff]
        %v3232 = vmul.f32 %v3228, %v3230
        %v3233 = vmul.f32 %v3229, %v3231
        %v3234 = vld [vmem:[%s49] sm:$0xff]
        %v3235 = vld [vmem:[%s49 + $0x8] sm:$0xff]
        %v3236 = vadd.f32 %v3232, %v3234
        %v3237 = vadd.f32 %v3233, %v3235
        %vm3238 = vcmp.gt.f32.partialorder %v3236, 0.0
        %vm3239 = vcmp.gt.f32.partialorder %v3237, 0.0
        %v3240 = vmin.f32 %v3236, 0.0
        %v3241 = vmin.f32 %v3237, 0.0
        %v3242 = vmul.f32 %v3240, 1.442695
        %v3243 = vpow.pop %v3242
        %v3244 = vmul.f32 %v3241, 1.442695
        %v3245 = vpow.pop %v3244
        %v3246 = vsub.f32 %v3243, 1.0
        %v3247 = vsub.f32 %v3245, 1.0
        %v3248 = vsel %vm3238, %v3236, %v3246
        %v3249 = vsel %vm3239, %v3237, %v3247
        %v3250 = vpack.c.bf16 %v1813, %v1811
        %v3251 = vld [vmem:[%s51] sm:$0xf]
        %v3252 = vld [vmem:[%s51 + $0x4] sm:$0xf]
        %v3253 = vld [vmem:[%s51 + $0x8] sm:$0xf]
        %v3254 = vld [vmem:[%s51 + $0xc] sm:$0xf]
        %v3255 = vld [vmem:[%s51 + $0x10] sm:$0xf]
        %v3256 = vld [vmem:[%s51 + $0x14] sm:$0xf]
        %v3257 = vld [vmem:[%s51 + $0x18] sm:$0xf]
        %v3258 = vld [vmem:[%s51 + $0x1c] sm:$0xf]
        %3261 = vrot.lane.b32.xlu0 %v1827, 64
        %v3262 = vpop.permute.xlu0 %3261
        %3263 = vrot.lane.b32.xlu0 %v1828, 64
        %v3264 = vpop.permute.xlu0 %3263
        %v3267 = vsel %vm1658, %v1811, %v3262
        %v3268 = vsel %vm1658, %v1813, %v3264
        %v3269 = vpack.c.bf16 %v3268, %v3267
        %v3270 = vld [vmem:[%s53] sm:$0xf]
        %v3271 = vld [vmem:[%s53 + $0x4] sm:$0xf]
        %v3272 = vld [vmem:[%s53 + $0x8] sm:$0xf]
        %v3273 = vld [vmem:[%s53 + $0xc] sm:$0xf]
        %v3274 = vld [vmem:[%s53 + $0x10] sm:$0xf]
        %v3275 = vld [vmem:[%s53 + $0x14] sm:$0xf]
        %v3276 = vld [vmem:[%s53 + $0x18] sm:$0xf]
        %v3277 = vld [vmem:[%s53 + $0x1c] sm:$0xf]
        %v3278 = vld [vmem:[%s53 + $0x20] sm:$0xf]
        %v3279 = vld [vmem:[%s53 + $0x24] sm:$0xf]
        %v3280 = vld [vmem:[%s53 + $0x28] sm:$0xf]
        %v3281 = vld [vmem:[%s53 + $0x2c] sm:$0xf]
        %v3282 = vld [vmem:[%s53 + $0x30] sm:$0xf]
        %v3283 = vld [vmem:[%s53 + $0x34] sm:$0xf]
        %v3284 = vld [vmem:[%s53 + $0x38] sm:$0xf]
        %v3285 = vld [vmem:[%s53 + $0x3c] sm:$0xf]
        %v3286 = vpack.c.bf16 %v3249, %v3248
        %v3287 = vld [vmem:[%s55] sm:$0xf]
        %v3288 = vld [vmem:[%s55 + $0x4] sm:$0xf]
        %v3289 = vld [vmem:[%s55 + $0x8] sm:$0xf]
        %v3290 = vld [vmem:[%s55 + $0xc] sm:$0xf]
        %v3291 = vld [vmem:[%s55 + $0x10] sm:$0xf]
        %v3292 = vld [vmem:[%s55 + $0x14] sm:$0xf]
        %v3293 = vld [vmem:[%s55 + $0x18] sm:$0xf]
        %v3294 = vld [vmem:[%s55 + $0x1c] sm:$0xf]
        %v3303 = vunpack.c.l.b16 %v3287
        %v3304 = vunpack.c.l.b16 %v3288
        %v3305 = vunpack.c.l.b16 %v3289
        %v3306 = vunpack.c.l.b16 %v3290
        %v3307 = vunpack.c.l.b16 %v3291
        %v3308 = vunpack.c.l.b16 %v3292
        %v3309 = vunpack.c.l.b16 %v3293
        %v3310 = vunpack.c.l.b16 %v3294
        %v3311 = vpack.c.b16 %v3304, %v3303
        %v3312 = vpack.c.b16 %v3306, %v3305
        %v3313 = vpack.c.b16 %v3308, %v3307
        %v3314 = vpack.c.b16 %v3310, %v3309
        %v3320 = vsel %vm1658, %v3286, 0
        %3322 = vmatpush.bf16.msra.mxu0 0
        %3323 = vmatpush.bf16.msra.mxu0 0
        %3324 = vmatpush.bf16.msra.mxu0 0
        %3325 = vmatpush.bf16.msra.mxu0 0
        %3326 = vmatpush.bf16.msra.mxu0 %v3314
        %3327 = vmatpush.bf16.msra.mxu0 %v3313
        %3328 = vmatpush.bf16.msra.mxu0 %v3312
        %3329 = vmatpush.bf16.msra.mxu0 %v3311
        %3330 = vmatmul.bf16.gmra.mxu0 %v3320
        %v3331 = vpop.f32.mrf.mxu0
        %v3332 = vadd.f32 0.0, %v3331
        %v3333 = vpop.f32.mrf.mxu0
        %v3334 = vadd.f32 0.0, %v3333
        %3335 = vdwg.mxu0
        %v3336 = vrot.slane %v3248, 1
        %v3337 = vrot.slane %v3249, 1
        %v3338 = vsel %vm1547, %v3336, %v3337
        %v3339 = vsel %vm1547, %v3337, %v3336
        %v3340 = vsel %vm1825, %v3338, 0.0
        %v3341 = vsel %vm1826, %v3339, 0.0
        %3344 = vrot.lane.b32.xlu0 %v3340, 64
        %v3345 = vpop.permute.xlu0 %3344
        %3346 = vrot.lane.b32.xlu0 %v3341, 64
        %v3347 = vpop.permute.xlu0 %3346
        %v3350 = vsel %vm1658, %v3248, %v3345
        %v3351 = vsel %vm1658, %v3249, %v3347
        %v3352 = vpack.c.bf16 %v3351, %v3350
        %v3353 = vld [vmem:[%s57] sm:$0xf]
        %v3354 = vld [vmem:[%s57 + $0x4] sm:$0xf]
        %v3355 = vld [vmem:[%s57 + $0x8] sm:$0xf]
        %v3356 = vld [vmem:[%s57 + $0xc] sm:$0xf]
        %v3357 = vld [vmem:[%s57 + $0x10] sm:$0xf]
        %v3358 = vld [vmem:[%s57 + $0x14] sm:$0xf]
        %v3359 = vld [vmem:[%s57 + $0x18] sm:$0xf]
        %v3360 = vld [vmem:[%s57 + $0x1c] sm:$0xf]
        %v3361 = vld [vmem:[%s57 + $0x20] sm:$0xf]
        %v3362 = vld [vmem:[%s57 + $0x24] sm:$0xf]
        %v3363 = vld [vmem:[%s57 + $0x28] sm:$0xf]
        %v3364 = vld [vmem:[%s57 + $0x2c] sm:$0xf]
        %v3365 = vld [vmem:[%s57 + $0x30] sm:$0xf]
        %v3366 = vld [vmem:[%s57 + $0x34] sm:$0xf]
        %v3367 = vld [vmem:[%s57 + $0x38] sm:$0xf]
        %v3368 = vld [vmem:[%s57 + $0x3c] sm:$0xf]
        %v3385 = vunpack.c.l.b16 %v3353
        %v3386 = vunpack.c.l.b16 %v3354
        %v3387 = vunpack.c.l.b16 %v3355
        %v3388 = vunpack.c.l.b16 %v3356
        %v3389 = vunpack.c.l.b16 %v3357
        %v3390 = vunpack.c.l.b16 %v3358
        %v3391 = vunpack.c.l.b16 %v3359
        %v3392 = vunpack.c.l.b16 %v3360
        %v3393 = vunpack.c.l.b16 %v3361
        %v3394 = vunpack.c.l.b16 %v3362
        %v3395 = vunpack.c.l.b16 %v3363
        %v3396 = vunpack.c.l.b16 %v3364
        %v3397 = vunpack.c.l.b16 %v3365
        %v3398 = vunpack.c.l.b16 %v3366
        %v3399 = vunpack.c.l.b16 %v3367
        %v3400 = vunpack.c.l.b16 %v3368
        %v3401 = vpack.c.b16 %v3386, %v3385
        %v3402 = vpack.c.b16 %v3388, %v3387
        %v3403 = vpack.c.b16 %v3390, %v3389
        %v3404 = vpack.c.b16 %v3392, %v3391
        %v3405 = vpack.c.b16 %v3394, %v3393
        %v3406 = vpack.c.b16 %v3396, %v3395
        %v3407 = vpack.c.b16 %v3398, %v3397
        %v3408 = vpack.c.b16 %v3400, %v3399
        %3417 = vmatpush.bf16.msra.mxu0 %v3408
        %3418 = vmatpush.bf16.msra.mxu0 %v3407
        %3419 = vmatpush.bf16.msra.mxu0 %v3406
        %3420 = vmatpush.bf16.msra.mxu0 %v3405
        %3421 = vmatpush.bf16.msra.mxu0 %v3404
        %3422 = vmatpush.bf16.msra.mxu0 %v3403
        %3423 = vmatpush.bf16.msra.mxu0 %v3402
        %3424 = vmatpush.bf16.msra.mxu0 %v3401
        %3425 = vmatmul.bf16.gmra.mxu0 %v3352
        %v3426 = vpop.f32.mrf.mxu0
        %v3427 = vadd.f32 0.0, %v3426
        %v3428 = vpop.f32.mrf.mxu0
        %v3429 = vadd.f32 0.0, %v3428
        %3430 = vdwg.mxu0
        %v3439 = vunpack.c.l.b16 %v3251
        %v3440 = vunpack.c.l.b16 %v3252
        %v3441 = vunpack.c.l.b16 %v3253
        %v3442 = vunpack.c.l.b16 %v3254
        %v3443 = vunpack.c.l.b16 %v3255
        %v3444 = vunpack.c.l.b16 %v3256
        %v3445 = vunpack.c.l.b16 %v3257
        %v3446 = vunpack.c.l.b16 %v3258
        %v3447 = vpack.c.b16 %v3440, %v3439
        %v3448 = vpack.c.b16 %v3442, %v3441
        %v3449 = vpack.c.b16 %v3444, %v3443
        %v3450 = vpack.c.b16 %v3446, %v3445
        %v3456 = vsel %vm1658, %v3250, 0
        %3458 = vmatpush.bf16.msra.mxu0 0
        %3459 = vmatpush.bf16.msra.mxu0 0
        %3460 = vmatpush.bf16.msra.mxu0 0
        %3461 = vmatpush.bf16.msra.mxu0 0
        %3462 = vmatpush.bf16.msra.mxu0 %v3450
        %3463 = vmatpush.bf16.msra.mxu0 %v3449
        %3464 = vmatpush.bf16.msra.mxu0 %v3448
        %3465 = vmatpush.bf16.msra.mxu0 %v3447
        %3466 = vmatmul.bf16.gmra.mxu0 %v3456
        %v3467 = vpop.f32.mrf.mxu0
        %v3468 = vadd.f32 %v3332, %v3467
        %v3469 = vpop.f32.mrf.mxu0
        %v3470 = vadd.f32 %v3334, %v3469
        %3471 = vdwg.mxu0
        %v3488 = vunpack.c.l.b16 %v3270
        %v3489 = vunpack.c.l.b16 %v3271
        %v3490 = vunpack.c.l.b16 %v3272
        %v3491 = vunpack.c.l.b16 %v3273
        %v3492 = vunpack.c.l.b16 %v3274
        %v3493 = vunpack.c.l.b16 %v3275
        %v3494 = vunpack.c.l.b16 %v3276
        %v3495 = vunpack.c.l.b16 %v3277
        %v3496 = vunpack.c.l.b16 %v3278
        %v3497 = vunpack.c.l.b16 %v3279
        %v3498 = vunpack.c.l.b16 %v3280
        %v3499 = vunpack.c.l.b16 %v3281
        %v3500 = vunpack.c.l.b16 %v3282
        %v3501 = vunpack.c.l.b16 %v3283
        %v3502 = vunpack.c.l.b16 %v3284
        %v3503 = vunpack.c.l.b16 %v3285
        %v3504 = vpack.c.b16 %v3489, %v3488
        %v3505 = vpack.c.b16 %v3491, %v3490
        %v3506 = vpack.c.b16 %v3493, %v3492
        %v3507 = vpack.c.b16 %v3495, %v3494
        %v3508 = vpack.c.b16 %v3497, %v3496
        %v3509 = vpack.c.b16 %v3499, %v3498
        %v3510 = vpack.c.b16 %v3501, %v3500
        %v3511 = vpack.c.b16 %v3503, %v3502
        %3520 = vmatpush.bf16.msra.mxu0 %v3511
        %3521 = vmatpush.bf16.msra.mxu0 %v3510
        %3522 = vmatpush.bf16.msra.mxu0 %v3509
        %3523 = vmatpush.bf16.msra.mxu0 %v3508
        %3524 = vmatpush.bf16.msra.mxu0 %v3507
        %3525 = vmatpush.bf16.msra.mxu0 %v3506
        %3526 = vmatpush.bf16.msra.mxu0 %v3505
        %3527 = vmatpush.bf16.msra.mxu0 %v3504
        %3528 = vmatmul.bf16.gmra.mxu0 %v3269
        %v3529 = vpop.f32.mrf.mxu0
        %v3530 = vadd.f32 %v3427, %v3529
        %v3531 = vpop.f32.mrf.mxu0
        %v3532 = vadd.f32 %v3429, %v3531
        %3533 = vdwg.mxu0
        %v3534 = vld [vmem:[#allocation22] sm:$0xf]
        %v3535 = vld [vmem:[#allocation22 + $0x4] sm:$0xf]
        %v3536 = vld [vmem:[#allocation22 + $0x8] sm:$0xf]
        %v3537 = vld [vmem:[#allocation22 + $0xc] sm:$0xf]
        %v3538 = vpack.c.bf16 %v3470, %v3468
        %v3539 = vpack.c.bf16 %v3532, %v3530
        %v3540 = vld [vmem:[#allocation16] sm:$0x1]
        %v3542 = vperm.slane %v3540, 0
        %v3548 = vunpack.c.l.b16 %v3534
        %v3549 = vunpack.c.l.b16 %v3535
        %v3550 = vunpack.c.l.b16 %v3536
        %v3551 = vunpack.c.l.b16 %v3537
        %v3552 = vpack.c.b16 %v3549, %v3548
        %v3553 = vpack.c.b16 %v3551, %v3550
        %v3555 = vsel %vm1597, %v3552, 0
        %v3558 = vsel %vm1597, %v3553, 0
        %3560 = vmatpush.bf16.msra.mxu0 0
        %3561 = vmatpush.bf16.msra.mxu0 0
        %3562 = vmatpush.bf16.msra.mxu0 0
        %3563 = vmatpush.bf16.msra.mxu0 0
        %3564 = vmatpush.bf16.msra.mxu0 0
        %3565 = vmatpush.bf16.msra.mxu0 0
        %3566 = vmatpush.bf16.msra.mxu0 %v3539
        %3567 = vmatpush.bf16.msra.mxu0 %v3538
        %3568 = vmatmul.bf16.gmra.mxu0 %v3555
        %v3569 = vpop.f32.mrf.mxu0
        %v3570 = vadd.f32 %v3542, %v3569
        %v3571 = vpop.f32.mrf.mxu0
        %v3572 = vadd.f32 %v3542, %v3571
        %3573 = vmatmul.bf16.gmra.mxu0 %v3558
        %v3574 = vpop.f32.mrf.mxu0
        %v3575 = vadd.f32 %v3542, %v3574
        %v3576 = vpop.f32.mrf.mxu0
        %v3577 = vadd.f32 %v3542, %v3576
        %3578 = vdwg.mxu0
        %v3579 = vsel %vm1597, %v3570, 0.0
        %3580 = vadd.xlane.f32.xlu0 %v3579
        %v3581 = vpop.xlane.xlu0 %3580
        %v3582 = vsel %vm1597, %v3572, 0.0
        %3583 = vadd.xlane.f32.xlu0 %v3582
        %v3584 = vpop.xlane.xlu0 %3583
        %v3585 = vsel %vm1597, %v3575, 0.0
        %3586 = vadd.xlane.f32.xlu0 %v3585
        %v3587 = vpop.xlane.xlu0 %3586
        %v3588 = vsel %vm1597, %v3577, 0.0
        %3589 = vadd.xlane.f32.xlu0 %v3588
        %v3590 = vpop.xlane.xlu0 %3589
        %v3591 = vadd.f32 %v3581, %v3584
        %v3592 = vadd.f32 %v3591, %v3587
        %v3593 = vadd.f32 %v3592, %v3590
        %v3594 = vrot.slane %v3593, 4
        %v3595 = vadd.f32 %v3593, %v3594
        %v3596 = vrot.slane %v3595, 2
        %v3597 = vadd.f32 %v3595, %v3596
        %v3598 = vrot.slane %v3597, 1
        %v3599 = vadd.f32 %v3597, %v3598
        %v3600 = vmul.f32 %v3599, %v2315
        %v3601 = vsub.f32 %v3570, %v3600
        %v3602 = vsub.f32 %v3572, %v3600
        %v3603 = vsub.f32 %v3575, %v3600
        %v3604 = vsub.f32 %v3577, %v3600
        %v3605 = vmul.f32 %v3601, %v3601
        %v3606 = vmul.f32 %v3602, %v3602
        %v3607 = vmul.f32 %v3603, %v3603
        %v3608 = vmul.f32 %v3604, %v3604
        %v3609 = vsel %vm1597, %v3605, 0.0
        %3610 = vadd.xlane.f32.xlu0 %v3609
        %v3611 = vpop.xlane.xlu0 %3610
        %v3612 = vsel %vm1597, %v3606, 0.0
        %3613 = vadd.xlane.f32.xlu0 %v3612
        %v3614 = vpop.xlane.xlu0 %3613
        %v3615 = vsel %vm1597, %v3607, 0.0
        %3616 = vadd.xlane.f32.xlu0 %v3615
        %v3617 = vpop.xlane.xlu0 %3616
        %v3618 = vsel %vm1597, %v3608, 0.0
        %3619 = vadd.xlane.f32.xlu0 %v3618
        %v3620 = vpop.xlane.xlu0 %3619
        %v3621 = vadd.f32 %v3611, %v3614
        %v3622 = vadd.f32 %v3621, %v3617
        %v3623 = vadd.f32 %v3622, %v3620
        %v3624 = vrot.slane %v3623, 4
        %v3625 = vadd.f32 %v3623, %v3624
        %v3626 = vrot.slane %v3625, 2
        %v3627 = vadd.f32 %v3625, %v3626
        %v3628 = vrot.slane %v3627, 1
        %v3629 = vadd.f32 %v3627, %v3628
        %v3630 = vmul.f32 %v3629, %v2315
        %v3631 = vadd.f32 %v3630, 1e-05
        %v3632 = vrsqrt.pop %v3631
        %v3633 = vmul.f32 %v3632, %v3631
        %v3634 = vmul.f32 %v3633, %v3632
        %v3635 = vmul.f32 0.5, %v3634
        %v3636 = vsub.f32 1.5, %v3635
        %v3637 = vmul.f32 %v3632, %v3636
        %vm3638 = vweird.f32 %v3631
        %vm3639 = vweird.f32 %v3632
        %vm3640 = vmor %vm3638, %vm3639
        %v3641 = vsel %vm3640, %v3632, %v3637
        %v3642 = vmul.f32 %v3601, %v3641
        %v3643 = vmul.f32 %v3602, %v3641
        %v3644 = vmul.f32 %v3603, %v3641
        %v3645 = vmul.f32 %v3604, %v3641
        %v3646 = vld [vmem:[%s61] sm:$0xff]
        %v3647 = vld [vmem:[%s61 + $0x8] sm:$0xff]
        %v3648 = vld [vmem:[%s61 + $0x10] sm:$0xff]
        %v3649 = vld [vmem:[%s61 + $0x18] sm:$0xff]
        %v3650 = vmul.f32 %v3642, %v3646
        %v3651 = vmul.f32 %v3643, %v3647
        %v3652 = vmul.f32 %v3644, %v3648
        %v3653 = vmul.f32 %v3645, %v3649
        %v3654 = vld [vmem:[%s63] sm:$0xff]
        %v3655 = vld [vmem:[%s63 + $0x8] sm:$0xff]
        %v3656 = vld [vmem:[%s63 + $0x10] sm:$0xff]
        %v3657 = vld [vmem:[%s63 + $0x18] sm:$0xff]
        %v3658 = vadd.f32 %v3650, %v3654
        %v3659 = vadd.f32 %v3651, %v3655
        %v3660 = vadd.f32 %v3652, %v3656
        %v3661 = vadd.f32 %v3653, %v3657
        %vm3662 = vcmp.gt.f32.partialorder %v3658, 0.0
        %vm3663 = vcmp.gt.f32.partialorder %v3659, 0.0
        %vm3664 = vcmp.gt.f32.partialorder %v3660, 0.0
        %vm3665 = vcmp.gt.f32.partialorder %v3661, 0.0
        %v3666 = vmin.f32 %v3658, 0.0
        %v3667 = vmin.f32 %v3659, 0.0
        %v3668 = vmin.f32 %v3660, 0.0
        %v3669 = vmin.f32 %v3661, 0.0
        %v3670 = vmul.f32 %v3666, 1.442695
        %v3671 = vpow.pop %v3670
        %v3672 = vmul.f32 %v3667, 1.442695
        %v3673 = vpow.pop %v3672
        %v3674 = vmul.f32 %v3668, 1.442695
        %v3675 = vpow.pop %v3674
        %v3676 = vmul.f32 %v3669, 1.442695
        %v3677 = vpow.pop %v3676
        %v3678 = vsub.f32 %v3671, 1.0
        %v3679 = vsub.f32 %v3673, 1.0
        %v3680 = vsub.f32 %v3675, 1.0
        %v3681 = vsub.f32 %v3677, 1.0
        %v3682 = vsel %vm3662, %v3658, %v3678
        %v3683 = vsel %vm3663, %v3659, %v3679
        %v3684 = vsel %vm3664, %v3660, %v3680
        %v3685 = vsel %vm3665, %v3661, %v3681
        %v3686 = vld [vmem:[%s65] sm:$0xf]
        %v3687 = vld [vmem:[%s65 + $0x4] sm:$0xf]
        %v3688 = vld [vmem:[%s65 + $0x8] sm:$0xf]
        %v3689 = vld [vmem:[%s65 + $0xc] sm:$0xf]
        %v3690 = vld [vmem:[%s65 + $0x10] sm:$0xf]
        %v3691 = vld [vmem:[%s65 + $0x14] sm:$0xf]
        %v3692 = vrot.slane %v3682, 7
        %v3693 = vrot.slane %v3683, 7
        %v3694 = vrot.slane %v3684, 7
        %v3695 = vrot.slane %v3685, 7
        %v3696 = vsel %vm1527, %v3694, %v3695
        %v3697 = vsel %vm1527, %v3693, %v3694
        %v3698 = vsel %vm1527, %v3692, %v3693
        %v3699 = vsel %vm1527, %v3695, %v3692
        %v3700 = vsel %vm1535, %v3699, 0.0
        %v3701 = vsel %vm1536, %v3698, 0.0
        %v3702 = vsel %vm1537, %v3697, 0.0
        %v3703 = vsel %vm1538, %v3696, 0.0
        %v3704 = vrot.slane %v3682, 1
        %v3705 = vrot.slane %v3683, 1
        %v3706 = vrot.slane %v3684, 1
        %v3707 = vrot.slane %v3685, 1
        %v3708 = vsel %vm1547, %v3706, %v3707
        %v3709 = vsel %vm1547, %v3705, %v3706
        %v3710 = vsel %vm1547, %v3704, %v3705
        %v3711 = vsel %vm1547, %v3707, %v3704
        %v3712 = vsel %vm1552, %v3710, 0.0
        %v3713 = vsel %vm1553, %v3709, 0.0
        %v3714 = vsel %vm1554, %v3708, 0.0
        %v3715 = vsel %vm1555, %v3711, 0.0
        %3720 = vrot.lane.b32.xlu0 %v3682, 32
        %v3721 = vpop.permute.xlu0 %3720
        %3722 = vrot.lane.b32.xlu0 %v3683, 32
        %v3723 = vpop.permute.xlu0 %3722
        %3724 = vrot.lane.b32.xlu0 %v3684, 32
        %v3725 = vpop.permute.xlu0 %3724
        %3726 = vrot.lane.b32.xlu0 %v3685, 32
        %v3727 = vpop.permute.xlu0 %3726
        %3736 = vrot.lane.b32.xlu0 %v3712, 64
        %v3737 = vpop.permute.xlu0 %3736
        %3738 = vrot.lane.b32.xlu0 %v3713, 64
        %v3739 = vpop.permute.xlu0 %3738
        %3740 = vrot.lane.b32.xlu0 %v3714, 64
        %v3741 = vpop.permute.xlu0 %3740
        %3742 = vrot.lane.b32.xlu0 %v3715, 64
        %v3743 = vpop.permute.xlu0 %3742
        %v3748 = vsel %vm1597, %v3700, %v3721
        %v3749 = vsel %vm1597, %v3701, %v3723
        %v3750 = vsel %vm1597, %v3702, %v3725
        %v3751 = vsel %vm1597, %v3703, %v3727
        %v3752 = vsel %vm1658, %v3748, %v3737
        %v3753 = vsel %vm1658, %v3749, %v3739
        %v3754 = vsel %vm1658, %v3750, %v3741
        %v3755 = vsel %vm1658, %v3751, %v3743
        %v3756 = vpack.c.bf16 %v3753, %v3752
        %v3757 = vpack.c.bf16 %v3755, %v3754
        %v3758 = vld [vmem:[%s67] sm:$0xf]
        %v3759 = vld [vmem:[%s67 + $0x4] sm:$0xf]
        %v3760 = vld [vmem:[%s67 + $0x8] sm:$0xf]
        %v3761 = vld [vmem:[%s67 + $0xc] sm:$0xf]
        %v3762 = vld [vmem:[%s67 + $0x10] sm:$0xf]
        %v3763 = vld [vmem:[%s67 + $0x14] sm:$0xf]
        %v3764 = vld [vmem:[%s67 + $0x18] sm:$0xf]
        %v3765 = vld [vmem:[%s67 + $0x1c] sm:$0xf]
        %v3766 = vld [vmem:[%s67 + $0x20] sm:$0xf]
        %v3767 = vld [vmem:[%s67 + $0x24] sm:$0xf]
        %v3768 = vld [vmem:[%s67 + $0x28] sm:$0xf]
        %v3769 = vld [vmem:[%s67 + $0x2c] sm:$0xf]
        %v3782 = vunpack.c.l.b16 %v3758
        %v3783 = vunpack.c.l.b16 %v3759
        %v3784 = vunpack.c.l.b16 %v3760
        %v3785 = vunpack.c.l.b16 %v3761
        %v3786 = vunpack.c.l.b16 %v3762
        %v3787 = vunpack.c.l.b16 %v3763
        %v3788 = vunpack.c.l.b16 %v3764
        %v3789 = vunpack.c.l.b16 %v3765
        %v3790 = vunpack.c.l.b16 %v3766
        %v3791 = vunpack.c.l.b16 %v3767
        %v3792 = vunpack.c.l.b16 %v3768
        %v3793 = vunpack.c.l.b16 %v3769
        %v3794 = vpack.c.b16 %v3783, %v3782
        %v3795 = vpack.c.b16 %v3785, %v3784
        %v3796 = vpack.c.b16 %v3787, %v3786
        %v3797 = vpack.c.b16 %v3789, %v3788
        %v3798 = vpack.c.b16 %v3791, %v3790
        %v3799 = vpack.c.b16 %v3793, %v3792
        %vm3806 = vcmask 785408
        %v3808 = vsel %vm3806, %v3756, 0
        %v3811 = vsel %vm3806, %v3757, 0
        %3813 = vmatpush.bf16.msra.mxu0 0
        %3814 = vmatpush.bf16.msra.mxu0 0
        %3815 = vmatpush.bf16.msra.mxu0 %v3799
        %3816 = vmatpush.bf16.msra.mxu0 %v3798
        %3817 = vmatpush.bf16.msra.mxu0 %v3797
        %3818 = vmatpush.bf16.msra.mxu0 %v3796
        %3819 = vmatpush.bf16.msra.mxu0 %v3795
        %3820 = vmatpush.bf16.msra.mxu0 %v3794
        %3821 = vmatmul.bf16.gmra.mxu0 %v3808
        %v3822 = vpop.f32.mrf.mxu0
        %v3823 = vadd.f32 0.0, %v3822
        %v3824 = vpop.f32.mrf.mxu0
        %v3825 = vadd.f32 0.0, %v3824
        %3826 = vmatmul.bf16.gmra.mxu0 %v3811
        %v3827 = vpop.f32.mrf.mxu0
        %v3828 = vadd.f32 0.0, %v3827
        %v3829 = vpop.f32.mrf.mxu0
        %v3830 = vadd.f32 0.0, %v3829
        %3831 = vdwg.mxu0
        %v3838 = vunpack.c.l.b16 %v3686
        %v3839 = vunpack.c.l.b16 %v3687
        %v3840 = vunpack.c.l.b16 %v3688
        %v3841 = vunpack.c.l.b16 %v3689
        %v3842 = vunpack.c.l.b16 %v3690
        %v3843 = vunpack.c.l.b16 %v3691
        %v3844 = vpack.c.b16 %v3839, %v3838
        %v3845 = vpack.c.b16 %v3841, %v3840
        %v3846 = vpack.c.b16 %v3843, %v3842
        %3850 = vmatpush.bf16.msra.mxu0 0
        %3851 = vmatpush.bf16.msra.mxu0 0
        %3852 = vmatpush.bf16.msra.mxu0 0
        %3853 = vmatpush.bf16.msra.mxu0 0
        %3854 = vmatpush.bf16.msra.mxu0 0
        %3855 = vmatpush.bf16.msra.mxu0 %v3846
        %3856 = vmatpush.bf16.msra.mxu0 %v3845
        %3857 = vmatpush.bf16.msra.mxu0 %v3844
        %3858 = vmatmul.bf16.gmra.mxu0 %v1634
        %v3859 = vpop.f32.mrf.mxu0
        %v3860 = vadd.f32 %v3823, %v3859
        %v3861 = vpop.f32.mrf.mxu0
        %v3862 = vadd.f32 %v3825, %v3861
        %3863 = vmatmul.bf16.gmra.mxu0 %v1637
        %v3864 = vpop.f32.mrf.mxu0
        %v3865 = vadd.f32 %v3828, %v3864
        %v3866 = vpop.f32.mrf.mxu0
        %v3867 = vadd.f32 %v3830, %v3866
        %3868 = vdwg.mxu0
        %v3869 = vld [vmem:[#allocation17] sm:$0x1]
        %v3871 = vperm.slane %v3869, 0
        %v3873 = vadd.f32 %v3860, %v3871
        %v3874 = vadd.f32 %v3862, %v3871
        %v3875 = vadd.f32 %v3865, %v3871
        %v3876 = vadd.f32 %v3867, %v3871
        %v3877 = vsel %vm1592, %v3873, 0.0
        %3878 = vadd.xlane.f32.xlu0 %v3877
        %v3879 = vpop.xlane.xlu0 %3878
        %v3880 = vsel %vm1592, %v3874, 0.0
        %3881 = vadd.xlane.f32.xlu0 %v3880
        %v3882 = vpop.xlane.xlu0 %3881
        %v3883 = vsel %vm1592, %v3875, 0.0
        %3884 = vadd.xlane.f32.xlu0 %v3883
        %v3885 = vpop.xlane.xlu0 %3884
        %v3886 = vsel %vm1592, %v3876, 0.0
        %3887 = vadd.xlane.f32.xlu0 %v3886
        %v3888 = vpop.xlane.xlu0 %3887
        %v3889 = vadd.f32 %v3879, %v3882
        %v3890 = vadd.f32 %v3889, %v3885
        %v3891 = vadd.f32 %v3890, %v3888
        %v3892 = vrot.slane %v3891, 4
        %v3893 = vadd.f32 %v3891, %v3892
        %v3894 = vrot.slane %v3893, 2
        %v3895 = vadd.f32 %v3893, %v3894
        %v3896 = vrot.slane %v3895, 1
        %v3897 = vadd.f32 %v3895, %v3896
        %v3898 = vrcp.pop 512.0
        %v3899 = vmul.f32 512.0, %v3898
        %v3900 = vsub.f32 1.0, %v3899
        %v3901 = vmul.f32 %v3898, %v3900
        %v3902 = vadd.f32 %v3898, %v3901
        %vm3903 = vweird.f32 %v3898
        %v3904 = vsel %vm3903, %v3898, %v3902
        %v3905 = vmul.f32 %v3897, %v3904
        %v3906 = vsub.f32 %v3873, %v3905
        %v3907 = vsub.f32 %v3874, %v3905
        %v3908 = vsub.f32 %v3875, %v3905
        %v3909 = vsub.f32 %v3876, %v3905
        %v3910 = vmul.f32 %v3906, %v3906
        %v3911 = vmul.f32 %v3907, %v3907
        %v3912 = vmul.f32 %v3908, %v3908
        %v3913 = vmul.f32 %v3909, %v3909
        %v3914 = vsel %vm1592, %v3910, 0.0
        %3915 = vadd.xlane.f32.xlu0 %v3914
        %v3916 = vpop.xlane.xlu0 %3915
        %v3917 = vsel %vm1592, %v3911, 0.0
        %3918 = vadd.xlane.f32.xlu0 %v3917
        %v3919 = vpop.xlane.xlu0 %3918
        %v3920 = vsel %vm1592, %v3912, 0.0
        %3921 = vadd.xlane.f32.xlu0 %v3920
        %v3922 = vpop.xlane.xlu0 %3921
        %v3923 = vsel %vm1592, %v3913, 0.0
        %3924 = vadd.xlane.f32.xlu0 %v3923
        %v3925 = vpop.xlane.xlu0 %3924
        %v3926 = vadd.f32 %v3916, %v3919
        %v3927 = vadd.f32 %v3926, %v3922
        %v3928 = vadd.f32 %v3927, %v3925
        %v3929 = vrot.slane %v3928, 4
        %v3930 = vadd.f32 %v3928, %v3929
        %v3931 = vrot.slane %v3930, 2
        %v3932 = vadd.f32 %v3930, %v3931
        %v3933 = vrot.slane %v3932, 1
        %v3934 = vadd.f32 %v3932, %v3933
        %v3935 = vmul.f32 %v3934, %v3904
        %v3936 = vadd.f32 %v3935, 1e-05
        %v3937 = vrsqrt.pop %v3936
        %v3938 = vmul.f32 %v3937, %v3936
        %v3939 = vmul.f32 %v3938, %v3937
        %v3940 = vmul.f32 0.5, %v3939
        %v3941 = vsub.f32 1.5, %v3940
        %v3942 = vmul.f32 %v3937, %v3941
        %vm3943 = vweird.f32 %v3936
        %vm3944 = vweird.f32 %v3937
        %vm3945 = vmor %vm3943, %vm3944
        %v3946 = vsel %vm3945, %v3937, %v3942
        %v3947 = vmul.f32 %v3906, %v3946
        %v3948 = vmul.f32 %v3907, %v3946
        %v3949 = vmul.f32 %v3908, %v3946
        %v3950 = vmul.f32 %v3909, %v3946
        %v3951 = vld [vmem:[%s71] sm:$0xff]
        %v3952 = vld [vmem:[%s71 + $0x8] sm:$0xff]
        %v3953 = vld [vmem:[%s71 + $0x10] sm:$0xff]
        %v3954 = vld [vmem:[%s71 + $0x18] sm:$0xff]
        %v3955 = vmul.f32 %v3947, %v3951
        %v3956 = vmul.f32 %v3948, %v3952
        %v3957 = vmul.f32 %v3949, %v3953
        %v3958 = vmul.f32 %v3950, %v3954
        %v3959 = vld [vmem:[%s73] sm:$0xff]
        %v3960 = vld [vmem:[%s73 + $0x8] sm:$0xff]
        %v3961 = vld [vmem:[%s73 + $0x10] sm:$0xff]
        %v3962 = vld [vmem:[%s73 + $0x18] sm:$0xff]
        %v3963 = vadd.f32 %v3955, %v3959
        %v3964 = vadd.f32 %v3956, %v3960
        %v3965 = vadd.f32 %v3957, %v3961
        %v3966 = vadd.f32 %v3958, %v3962
        %vm3967 = vcmp.gt.f32.partialorder %v3963, 0.0
        %vm3968 = vcmp.gt.f32.partialorder %v3964, 0.0
        %vm3969 = vcmp.gt.f32.partialorder %v3965, 0.0
        %vm3970 = vcmp.gt.f32.partialorder %v3966, 0.0
        %v3971 = vmin.f32 %v3963, 0.0
        %v3972 = vmin.f32 %v3964, 0.0
        %v3973 = vmin.f32 %v3965, 0.0
        %v3974 = vmin.f32 %v3966, 0.0
        %v3975 = vmul.f32 %v3971, 1.442695
        %v3976 = vpow.pop %v3975
        %v3977 = vmul.f32 %v3972, 1.442695
        %v3978 = vpow.pop %v3977
        %v3979 = vmul.f32 %v3973, 1.442695
        %v3980 = vpow.pop %v3979
        %v3981 = vmul.f32 %v3974, 1.442695
        %v3982 = vpow.pop %v3981
        %v3983 = vsub.f32 %v3976, 1.0
        %v3984 = vsub.f32 %v3978, 1.0
        %v3985 = vsub.f32 %v3980, 1.0
        %v3986 = vsub.f32 %v3982, 1.0
        %v3987 = vsel %vm3967, %v3963, %v3983
        %v3988 = vsel %vm3968, %v3964, %v3984
        %v3989 = vsel %vm3969, %v3965, %v3985
        %v3990 = vsel %vm3970, %v3966, %v3986
        %3991 = vxpose.xlu0.b32.start [1/16] %v3987, 128
        %3992 = vxpose.xlu0.b32.cont [2/16] %v3988, 128
        %3993 = vxpose.xlu0.b32.cont [3/16] %v3989, 128
        %3994 = vxpose.xlu0.b32.cont [4/16] %v3990, 128
        %3995 = vxpose.xlu0.b32.cont [5/16] 0.0, 128
        %3996 = vxpose.xlu0.b32.cont [6/16] 0.0, 128
        %3997 = vxpose.xlu0.b32.cont [7/16] 0.0, 128
        %3998 = vxpose.xlu0.b32.cont [8/16] 0.0, 128
        %3999 = vxpose.xlu0.b32.cont [9/16] 0.0, 128
        %4000 = vxpose.xlu0.b32.cont [10/16] 0.0, 128
        %4001 = vxpose.xlu0.b32.cont [11/16] 0.0, 128
        %4002 = vxpose.xlu0.b32.cont [12/16] 0.0, 128
        %4003 = vxpose.xlu0.b32.cont [13/16] 0.0, 128
        %4004 = vxpose.xlu0.b32.cont [14/16] 0.0, 128
        %4005 = vxpose.xlu0.b32.cont [15/16] 0.0, 128
        %4006 = vxpose.xlu0.b32.end [16/16] 0.0, 128
        %v4007 = vpop.trf.xlu0
        %v4008 = vpop.trf.xlu0
        %v4009 = vpop.trf.xlu0
        %v4010 = vpop.trf.xlu0
        %v4011 = vpop.trf.xlu0
        %v4012 = vpop.trf.xlu0
        %v4013 = vpop.trf.xlu0
        %v4014 = vpop.trf.xlu0
        %v4015 = vpop.trf.xlu0
        %v4016 = vpop.trf.xlu0
        %v4017 = vpop.trf.xlu0
        %v4018 = vpop.trf.xlu0
        %v4019 = vpop.trf.xlu0
        %v4020 = vpop.trf.xlu0
        %v4021 = vpop.trf.xlu0
        %v4022 = vpop.trf.xlu0
        %4023 = vst.msk [vmem:[%s1480] sm:$0xff] %vm1597, %v4007
        %4024 = vst.msk [vmem:[%s1480 + $0x8] sm:$0xff] %vm1597, %v4008
        %s4025 = sand.u32 %s1024, 1
        %s4026 = scalar_lea.sflag [#allocation4], %s4025
        %s4027 = sand.u32 %s1024, 1
        %s4028 = smul.addr %s4027, 16
        %s4029 = scalar_lea.vmem [#allocation23], %s4028
        // Predicated region
        $region245: #{tpu_custom_call.1} parent=191 // pred_check
          %p4030 = pneg %p1034
        $region246: #{tpu_custom_call.1} parent=191 // pred_check_branch
          %4032 = sbr.rel (%p4030) target = $region248
        $region247: #{tpu_custom_call.1} parent=191 // pred_region
          %4034 = vsyncadd %s4026, 0
          %s4035 = smul.addr %s108, 2
          %s4036 = smul.addr %s4035, 8
          %s4037 = scalar_lea.hbm %s87, %s4036
          %s4038 = sshll.u32 %s4029, 4
          %s4039 = int_to_ptr.vmem [resolvable:$true] %s4038
          %s4040 = sshll.u32 %s4037, 4
          %s4041 = int_to_ptr.hbm [resolvable:$true] %s4040
          %4046 = dma.vmem_to_hbm [thread:$0]  %s4039, 256, %s4041, %s4026, 128, 128, 8
        $region248: #{tpu_custom_call.1} parent=191 // pred_fallthru
          _
      $region192: #{tpu_custom_call.1} parent=5 // pred_fallthru
        _
      %p4047 = scmp.le.s32.totalorder 2, %s103
      // Predicated region
      $region249: #{tpu_custom_call.1} parent=5 // pred_check
        %p4048 = pneg %p4047
      $region250: #{tpu_custom_call.1} parent=5 // pred_check_branch
        %4050 = sbr.rel (%p4048) target = $region252
      $region251: #{tpu_custom_call.1} parent=5 // pred_region
        %s4051 = ssub.s32 %s103, 2
        // Predicated region
        $region253: #{tpu_custom_call.1} parent=251 // pred_check
          %p4052 = pneg %p1040
        $region254: #{tpu_custom_call.1} parent=251 // pred_check_branch
          %4054 = sbr.rel (%p4052) target = $region256
        $region255: #{tpu_custom_call.1} parent=251 // pred_region
          %s4055 = sand.u32 %s1025, 1
          %s4056 = scalar_lea.sflag [#allocation4], %s4055
          %s4057 = sand.u32 %s1025, 1
          %s4058 = smul.addr %s4057, 16
          %s4059 = scalar_lea.vmem [#allocation23], %s4058
          %4061 = dma.done %s4056, 256
        $region256: #{tpu_custom_call.1} parent=251 // pred_fallthru
          _
      $region252: #{tpu_custom_call.1} parent=5 // pred_fallthru
        _
    $region6: #{tpu_custom_call.1} parent=1 // loop_footer
      %s107 = sadd.s32 1, %s103
    $region7: #{tpu_custom_call.1} parent=1 // loop_footer_branch
      %102 = sbr.rel target = $region3
    $region8: #{tpu_custom_call.1} parent=1 // loop_exit
      _
    %4062 = vsyncpa [#allocation3], 1
    %s4063 = scalar_lea.sflag [#allocation3], 1
    %4064 = vsyncpa %s4063, 1
    %4065 = vsyncpa [#allocation6], 1
    %4066 = vsyncpa [#allocation9], 1
    %4067 = vsyncpa [#allocation12], 1
    %4068 = vsyncpa [#allocation15], 1
    %4069 = vsyncpa [#allocation18], 1
    %4070 = vsyncpa [#allocation21], 1
    %4071 = vsyncpa [#allocation4], 1
    %s4072 = scalar_lea.sflag [#allocation4], 1
    %4073 = vsyncpa %s4072, 1

</llo_original>
